<compile_context>
chip_gen: v5e
topology: v5e:2x2
jax: 0.10.0
libtpu: 0.0.40
codegen_flags: <defaults>
</compile_context>

<pallas_src>
import functools

import jax
import jax.numpy as jnp
from jax import lax
from jax.experimental import pallas as pl
from jax.experimental.pallas import tpu as pltpu

NZ = 64      # nz
NGF = 16     # ngf
NC = 1       # nc

BN_EPS = 1e-5
OC4_PAD = 8                      # lane pad for the nc=1 final layer (avoid N=1 GEMM)
KSEL = ((3, 1), (2, 0))          # ConvT kernel tap for (output parity, patch offset d)
VMEM_LIMIT = 32 * 1024 * 1024    # modest; well above the ~4 MiB per-call footprint


# --------------------------- Pallas kernels ---------------------------------

def _bmm_bn_relu_kernel(x_ref, w_ref, g_ref, b_ref, o_ref, *, count):
    """Fused batched GEMM + BatchNorm (batch stats) + ReLU, single invocation.

    x_ref: (P, M, K) bf16 phase patches, w_ref: (P, K, OC) bf16 phase weights,
    g_ref/b_ref: (1, 1, OC) f32 affine params, o_ref: (P, M, OC) bf16.
    BN statistics are reduced over the (P, M) axes = all output pixels and
    batch elements, matching training-mode nn.BatchNorm2d (biased variance).
    """
    y = jnp.einsum('pmk,pko->pmo', x_ref[...], w_ref[...],
                   preferred_element_type=jnp.float32)              # (P, M, OC) f32
    s = jnp.sum(jnp.sum(y, axis=0, keepdims=True), axis=1, keepdims=True)
    ss = jnp.sum(jnp.sum(y * y, axis=0, keepdims=True), axis=1, keepdims=True)
    inv_n = 1.0 / count
    mean = s * inv_n                                                 # (1, 1, OC)
    var = jnp.maximum(ss * inv_n - mean * mean, 0.0)                 # biased variance
    scale = g_ref[...] * lax.rsqrt(var + BN_EPS)
    shift = b_ref[...] - mean * scale
    o_ref[...] = jnp.maximum(y * scale + shift, 0.0).astype(o_ref.dtype)


def _bmm_tanh_kernel(x_ref, w_ref, o_ref):
    """Fused batched GEMM + Tanh (final layer, no BN)."""
    y = jnp.einsum('pmk,pko->pmo', x_ref[...], w_ref[...],
                   preferred_element_type=jnp.float32)
    o_ref[...] = jnp.tanh(y).astype(o_ref.dtype)


# --------------------------- pallas_call wrappers ----------------------------

def _full_spec(shape):
    n = len(shape)
    return pl.BlockSpec(shape, lambda i: (0,) * n)


_COMPILER_PARAMS = pltpu.CompilerParams(
    dimension_semantics=("arbitrary",),
    vmem_limit_bytes=VMEM_LIMIT,
)


def _bmm_bn_relu(x, w, gamma, beta):
    P, M, K = x.shape
    OC = w.shape[-1]
    kernel = functools.partial(_bmm_bn_relu_kernel, count=float(P * M))
    return pl.pallas_call(
        kernel,
        out_shape=jax.ShapeDtypeStruct((P, M, OC), jnp.bfloat16),
        grid=(1,),
        in_specs=[_full_spec((P, M, K)),
                  _full_spec((P, K, OC)),
                  _full_spec((1, 1, OC)),
                  _full_spec((1, 1, OC))],
        out_specs=_full_spec((P, M, OC)),
        compiler_params=_COMPILER_PARAMS,
    )(x, w, gamma, beta)


def _bmm_tanh(x, w):
    P, M, K = x.shape
    OC = w.shape[-1]
    return pl.pallas_call(
        _bmm_tanh_kernel,
        out_shape=jax.ShapeDtypeStruct((P, M, OC), jnp.float32),
        grid=(1,),
        in_specs=[_full_spec((P, M, K)), _full_spec((P, K, OC))],
        out_specs=_full_spec((P, M, OC)),
        compiler_params=_COMPILER_PARAMS,
    )(x, w)


# --------------------------- plain-JAX glue (tiny) ---------------------------

def _phase_patches(x):
    """(B, H, W, IC) NHWC -> (4, B*H*W, 4*IC) bf16 sub-pixel phase patches.

    Phase p = ph*2 + pw produces output pixels (2m+ph, 2n+pw); its patch row
    (b, m, n) holds the 2x2 neighborhood xp[b, m+ph+dh, n+pw+dw, :] of the
    1-padded input, with columns laid out as (dh, dw, ic).
    """
    B, H, W, IC = x.shape
    xp = jnp.pad(x, ((0, 0), (1, 1), (1, 1), (0, 0)))
    phases = []
    for ph in range(2):
        for pw in range(2):
            cols = [xp[:, ph + dh:ph + dh + H, pw + dw:pw + dw + W, :]
                    for dh in range(2) for dw in range(2)]
            p = jnp.concatenate(cols, axis=-1).reshape(B * H * W, 4 * IC)
            phases.append(p)
    return jnp.stack(phases, axis=0)


def _interleave_phases(y, B, H, W, OC):
    """(4, B*H*W, OC) phase outputs -> (B, 2H, 2W, OC) NHWC."""
    y = y.reshape(2, 2, B, H, W, OC)            # (ph, pw, b, m, n, oc)
    y = y.transpose(2, 3, 0, 4, 1, 5)            # (b, m, ph, n, pw, oc)
    return y.reshape(B, 2 * H, 2 * W, OC)


def dense_bn_relu(z, w1p, gamma, beta):
    """Layer 1: ConvTranspose2d(nz, 64, 4, 1, 0) on a 1x1 input == dense matmul."""
    B = z.shape[0]
    C1 = w1p.shape[-1]
    zb = jnp.broadcast_to(z.astype(jnp.bfloat16)[None], (16, B, NZ))
    y = _bmm_bn_relu(zb, w1p, gamma, beta)                   # (16, B, C1) bf16
    return y.transpose(1, 0, 2).reshape(B, 4, 4, C1)         # NHWC


def deconv_s2_bn_relu(x, w_ph, gamma, beta):
    B, H, W, _ = x.shape
    OC = w_ph.shape[-1]
    y = _bmm_bn_relu(_phase_patches(x), w_ph, gamma, beta)   # (4, BHW, OC) bf16
    return _interleave_phases(y, B, H, W, OC)


def deconv_s2_tanh(x, w_ph):
    B, H, W, _ = x.shape
    y = _bmm_tanh(_phase_patches(x), w_ph)                   # (4, BHW, OC4_PAD) f32
    return _interleave_phases(y[:, :, :NC], B, H, W, NC)


# --------------------------- parameters --------------------------------------

def init_params(key):
    """Raw parameters in PyTorch ConvTranspose2d layout (IC, OC, KH, KW)."""
    k1, k2, k3, k4 = jax.random.split(key, 4)
    std = 0.02  # DCGAN-style deterministic synthetic init
    return dict(
        w1=jax.random.normal(k1, (NZ, NGF * 4, 4, 4), jnp.float32) * std,
        g1=jnp.ones((NGF * 4,), jnp.float32), b1=jnp.zeros((NGF * 4,), jnp.float32),
        w2=jax.random.normal(k2, (NGF * 4, NGF * 2, 4, 4), jnp.float32) * std,
        g2=jnp.ones((NGF * 2,), jnp.float32), b2=jnp.zeros((NGF * 2,), jnp.float32),
        w3=jax.random.normal(k3, (NGF * 2, NGF * 1, 4, 4), jnp.float32) * std,
        g3=jnp.ones((NGF * 1,), jnp.float32), b3=jnp.zeros((NGF * 1,), jnp.float32),
        w4=jax.random.normal(k4, (NGF * 1, NC, 4, 4), jnp.float32) * std,
    )


def _phase_weights(w_ct):
    """(IC, OC, 4, 4) ConvTranspose2d weight -> (4, 4*IC, OC) per-phase GEMM weights."""
    mats = []
    for ph in range(2):
        for pw in range(2):
            taps = [w_ct[:, :, KSEL[ph][dh], KSEL[pw][dw]]
                    for dh in range(2) for dw in range(2)]        # each (IC, OC)
            mats.append(jnp.concatenate(taps, axis=0))            # rows = (dh, dw, ic)
    return jnp.stack(mats, axis=0).astype(jnp.bfloat16)


def preprocess_params(p):
    """One-time weight re-layout / cast, hoisted out of the forward pass."""
    w4 = _phase_weights(p["w4"])                                   # (4, 4*NGF, NC)
    w4 = jnp.pad(w4, ((0, 0), (0, 0), (0, OC4_PAD - NC)))          # lane-pad nc=1 -> 8
    return dict(
        w1=p["w1"].transpose(2, 3, 0, 1).reshape(16, NZ, NGF * 4).astype(jnp.bfloat16),
        g1=p["g1"].reshape(1, 1, -1), b1=p["b1"].reshape(1, 1, -1),
        w2=_phase_weights(p["w2"]),
        g2=p["g2"].reshape(1, 1, -1), b2=p["b2"].reshape(1, 1, -1),
        w3=_phase_weights(p["w3"]),
        g3=p["g3"].reshape(1, 1, -1), b3=p["b3"].reshape(1, 1, -1),
        w4=w4,
    )


# --------------------------- model --------------------------------------------

def generator_forward(z_nchw, pp):
    # z: (B, nz, 1, 1) NCHW -> NHWC internally, NCHW only at the boundaries.
    B = z_nchw.shape[0]
    z = z_nchw.reshape(B, NZ)
    x = dense_bn_relu(z, pp["w1"], pp["g1"], pp["b1"])             # (B, 4, 4, 64)
    x = deconv_s2_bn_relu(x, pp["w2"], pp["g2"], pp["b2"])         # (B, 8, 8, 32)
    x = deconv_s2_bn_relu(x, pp["w3"], pp["g3"], pp["b3"])         # (B, 16, 16, 16)
    x = deconv_s2_tanh(x, pp["w4"])                                # (B, 32, 32, 1) f32
    return x.transpose(0, 3, 1, 2)                                 # (B, 1, 32, 32)


if __name__ == "__main__":
    key = jax.random.PRNGKey(0)
    kz, kp = jax.random.split(key)
    B = 2
    z = jax.random.normal(kz, (B, NZ, 1, 1), jnp.float32)
    params = init_params(kp)
    prepped = preprocess_params(params)        # one-time weight prep (outside jit)

    fwd = jax.jit(generator_forward)
    out = jax.block_until_ready(fwd(z, prepped))

    assert out.shape == (B, NC, 32, 32), out.shape
    assert out.dtype == jnp.float32
    assert bool(jnp.all(jnp.isfinite(out)))
    assert bool(jnp.all((out >= -1.0) & (out <= 1.0)))
    assert float(jnp.std(out)) > 1e-3
    print("KERNEL_OK")
</pallas_src>

<mosaic_0001>
module attributes {stable_mosaic.version = 11 : i64} {
  func.func @_bmm_bn_relu_kernel(%arg0: i32, %arg1: memref<16x2x64xbf16, #tpu.memory_space<vmem>>, %arg2: memref<16x64x64xbf16, #tpu.memory_space<vmem>>, %arg3: memref<1x1x64xf32, #tpu.memory_space<vmem>>, %arg4: memref<1x1x64xf32, #tpu.memory_space<vmem>>, %arg5: memref<16x2x64xbf16, #tpu.memory_space<vmem>>) attributes {dimension_semantics = [#tpu.dimension_semantics<arbitrary>], iteration_bounds = array<i64: 1>, scalar_prefetch = 0 : i64, scratch_operands = 0 : i64, tpu.core_type = #tpu.core_type<tc>, window_params = [{pipeline_mode = #tpu.pipeline_mode<synchronous>, transform_indices = @transform_0, window_bounds = array<i64: 16, 2, 64>}, {pipeline_mode = #tpu.pipeline_mode<synchronous>, transform_indices = @transform_1, window_bounds = array<i64: 16, 64, 64>}, {pipeline_mode = #tpu.pipeline_mode<synchronous>, transform_indices = @transform_2, window_bounds = array<i64: 1, 1, 64>}, {pipeline_mode = #tpu.pipeline_mode<synchronous>, transform_indices = @transform_3, window_bounds = array<i64: 1, 1, 64>}, {pipeline_mode = #tpu.pipeline_mode<synchronous>, transform_indices = @transform_4, window_bounds = array<i64: 16, 2, 64>}]} {
    %c0 = arith.constant 0 : index
    %c0_0 = arith.constant 0 : index
    %c0_1 = arith.constant 0 : index
    %0 = vector.load %arg1[%c0, %c0_0, %c0_1] : memref<16x2x64xbf16, #tpu.memory_space<vmem>>, vector<16x2x64xbf16>
    %c0_2 = arith.constant 0 : index
    %c0_3 = arith.constant 0 : index
    %c0_4 = arith.constant 0 : index
    %1 = vector.load %arg2[%c0_2, %c0_3, %c0_4] : memref<16x64x64xbf16, #tpu.memory_space<vmem>>, vector<16x64x64xbf16>
    "tpu.trace_start"() <{level = 10 : i32, message = "pmk,pko->pmo"}> : () -> ()
    %cst = arith.constant dense<0.000000e+00> : vector<16x2x64xf32>
    %2 = tpu.matmul %0, %1, %cst {dimension_numbers = #tpu.dot_dimension_numbers<[2], [1], [1], [2], [0, 0, 0, 1, 1, 2], [0], [0]>} : vector<16x2x64xbf16>, vector<16x64x64xbf16>, vector<16x2x64xf32> -> vector<16x2x64xf32>
    "tpu.trace_stop"() : () -> ()
    %cst_5 = arith.constant dense<0.000000e+00> : vector<2x64xf32>
    %3 = vector.multi_reduction <add>, %2, %cst_5 [0] : vector<16x2x64xf32> to vector<2x64xf32>
    %4 = vector.shape_cast %3 : vector<2x64xf32> to vector<1x2x64xf32>
    %cst_6 = arith.constant dense<0.000000e+00> : vector<1x64xf32>
    %5 = vector.multi_reduction <add>, %4, %cst_6 [1] : vector<1x2x64xf32> to vector<1x64xf32>
    %6 = vector.shape_cast %5 : vector<1x64xf32> to vector<1x1x64xf32>
    %7 = arith.mulf %2, %2 : vector<16x2x64xf32>
    %cst_7 = arith.constant dense<0.000000e+00> : vector<2x64xf32>
    %8 = vector.multi_reduction <add>, %7, %cst_7 [0] : vector<16x2x64xf32> to vector<2x64xf32>
    %9 = vector.shape_cast %8 : vector<2x64xf32> to vector<1x2x64xf32>
    %cst_8 = arith.constant dense<0.000000e+00> : vector<1x64xf32>
    %10 = vector.multi_reduction <add>, %9, %cst_8 [1] : vector<1x2x64xf32> to vector<1x64xf32>
    %11 = vector.shape_cast %10 : vector<1x64xf32> to vector<1x1x64xf32>
    %cst_9 = arith.constant 3.125000e-02 : f32
    %12 = vector.broadcast %cst_9 : f32 to vector<1x1x64xf32>
    %13 = arith.mulf %6, %12 : vector<1x1x64xf32>
    %cst_10 = arith.constant 3.125000e-02 : f32
    %14 = vector.broadcast %cst_10 : f32 to vector<1x1x64xf32>
    %15 = arith.mulf %11, %14 : vector<1x1x64xf32>
    %16 = arith.mulf %13, %13 : vector<1x1x64xf32>
    %17 = arith.subf %15, %16 : vector<1x1x64xf32>
    %cst_11 = arith.constant 0.000000e+00 : f32
    %18 = vector.broadcast %cst_11 : f32 to vector<1x1x64xf32>
    %19 = arith.maximumf %17, %18 : vector<1x1x64xf32>
    %c0_12 = arith.constant 0 : index
    %c0_13 = arith.constant 0 : index
    %c0_14 = arith.constant 0 : index
    %20 = vector.load %arg3[%c0_12, %c0_13, %c0_14] : memref<1x1x64xf32, #tpu.memory_space<vmem>>, vector<1x1x64xf32>
    %cst_15 = arith.constant 9.99999974E-6 : f32
    %21 = vector.broadcast %cst_15 : f32 to vector<1x1x64xf32>
    %22 = arith.addf %19, %21 : vector<1x1x64xf32>
    %23 = math.rsqrt %22 : vector<1x1x64xf32>
    %24 = arith.mulf %20, %23 : vector<1x1x64xf32>
    %c0_16 = arith.constant 0 : index
    %c0_17 = arith.constant 0 : index
    %c0_18 = arith.constant 0 : index
    %25 = vector.load %arg4[%c0_16, %c0_17, %c0_18] : memref<1x1x64xf32, #tpu.memory_space<vmem>>, vector<1x1x64xf32>
    %26 = arith.mulf %13, %24 : vector<1x1x64xf32>
    %27 = arith.subf %25, %26 : vector<1x1x64xf32>
    %28 = vector.broadcast %24 : vector<1x1x64xf32> to vector<16x2x64xf32>
    %29 = arith.mulf %2, %28 : vector<16x2x64xf32>
    %30 = vector.broadcast %27 : vector<1x1x64xf32> to vector<16x2x64xf32>
    %31 = arith.addf %29, %30 : vector<16x2x64xf32>
    %cst_19 = arith.constant 0.000000e+00 : f32
    %32 = vector.broadcast %cst_19 : f32 to vector<16x2x64xf32>
    %33 = arith.maximumf %31, %32 : vector<16x2x64xf32>
    %34 = arith.truncf %33 : vector<16x2x64xf32> to vector<16x2x64xbf16>
    %c0_20 = arith.constant 0 : index
    %c0_21 = arith.constant 0 : index
    %c0_22 = arith.constant 0 : index
    %35 = vector.load %arg5[%c0_20, %c0_21, %c0_22] : memref<16x2x64xbf16, #tpu.memory_space<vmem>>, vector<16x2x64xbf16>
    tpu.vector_store %arg5[%c0_20, %c0_21, %c0_22], %34 {strides = array<i32>} : memref<16x2x64xbf16, #tpu.memory_space<vmem>>, vector<16x2x64xbf16>,
    return
  }
  func.func @transform_0(%arg0: i32) -> (i32, i32, i32) {
    %c0_i32 = arith.constant 0 : i32
    %c0_i32_0 = arith.constant 0 : i32
    %c0_i32_1 = arith.constant 0 : i32
    %c0_i32_2 = arith.constant 0 : i32
    return %c0_i32, %c0_i32_0, %c0_i32_1 : i32, i32, i32
  }
  func.func @transform_1(%arg0: i32) -> (i32, i32, i32) {
    %c0_i32 = arith.constant 0 : i32
    %c0_i32_0 = arith.constant 0 : i32
    %c0_i32_1 = arith.constant 0 : i32
    %c0_i32_2 = arith.constant 0 : i32
    return %c0_i32, %c0_i32_0, %c0_i32_1 : i32, i32, i32
  }
  func.func @transform_2(%arg0: i32) -> (i32, i32, i32) {
    %c0_i32 = arith.constant 0 : i32
    %c0_i32_0 = arith.constant 0 : i32
    %c0_i32_1 = arith.constant 0 : i32
    %c0_i32_2 = arith.constant 0 : i32
    return %c0_i32, %c0_i32_0, %c0_i32_1 : i32, i32, i32
  }
  func.func @transform_3(%arg0: i32) -> (i32, i32, i32) {
    %c0_i32 = arith.constant 0 : i32
    %c0_i32_0 = arith.constant 0 : i32
    %c0_i32_1 = arith.constant 0 : i32
    %c0_i32_2 = arith.constant 0 : i32
    return %c0_i32, %c0_i32_0, %c0_i32_1 : i32, i32, i32
  }
  func.func @transform_4(%arg0: i32) -> (i32, i32, i32) {
    %c0_i32 = arith.constant 0 : i32
    %c0_i32_0 = arith.constant 0 : i32
    %c0_i32_1 = arith.constant 0 : i32
    %c0_i32_2 = arith.constant 0 : i32
    return %c0_i32, %c0_i32_0, %c0_i32_1 : i32, i32, i32
  }
}

module attributes {stable_mosaic.version = 11 : i64} {
  func.func @_bmm_bn_relu_kernel(%arg0: i32, %arg1: memref<4x32x256xbf16, #tpu.memory_space<vmem>>, %arg2: memref<4x256x32xbf16, #tpu.memory_space<vmem>>, %arg3: memref<1x1x32xf32, #tpu.memory_space<vmem>>, %arg4: memref<1x1x32xf32, #tpu.memory_space<vmem>>, %arg5: memref<4x32x32xbf16, #tpu.memory_space<vmem>>) attributes {dimension_semantics = [#tpu.dimension_semantics<arbitrary>], iteration_bounds = array<i64: 1>, scalar_prefetch = 0 : i64, scratch_operands = 0 : i64, tpu.core_type = #tpu.core_type<tc>, window_params = [{pipeline_mode = #tpu.pipeline_mode<synchronous>, transform_indices = @transform_0, window_bounds = array<i64: 4, 32, 256>}, {pipeline_mode = #tpu.pipeline_mode<synchronous>, transform_indices = @transform_1, window_bounds = array<i64: 4, 256, 32>}, {pipeline_mode = #tpu.pipeline_mode<synchronous>, transform_indices = @transform_2, window_bounds = array<i64: 1, 1, 32>}, {pipeline_mode = #tpu.pipeline_mode<synchronous>, transform_indices = @transform_3, window_bounds = array<i64: 1, 1, 32>}, {pipeline_mode = #tpu.pipeline_mode<synchronous>, transform_indices = @transform_4, window_bounds = array<i64: 4, 32, 32>}]} {
    %c0 = arith.constant 0 : index
    %c0_0 = arith.constant 0 : index
    %c0_1 = arith.constant 0 : index
    %0 = vector.load %arg1[%c0, %c0_0, %c0_1] : memref<4x32x256xbf16, #tpu.memory_space<vmem>>, vector<4x32x256xbf16>
    %c0_2 = arith.constant 0 : index
    %c0_3 = arith.constant 0 : index
    %c0_4 = arith.constant 0 : index
    %1 = vector.load %arg2[%c0_2, %c0_3, %c0_4] : memref<4x256x32xbf16, #tpu.memory_space<vmem>>, vector<4x256x32xbf16>
    "tpu.trace_start"() <{level = 10 : i32, message = "pmk,pko->pmo"}> : () -> ()
    %cst = arith.constant dense<0.000000e+00> : vector<4x32x32xf32>
    %2 = tpu.matmul %0, %1, %cst {dimension_numbers = #tpu.dot_dimension_numbers<[2], [1], [1], [2], [0, 0, 0, 1, 1, 2], [0], [0]>} : vector<4x32x256xbf16>, vector<4x256x32xbf16>, vector<4x32x32xf32> -> vector<4x32x32xf32>
    "tpu.trace_stop"() : () -> ()
    %cst_5 = arith.constant dense<0.000000e+00> : vector<32x32xf32>
    %3 = vector.multi_reduction <add>, %2, %cst_5 [0] : vector<4x32x32xf32> to vector<32x32xf32>
    %4 = vector.shape_cast %3 : vector<32x32xf32> to vector<1x32x32xf32>
    %cst_6 = arith.constant dense<0.000000e+00> : vector<1x32xf32>
    %5 = vector.multi_reduction <add>, %4, %cst_6 [1] : vector<1x32x32xf32> to vector<1x32xf32>
    %6 = vector.shape_cast %5 : vector<1x32xf32> to vector<1x1x32xf32>
    %7 = arith.mulf %2, %2 : vector<4x32x32xf32>
    %cst_7 = arith.constant dense<0.000000e+00> : vector<32x32xf32>
    %8 = vector.multi_reduction <add>, %7, %cst_7 [0] : vector<4x32x32xf32> to vector<32x32xf32>
    %9 = vector.shape_cast %8 : vector<32x32xf32> to vector<1x32x32xf32>
    %cst_8 = arith.constant dense<0.000000e+00> : vector<1x32xf32>
    %10 = vector.multi_reduction <add>, %9, %cst_8 [1] : vector<1x32x32xf32> to vector<1x32xf32>
    %11 = vector.shape_cast %10 : vector<1x32xf32> to vector<1x1x32xf32>
    %cst_9 = arith.constant 7.812500e-03 : f32
    %12 = vector.broadcast %cst_9 : f32 to vector<1x1x32xf32>
    %13 = arith.mulf %6, %12 : vector<1x1x32xf32>
    %cst_10 = arith.constant 7.812500e-03 : f32
    %14 = vector.broadcast %cst_10 : f32 to vector<1x1x32xf32>
    %15 = arith.mulf %11, %14 : vector<1x1x32xf32>
    %16 = arith.mulf %13, %13 : vector<1x1x32xf32>
    %17 = arith.subf %15, %16 : vector<1x1x32xf32>
    %cst_11 = arith.constant 0.000000e+00 : f32
    %18 = vector.broadcast %cst_11 : f32 to vector<1x1x32xf32>
    %19 = arith.maximumf %17, %18 : vector<1x1x32xf32>
    %c0_12 = arith.constant 0 : index
    %c0_13 = arith.constant 0 : index
    %c0_14 = arith.constant 0 : index
    %20 = vector.load %arg3[%c0_12, %c0_13, %c0_14] : memref<1x1x32xf32, #tpu.memory_space<vmem>>, vector<1x1x32xf32>
    %cst_15 = arith.constant 9.99999974E-6 : f32
    %21 = vector.broadcast %cst_15 : f32 to vector<1x1x32xf32>
    %22 = arith.addf %19, %21 : vector<1x1x32xf32>
    %23 = math.rsqrt %22 : vector<1x1x32xf32>
    %24 = arith.mulf %20, %23 : vector<1x1x32xf32>
    %c0_16 = arith.constant 0 : index
    %c0_17 = arith.constant 0 : index
    %c0_18 = arith.constant 0 : index
    %25 = vector.load %arg4[%c0_16, %c0_17, %c0_18] : memref<1x1x32xf32, #tpu.memory_space<vmem>>, vector<1x1x32xf32>
    %26 = arith.mulf %13, %24 : vector<1x1x32xf32>
    %27 = arith.subf %25, %26 : vector<1x1x32xf32>
    %28 = vector.broadcast %24 : vector<1x1x32xf32> to vector<4x32x32xf32>
    %29 = arith.mulf %2, %28 : vector<4x32x32xf32>
    %30 = vector.broadcast %27 : vector<1x1x32xf32> to vector<4x32x32xf32>
    %31 = arith.addf %29, %30 : vector<4x32x32xf32>
    %cst_19 = arith.constant 0.000000e+00 : f32
    %32 = vector.broadcast %cst_19 : f32 to vector<4x32x32xf32>
    %33 = arith.maximumf %31, %32 : vector<4x32x32xf32>
    %34 = arith.truncf %33 : vector<4x32x32xf32> to vector<4x32x32xbf16>
    %c0_20 = arith.constant 0 : index
    %c0_21 = arith.constant 0 : index
    %c0_22 = arith.constant 0 : index
    %35 = vector.load %arg5[%c0_20, %c0_21, %c0_22] : memref<4x32x32xbf16, #tpu.memory_space<vmem>>, vector<4x32x32xbf16>
    tpu.vector_store %arg5[%c0_20, %c0_21, %c0_22], %34 {strides = array<i32>} : memref<4x32x32xbf16, #tpu.memory_space<vmem>>, vector<4x32x32xbf16>,
    return
  }
  func.func @transform_0(%arg0: i32) -> (i32, i32, i32) {
    %c0_i32 = arith.constant 0 : i32
    %c0_i32_0 = arith.constant 0 : i32
    %c0_i32_1 = arith.constant 0 : i32
    %c0_i32_2 = arith.constant 0 : i32
    return %c0_i32, %c0_i32_0, %c0_i32_1 : i32, i32, i32
  }
  func.func @transform_1(%arg0: i32) -> (i32, i32, i32) {
    %c0_i32 = arith.constant 0 : i32
    %c0_i32_0 = arith.constant 0 : i32
    %c0_i32_1 = arith.constant 0 : i32
    %c0_i32_2 = arith.constant 0 : i32
    return %c0_i32, %c0_i32_0, %c0_i32_1 : i32, i32, i32
  }
  func.func @transform_2(%arg0: i32) -> (i32, i32, i32) {
    %c0_i32 = arith.constant 0 : i32
    %c0_i32_0 = arith.constant 0 : i32
    %c0_i32_1 = arith.constant 0 : i32
    %c0_i32_2 = arith.constant 0 : i32
    return %c0_i32, %c0_i32_0, %c0_i32_1 : i32, i32, i32
  }
  func.func @transform_3(%arg0: i32) -> (i32, i32, i32) {
    %c0_i32 = arith.constant 0 : i32
    %c0_i32_0 = arith.constant 0 : i32
    %c0_i32_1 = arith.constant 0 : i32
    %c0_i32_2 = arith.constant 0 : i32
    return %c0_i32, %c0_i32_0, %c0_i32_1 : i32, i32, i32
  }
  func.func @transform_4(%arg0: i32) -> (i32, i32, i32) {
    %c0_i32 = arith.constant 0 : i32
    %c0_i32_0 = arith.constant 0 : i32
    %c0_i32_1 = arith.constant 0 : i32
    %c0_i32_2 = arith.constant 0 : i32
    return %c0_i32, %c0_i32_0, %c0_i32_1 : i32, i32, i32
  }
}

module attributes {stable_mosaic.version = 11 : i64} {
  func.func @_bmm_bn_relu_kernel(%arg0: i32, %arg1: memref<4x128x128xbf16, #tpu.memory_space<vmem>>, %arg2: memref<4x128x16xbf16, #tpu.memory_space<vmem>>, %arg3: memref<1x1x16xf32, #tpu.memory_space<vmem>>, %arg4: memref<1x1x16xf32, #tpu.memory_space<vmem>>, %arg5: memref<4x128x16xbf16, #tpu.memory_space<vmem>>) attributes {dimension_semantics = [#tpu.dimension_semantics<arbitrary>], iteration_bounds = array<i64: 1>, scalar_prefetch = 0 : i64, scratch_operands = 0 : i64, tpu.core_type = #tpu.core_type<tc>, window_params = [{pipeline_mode = #tpu.pipeline_mode<synchronous>, transform_indices = @transform_0, window_bounds = array<i64: 4, 128, 128>}, {pipeline_mode = #tpu.pipeline_mode<synchronous>, transform_indices = @transform_1, window_bounds = array<i64: 4, 128, 16>}, {pipeline_mode = #tpu.pipeline_mode<synchronous>, transform_indices = @transform_2, window_bounds = array<i64: 1, 1, 16>}, {pipeline_mode = #tpu.pipeline_mode<synchronous>, transform_indices = @transform_3, window_bounds = array<i64: 1, 1, 16>}, {pipeline_mode = #tpu.pipeline_mode<synchronous>, transform_indices = @transform_4, window_bounds = array<i64: 4, 128, 16>}]} {
    %c0 = arith.constant 0 : index
    %c0_0 = arith.constant 0 : index
    %c0_1 = arith.constant 0 : index
    %0 = vector.load %arg1[%c0, %c0_0, %c0_1] : memref<4x128x128xbf16, #tpu.memory_space<vmem>>, vector<4x128x128xbf16>
    %c0_2 = arith.constant 0 : index
    %c0_3 = arith.constant 0 : index
    %c0_4 = arith.constant 0 : index
    %1 = vector.load %arg2[%c0_2, %c0_3, %c0_4] : memref<4x128x16xbf16, #tpu.memory_space<vmem>>, vector<4x128x16xbf16>
    "tpu.trace_start"() <{level = 10 : i32, message = "pmk,pko->pmo"}> : () -> ()
    %cst = arith.constant dense<0.000000e+00> : vector<4x128x16xf32>
    %2 = tpu.matmul %0, %1, %cst {dimension_numbers = #tpu.dot_dimension_numbers<[2], [1], [1], [2], [0, 0, 0, 1, 1, 2], [0], [0]>} : vector<4x128x128xbf16>, vector<4x128x16xbf16>, vector<4x128x16xf32> -> vector<4x128x16xf32>
    "tpu.trace_stop"() : () -> ()
    %cst_5 = arith.constant dense<0.000000e+00> : vector<128x16xf32>
    %3 = vector.multi_reduction <add>, %2, %cst_5 [0] : vector<4x128x16xf32> to vector<128x16xf32>
    %4 = vector.shape_cast %3 : vector<128x16xf32> to vector<1x128x16xf32>
    %cst_6 = arith.constant dense<0.000000e+00> : vector<1x16xf32>
    %5 = vector.multi_reduction <add>, %4, %cst_6 [1] : vector<1x128x16xf32> to vector<1x16xf32>
    %6 = vector.shape_cast %5 : vector<1x16xf32> to vector<1x1x16xf32>
    %7 = arith.mulf %2, %2 : vector<4x128x16xf32>
    %cst_7 = arith.constant dense<0.000000e+00> : vector<128x16xf32>
    %8 = vector.multi_reduction <add>, %7, %cst_7 [0] : vector<4x128x16xf32> to vector<128x16xf32>
    %9 = vector.shape_cast %8 : vector<128x16xf32> to vector<1x128x16xf32>
    %cst_8 = arith.constant dense<0.000000e+00> : vector<1x16xf32>
    %10 = vector.multi_reduction <add>, %9, %cst_8 [1] : vector<1x128x16xf32> to vector<1x16xf32>
    %11 = vector.shape_cast %10 : vector<1x16xf32> to vector<1x1x16xf32>
    %cst_9 = arith.constant 0.001953125 : f32
    %12 = vector.broadcast %cst_9 : f32 to vector<1x1x16xf32>
    %13 = arith.mulf %6, %12 : vector<1x1x16xf32>
    %cst_10 = arith.constant 0.001953125 : f32
    %14 = vector.broadcast %cst_10 : f32 to vector<1x1x16xf32>
    %15 = arith.mulf %11, %14 : vector<1x1x16xf32>
    %16 = arith.mulf %13, %13 : vector<1x1x16xf32>
    %17 = arith.subf %15, %16 : vector<1x1x16xf32>
    %cst_11 = arith.constant 0.000000e+00 : f32
    %18 = vector.broadcast %cst_11 : f32 to vector<1x1x16xf32>
    %19 = arith.maximumf %17, %18 : vector<1x1x16xf32>
    %c0_12 = arith.constant 0 : index
    %c0_13 = arith.constant 0 : index
    %c0_14 = arith.constant 0 : index
    %20 = vector.load %arg3[%c0_12, %c0_13, %c0_14] : memref<1x1x16xf32, #tpu.memory_space<vmem>>, vector<1x1x16xf32>
    %cst_15 = arith.constant 9.99999974E-6 : f32
    %21 = vector.broadcast %cst_15 : f32 to vector<1x1x16xf32>
    %22 = arith.addf %19, %21 : vector<1x1x16xf32>
    %23 = math.rsqrt %22 : vector<1x1x16xf32>
    %24 = arith.mulf %20, %23 : vector<1x1x16xf32>
    %c0_16 = arith.constant 0 : index
    %c0_17 = arith.constant 0 : index
    %c0_18 = arith.constant 0 : index
    %25 = vector.load %arg4[%c0_16, %c0_17, %c0_18] : memref<1x1x16xf32, #tpu.memory_space<vmem>>, vector<1x1x16xf32>
    %26 = arith.mulf %13, %24 : vector<1x1x16xf32>
    %27 = arith.subf %25, %26 : vector<1x1x16xf32>
    %28 = vector.broadcast %24 : vector<1x1x16xf32> to vector<4x128x16xf32>
    %29 = arith.mulf %2, %28 : vector<4x128x16xf32>
    %30 = vector.broadcast %27 : vector<1x1x16xf32> to vector<4x128x16xf32>
    %31 = arith.addf %29, %30 : vector<4x128x16xf32>
    %cst_19 = arith.constant 0.000000e+00 : f32
    %32 = vector.broadcast %cst_19 : f32 to vector<4x128x16xf32>
    %33 = arith.maximumf %31, %32 : vector<4x128x16xf32>
    %34 = arith.truncf %33 : vector<4x128x16xf32> to vector<4x128x16xbf16>
    %c0_20 = arith.constant 0 : index
    %c0_21 = arith.constant 0 : index
    %c0_22 = arith.constant 0 : index
    %35 = vector.load %arg5[%c0_20, %c0_21, %c0_22] : memref<4x128x16xbf16, #tpu.memory_space<vmem>>, vector<4x128x16xbf16>
    tpu.vector_store %arg5[%c0_20, %c0_21, %c0_22], %34 {strides = array<i32>} : memref<4x128x16xbf16, #tpu.memory_space<vmem>>, vector<4x128x16xbf16>,
    return
  }
  func.func @transform_0(%arg0: i32) -> (i32, i32, i32) {
    %c0_i32 = arith.constant 0 : i32
    %c0_i32_0 = arith.constant 0 : i32
    %c0_i32_1 = arith.constant 0 : i32
    %c0_i32_2 = arith.constant 0 : i32
    return %c0_i32, %c0_i32_0, %c0_i32_1 : i32, i32, i32
  }
  func.func @transform_1(%arg0: i32) -> (i32, i32, i32) {
    %c0_i32 = arith.constant 0 : i32
    %c0_i32_0 = arith.constant 0 : i32
    %c0_i32_1 = arith.constant 0 : i32
    %c0_i32_2 = arith.constant 0 : i32
    return %c0_i32, %c0_i32_0, %c0_i32_1 : i32, i32, i32
  }
  func.func @transform_2(%arg0: i32) -> (i32, i32, i32) {
    %c0_i32 = arith.constant 0 : i32
    %c0_i32_0 = arith.constant 0 : i32
    %c0_i32_1 = arith.constant 0 : i32
    %c0_i32_2 = arith.constant 0 : i32
    return %c0_i32, %c0_i32_0, %c0_i32_1 : i32, i32, i32
  }
  func.func @transform_3(%arg0: i32) -> (i32, i32, i32) {
    %c0_i32 = arith.constant 0 : i32
    %c0_i32_0 = arith.constant 0 : i32
    %c0_i32_1 = arith.constant 0 : i32
    %c0_i32_2 = arith.constant 0 : i32
    return %c0_i32, %c0_i32_0, %c0_i32_1 : i32, i32, i32
  }
  func.func @transform_4(%arg0: i32) -> (i32, i32, i32) {
    %c0_i32 = arith.constant 0 : i32
    %c0_i32_0 = arith.constant 0 : i32
    %c0_i32_1 = arith.constant 0 : i32
    %c0_i32_2 = arith.constant 0 : i32
    return %c0_i32, %c0_i32_0, %c0_i32_1 : i32, i32, i32
  }
}

module attributes {stable_mosaic.version = 11 : i64} {
  func.func @_bmm_tanh_kernel(%arg0: i32, %arg1: memref<4x512x64xbf16, #tpu.memory_space<vmem>>, %arg2: memref<4x64x8xbf16, #tpu.memory_space<vmem>>, %arg3: memref<4x512x8xf32, #tpu.memory_space<vmem>>) attributes {dimension_semantics = [#tpu.dimension_semantics<arbitrary>], iteration_bounds = array<i64: 1>, scalar_prefetch = 0 : i64, scratch_operands = 0 : i64, tpu.core_type = #tpu.core_type<tc>, window_params = [{pipeline_mode = #tpu.pipeline_mode<synchronous>, transform_indices = @transform_0, window_bounds = array<i64: 4, 512, 64>}, {pipeline_mode = #tpu.pipeline_mode<synchronous>, transform_indices = @transform_1, window_bounds = array<i64: 4, 64, 8>}, {pipeline_mode = #tpu.pipeline_mode<synchronous>, transform_indices = @transform_2, window_bounds = array<i64: 4, 512, 8>}]} {
    %c0 = arith.constant 0 : index
    %c0_0 = arith.constant 0 : index
    %c0_1 = arith.constant 0 : index
    %0 = vector.load %arg1[%c0, %c0_0, %c0_1] : memref<4x512x64xbf16, #tpu.memory_space<vmem>>, vector<4x512x64xbf16>
    %c0_2 = arith.constant 0 : index
    %c0_3 = arith.constant 0 : index
    %c0_4 = arith.constant 0 : index
    %1 = vector.load %arg2[%c0_2, %c0_3, %c0_4] : memref<4x64x8xbf16, #tpu.memory_space<vmem>>, vector<4x64x8xbf16>
    "tpu.trace_start"() <{level = 10 : i32, message = "pmk,pko->pmo"}> : () -> ()
    %cst = arith.constant dense<0.000000e+00> : vector<4x512x8xf32>
    %2 = tpu.matmul %0, %1, %cst {dimension_numbers = #tpu.dot_dimension_numbers<[2], [1], [1], [2], [0, 0, 0, 1, 1, 2], [0], [0]>} : vector<4x512x64xbf16>, vector<4x64x8xbf16>, vector<4x512x8xf32> -> vector<4x512x8xf32>
    "tpu.trace_stop"() : () -> ()
    %3 = math.tanh %2 : vector<4x512x8xf32>
    %c0_5 = arith.constant 0 : index
    %c0_6 = arith.constant 0 : index
    %c0_7 = arith.constant 0 : index
    %4 = vector.load %arg3[%c0_5, %c0_6, %c0_7] : memref<4x512x8xf32, #tpu.memory_space<vmem>>, vector<4x512x8xf32>
    tpu.vector_store %arg3[%c0_5, %c0_6, %c0_7], %3 {strides = array<i32>} : memref<4x512x8xf32, #tpu.memory_space<vmem>>, vector<4x512x8xf32>,
    return
  }
  func.func @transform_0(%arg0: i32) -> (i32, i32, i32) {
    %c0_i32 = arith.constant 0 : i32
    %c0_i32_0 = arith.constant 0 : i32
    %c0_i32_1 = arith.constant 0 : i32
    %c0_i32_2 = arith.constant 0 : i32
    return %c0_i32, %c0_i32_0, %c0_i32_1 : i32, i32, i32
  }
  func.func @transform_1(%arg0: i32) -> (i32, i32, i32) {
    %c0_i32 = arith.constant 0 : i32
    %c0_i32_0 = arith.constant 0 : i32
    %c0_i32_1 = arith.constant 0 : i32
    %c0_i32_2 = arith.constant 0 : i32
    return %c0_i32, %c0_i32_0, %c0_i32_1 : i32, i32, i32
  }
  func.func @transform_2(%arg0: i32) -> (i32, i32, i32) {
    %c0_i32 = arith.constant 0 : i32
    %c0_i32_0 = arith.constant 0 : i32
    %c0_i32_1 = arith.constant 0 : i32
    %c0_i32_2 = arith.constant 0 : i32
    return %c0_i32, %c0_i32_0, %c0_i32_1 : i32, i32, i32
  }
}

</mosaic_0001>

<llo_original>
// kernel: generator_forward.4
$region0: #{generator_forward.4}
  #allocation0 [shape = 'u32[]', space=smem, size = 0x4, offset = 0x4, fixed_abs, tag = 'smem constant byte address 0x4 - core index']
  #allocation1 [shape = 'u32[72,128]{1,0:T(1,128)}', space=vmem, size = 0x9000, scoped, tag = 'internal scratch']
  %s0 = inlined_call_operand.vmem [shape: bf16[16,2,64], index: 0, kind: input, shape index: {}]
  %s1 = inlined_call_operand.hbm [shape: bf16[16,64,64], index: 1, kind: input, shape index: {}]
  %s2 = inlined_call_operand.vmem [shape: f32[1,1,64], index: 2, kind: input, shape index: {}]
  %s3 = inlined_call_operand.vmem [shape: f32[1,1,64], index: 3, kind: input, shape index: {}]
  %s4 = inlined_call_operand.vmem [shape: bf16[16,2,64], index: 4, kind: output, shape index: {}]
  %s5 = sld [smem:[#allocation0]]
  $region30: #{generator_forward.4} parent=0
    _
  %s7 = ssub.s32 1, %s5
  %s8 = scalar_select 0, %s7, %s5
  $region1: #{generator_forward.4} parent=0
    #allocation2 [shape = 'u8[262144]{0}', space=vmem, size = 0x40000, scoped, tag = 'input window, operand 1, single buffered']
    #allocation3 [shape = 's32[1]{0}', space=sflag, size = 0x4, scoped, tag = 'scoped memory for generator_forward.4']
    %9 = vsyncpa [#allocation3], 0
    // Predicated region
    $region2: #{generator_forward.4} parent=1 // pred_check
      _
    $region3: #{generator_forward.4} parent=1 // pred_check_branch
      %11 = sbr.rel (0) target = $region5
    $region4: #{generator_forward.4} parent=1 // pred_region
      _
    $region5: #{generator_forward.4} parent=1 // pred_fallthru
      _
    // Predicated region
    $region6: #{generator_forward.4} parent=1 // pred_check
      _
    $region7: #{generator_forward.4} parent=1 // pred_check_branch
      %13 = sbr.rel (0) target = $region9
    $region8: #{generator_forward.4} parent=1 // pred_region
      %15 = vsyncadd [#allocation3], 0
      %s16 = sshll.u32 %s1, 4
      %s17 = int_to_ptr.hbm [resolvable:$true] %s16
      %s18 = sshll.u32 [#allocation2], 4
      %s19 = int_to_ptr.vmem [resolvable:$true] %s18
      %24 = dma.hbm_to_vmem [thread:$0]  %s17, 8192, %s19, [#allocation3], 64, 64, 4
    $region9: #{generator_forward.4} parent=1 // pred_fallthru
      _
    // Predicated region
    $region10: #{generator_forward.4} parent=1 // pred_check
      _
    $region11: #{generator_forward.4} parent=1 // pred_check_branch
      %26 = sbr.rel (0) target = $region13
    $region12: #{generator_forward.4} parent=1 // pred_region
      _
    $region13: #{generator_forward.4} parent=1 // pred_fallthru
      _
    // Predicated region
    $region14: #{generator_forward.4} parent=1 // pred_check
      _
    $region15: #{generator_forward.4} parent=1 // pred_check_branch
      %28 = sbr.rel (0) target = $region17
    $region16: #{generator_forward.4} parent=1 // pred_region
      _
    $region17: #{generator_forward.4} parent=1 // pred_fallthru
      _
    // Predicated region
    $region18: #{generator_forward.4} parent=1 // pred_check
      _
    $region19: #{generator_forward.4} parent=1 // pred_check_branch
      %30 = sbr.rel (0) target = $region21
    $region20: #{generator_forward.4} parent=1 // pred_region
      %32 = dma.done [#allocation3], 8192
    $region21: #{generator_forward.4} parent=1 // pred_fallthru
      _
    %v34 = vld [vmem:[%s0] sm:$0x1]
    %v35 = vld [vmem:[%s0 + $0x1] sm:$0x1]
    %v36 = vld [vmem:[%s0 + $0x2] sm:$0x1]
    %v37 = vld [vmem:[%s0 + $0x3] sm:$0x1]
    %v38 = vld [vmem:[%s0 + $0x4] sm:$0x1]
    %v39 = vld [vmem:[%s0 + $0x5] sm:$0x1]
    %v40 = vld [vmem:[%s0 + $0x6] sm:$0x1]
    %v41 = vld [vmem:[%s0 + $0x7] sm:$0x1]
    %v42 = vld [vmem:[%s0 + $0x8] sm:$0x1]
    %v43 = vld [vmem:[%s0 + $0x9] sm:$0x1]
    %v44 = vld [vmem:[%s0 + $0xa] sm:$0x1]
    %v45 = vld [vmem:[%s0 + $0xb] sm:$0x1]
    %v46 = vld [vmem:[%s0 + $0xc] sm:$0x1]
    %v47 = vld [vmem:[%s0 + $0xd] sm:$0x1]
    %v48 = vld [vmem:[%s0 + $0xe] sm:$0x1]
    %v49 = vld [vmem:[%s0 + $0xf] sm:$0x1]
    %v50 = vld [vmem:[#allocation2] sm:$0xf]
    %v51 = vld [vmem:[#allocation2 + $0x4] sm:$0xf]
    %v52 = vld [vmem:[#allocation2 + $0x8] sm:$0xf]
    %v53 = vld [vmem:[#allocation2 + $0xc] sm:$0xf]
    %v54 = vld [vmem:[#allocation2 + $0x10] sm:$0xf]
    %v55 = vld [vmem:[#allocation2 + $0x14] sm:$0xf]
    %v56 = vld [vmem:[#allocation2 + $0x18] sm:$0xf]
    %v57 = vld [vmem:[#allocation2 + $0x1c] sm:$0xf]
    %v58 = vld [vmem:[#allocation2 + $0x20] sm:$0xf]
    %v59 = vld [vmem:[#allocation2 + $0x24] sm:$0xf]
    %v60 = vld [vmem:[#allocation2 + $0x28] sm:$0xf]
    %v61 = vld [vmem:[#allocation2 + $0x2c] sm:$0xf]
    %v62 = vld [vmem:[#allocation2 + $0x30] sm:$0xf]
    %v63 = vld [vmem:[#allocation2 + $0x34] sm:$0xf]
    %v64 = vld [vmem:[#allocation2 + $0x38] sm:$0xf]
    %v65 = vld [vmem:[#allocation2 + $0x3c] sm:$0xf]
    %v66 = vld [vmem:[#allocation2 + $0x40] sm:$0xf]
    %v67 = vld [vmem:[#allocation2 + $0x44] sm:$0xf]
    %v68 = vld [vmem:[#allocation2 + $0x48] sm:$0xf]
    %v69 = vld [vmem:[#allocation2 + $0x4c] sm:$0xf]
    %v70 = vld [vmem:[#allocation2 + $0x50] sm:$0xf]
    %v71 = vld [vmem:[#allocation2 + $0x54] sm:$0xf]
    %v72 = vld [vmem:[#allocation2 + $0x58] sm:$0xf]
    %v73 = vld [vmem:[#allocation2 + $0x5c] sm:$0xf]
    %v74 = vld [vmem:[#allocation2 + $0x60] sm:$0xf]
    %v75 = vld [vmem:[#allocation2 + $0x64] sm:$0xf]
    %v76 = vld [vmem:[#allocation2 + $0x68] sm:$0xf]
    %v77 = vld [vmem:[#allocation2 + $0x6c] sm:$0xf]
    %v78 = vld [vmem:[#allocation2 + $0x70] sm:$0xf]
    %v79 = vld [vmem:[#allocation2 + $0x74] sm:$0xf]
    %v80 = vld [vmem:[#allocation2 + $0x78] sm:$0xf]
    %v81 = vld [vmem:[#allocation2 + $0x7c] sm:$0xf]
    %v82 = vld [vmem:[#allocation2 + $0x80] sm:$0xf]
    %v83 = vld [vmem:[#allocation2 + $0x84] sm:$0xf]
    %v84 = vld [vmem:[#allocation2 + $0x88] sm:$0xf]
    %v85 = vld [vmem:[#allocation2 + $0x8c] sm:$0xf]
    %v86 = vld [vmem:[#allocation2 + $0x90] sm:$0xf]
    %v87 = vld [vmem:[#allocation2 + $0x94] sm:$0xf]
    %v88 = vld [vmem:[#allocation2 + $0x98] sm:$0xf]
    %v89 = vld [vmem:[#allocation2 + $0x9c] sm:$0xf]
    %v90 = vld [vmem:[#allocation2 + $0xa0] sm:$0xf]
    %v91 = vld [vmem:[#allocation2 + $0xa4] sm:$0xf]
    %v92 = vld [vmem:[#allocation2 + $0xa8] sm:$0xf]
    %v93 = vld [vmem:[#allocation2 + $0xac] sm:$0xf]
    %v94 = vld [vmem:[#allocation2 + $0xb0] sm:$0xf]
    %v95 = vld [vmem:[#allocation2 + $0xb4] sm:$0xf]
    %v96 = vld [vmem:[#allocation2 + $0xb8] sm:$0xf]
    %v97 = vld [vmem:[#allocation2 + $0xbc] sm:$0xf]
    %v98 = vld [vmem:[#allocation2 + $0xc0] sm:$0xf]
    %v99 = vld [vmem:[#allocation2 + $0xc4] sm:$0xf]
    %v100 = vld [vmem:[#allocation2 + $0xc8] sm:$0xf]
    %v101 = vld [vmem:[#allocation2 + $0xcc] sm:$0xf]
    %v102 = vld [vmem:[#allocation2 + $0xd0] sm:$0xf]
    %v103 = vld [vmem:[#allocation2 + $0xd4] sm:$0xf]
    %v104 = vld [vmem:[#allocation2 + $0xd8] sm:$0xf]
    %v105 = vld [vmem:[#allocation2 + $0xdc] sm:$0xf]
    %v106 = vld [vmem:[#allocation2 + $0xe0] sm:$0xf]
    %v107 = vld [vmem:[#allocation2 + $0xe4] sm:$0xf]
    %v108 = vld [vmem:[#allocation2 + $0xe8] sm:$0xf]
    %v109 = vld [vmem:[#allocation2 + $0xec] sm:$0xf]
    %v110 = vld [vmem:[#allocation2 + $0xf0] sm:$0xf]
    %v111 = vld [vmem:[#allocation2 + $0xf4] sm:$0xf]
    %v112 = vld [vmem:[#allocation2 + $0xf8] sm:$0xf]
    %v113 = vld [vmem:[#allocation2 + $0xfc] sm:$0xf]
    %v114 = vld [vmem:[#allocation2 + $0x100] sm:$0xf]
    %v115 = vld [vmem:[#allocation2 + $0x104] sm:$0xf]
    %v116 = vld [vmem:[#allocation2 + $0x108] sm:$0xf]
    %v117 = vld [vmem:[#allocation2 + $0x10c] sm:$0xf]
    %v118 = vld [vmem:[#allocation2 + $0x110] sm:$0xf]
    %v119 = vld [vmem:[#allocation2 + $0x114] sm:$0xf]
    %v120 = vld [vmem:[#allocation2 + $0x118] sm:$0xf]
    %v121 = vld [vmem:[#allocation2 + $0x11c] sm:$0xf]
    %v122 = vld [vmem:[#allocation2 + $0x120] sm:$0xf]
    %v123 = vld [vmem:[#allocation2 + $0x124] sm:$0xf]
    %v124 = vld [vmem:[#allocation2 + $0x128] sm:$0xf]
    %v125 = vld [vmem:[#allocation2 + $0x12c] sm:$0xf]
    %v126 = vld [vmem:[#allocation2 + $0x130] sm:$0xf]
    %v127 = vld [vmem:[#allocation2 + $0x134] sm:$0xf]
    %v128 = vld [vmem:[#allocation2 + $0x138] sm:$0xf]
    %v129 = vld [vmem:[#allocation2 + $0x13c] sm:$0xf]
    %v130 = vld [vmem:[#allocation2 + $0x140] sm:$0xf]
    %v131 = vld [vmem:[#allocation2 + $0x144] sm:$0xf]
    %v132 = vld [vmem:[#allocation2 + $0x148] sm:$0xf]
    %v133 = vld [vmem:[#allocation2 + $0x14c] sm:$0xf]
    %v134 = vld [vmem:[#allocation2 + $0x150] sm:$0xf]
    %v135 = vld [vmem:[#allocation2 + $0x154] sm:$0xf]
    %v136 = vld [vmem:[#allocation2 + $0x158] sm:$0xf]
    %v137 = vld [vmem:[#allocation2 + $0x15c] sm:$0xf]
    %v138 = vld [vmem:[#allocation2 + $0x160] sm:$0xf]
    %v139 = vld [vmem:[#allocation2 + $0x164] sm:$0xf]
    %v140 = vld [vmem:[#allocation2 + $0x168] sm:$0xf]
    %v141 = vld [vmem:[#allocation2 + $0x16c] sm:$0xf]
    %v142 = vld [vmem:[#allocation2 + $0x170] sm:$0xf]
    %v143 = vld [vmem:[#allocation2 + $0x174] sm:$0xf]
    %v144 = vld [vmem:[#allocation2 + $0x178] sm:$0xf]
    %v145 = vld [vmem:[#allocation2 + $0x17c] sm:$0xf]
    %v146 = vld [vmem:[#allocation2 + $0x180] sm:$0xf]
    %v147 = vld [vmem:[#allocation2 + $0x184] sm:$0xf]
    %v148 = vld [vmem:[#allocation2 + $0x188] sm:$0xf]
    %v149 = vld [vmem:[#allocation2 + $0x18c] sm:$0xf]
    %v150 = vld [vmem:[#allocation2 + $0x190] sm:$0xf]
    %v151 = vld [vmem:[#allocation2 + $0x194] sm:$0xf]
    %v152 = vld [vmem:[#allocation2 + $0x198] sm:$0xf]
    %v153 = vld [vmem:[#allocation2 + $0x19c] sm:$0xf]
    %v154 = vld [vmem:[#allocation2 + $0x1a0] sm:$0xf]
    %v155 = vld [vmem:[#allocation2 + $0x1a4] sm:$0xf]
    %v156 = vld [vmem:[#allocation2 + $0x1a8] sm:$0xf]
    %v157 = vld [vmem:[#allocation2 + $0x1ac] sm:$0xf]
    %v158 = vld [vmem:[#allocation2 + $0x1b0] sm:$0xf]
    %v159 = vld [vmem:[#allocation2 + $0x1b4] sm:$0xf]
    %v160 = vld [vmem:[#allocation2 + $0x1b8] sm:$0xf]
    %v161 = vld [vmem:[#allocation2 + $0x1bc] sm:$0xf]
    %v162 = vld [vmem:[#allocation2 + $0x1c0] sm:$0xf]
    %v163 = vld [vmem:[#allocation2 + $0x1c4] sm:$0xf]
    %v164 = vld [vmem:[#allocation2 + $0x1c8] sm:$0xf]
    %v165 = vld [vmem:[#allocation2 + $0x1cc] sm:$0xf]
    %v166 = vld [vmem:[#allocation2 + $0x1d0] sm:$0xf]
    %v167 = vld [vmem:[#allocation2 + $0x1d4] sm:$0xf]
    %v168 = vld [vmem:[#allocation2 + $0x1d8] sm:$0xf]
    %v169 = vld [vmem:[#allocation2 + $0x1dc] sm:$0xf]
    %v170 = vld [vmem:[#allocation2 + $0x1e0] sm:$0xf]
    %v171 = vld [vmem:[#allocation2 + $0x1e4] sm:$0xf]
    %v172 = vld [vmem:[#allocation2 + $0x1e8] sm:$0xf]
    %v173 = vld [vmem:[#allocation2 + $0x1ec] sm:$0xf]
    %v174 = vld [vmem:[#allocation2 + $0x1f0] sm:$0xf]
    %v175 = vld [vmem:[#allocation2 + $0x1f4] sm:$0xf]
    %v176 = vld [vmem:[#allocation2 + $0x1f8] sm:$0xf]
    %v177 = vld [vmem:[#allocation2 + $0x1fc] sm:$0xf]
    %v186 = vunpack.c.l.b16 %v50
    %v187 = vunpack.c.l.b16 %v51
    %v188 = vunpack.c.l.b16 %v52
    %v189 = vunpack.c.l.b16 %v53
    %v190 = vunpack.c.l.b16 %v54
    %v191 = vunpack.c.l.b16 %v55
    %v192 = vunpack.c.l.b16 %v56
    %v193 = vunpack.c.l.b16 %v57
    %v194 = vpack.c.b16 %v187, %v186
    %v195 = vpack.c.b16 %v189, %v188
    %v196 = vpack.c.b16 %v191, %v190
    %v197 = vpack.c.b16 %v193, %v192
    %vm202 = vcmask 523264
    %v204 = vsel %vm202, %v34, 0
    %206 = vmatpush.bf16.msra.mxu0 0
    %207 = vmatpush.bf16.msra.mxu0 0
    %208 = vmatpush.bf16.msra.mxu0 0
    %209 = vmatpush.bf16.msra.mxu0 0
    %210 = vmatpush.bf16.msra.mxu0 %v197
    %211 = vmatpush.bf16.msra.mxu0 %v196
    %212 = vmatpush.bf16.msra.mxu0 %v195
    %213 = vmatpush.bf16.msra.mxu0 %v194
    %214 = vmatmul.bf16.gmra.mxu0 %v204
    %v215 = vpop.f32.mrf.mxu0
    %v216 = vadd.f32 0.0, %v215
    %v217 = vpop.f32.mrf.mxu0
    %218 = vdwg.mxu0
    %v227 = vunpack.c.l.b16 %v58
    %v228 = vunpack.c.l.b16 %v59
    %v229 = vunpack.c.l.b16 %v60
    %v230 = vunpack.c.l.b16 %v61
    %v231 = vunpack.c.l.b16 %v62
    %v232 = vunpack.c.l.b16 %v63
    %v233 = vunpack.c.l.b16 %v64
    %v234 = vunpack.c.l.b16 %v65
    %v235 = vpack.c.b16 %v228, %v227
    %v236 = vpack.c.b16 %v230, %v229
    %v237 = vpack.c.b16 %v232, %v231
    %v238 = vpack.c.b16 %v234, %v233
    %v244 = vsel %vm202, %v35, 0
    %246 = vmatpush.bf16.msra.mxu0 0
    %247 = vmatpush.bf16.msra.mxu0 0
    %248 = vmatpush.bf16.msra.mxu0 0
    %249 = vmatpush.bf16.msra.mxu0 0
    %250 = vmatpush.bf16.msra.mxu0 %v238
    %251 = vmatpush.bf16.msra.mxu0 %v237
    %252 = vmatpush.bf16.msra.mxu0 %v236
    %253 = vmatpush.bf16.msra.mxu0 %v235
    %254 = vmatmul.bf16.gmra.mxu0 %v244
    %v255 = vpop.f32.mrf.mxu0
    %v256 = vadd.f32 0.0, %v255
    %v257 = vpop.f32.mrf.mxu0
    %258 = vdwg.mxu0
    %v267 = vunpack.c.l.b16 %v66
    %v268 = vunpack.c.l.b16 %v67
    %v269 = vunpack.c.l.b16 %v68
    %v270 = vunpack.c.l.b16 %v69
    %v271 = vunpack.c.l.b16 %v70
    %v272 = vunpack.c.l.b16 %v71
    %v273 = vunpack.c.l.b16 %v72
    %v274 = vunpack.c.l.b16 %v73
    %v275 = vpack.c.b16 %v268, %v267
    %v276 = vpack.c.b16 %v270, %v269
    %v277 = vpack.c.b16 %v272, %v271
    %v278 = vpack.c.b16 %v274, %v273
    %v284 = vsel %vm202, %v36, 0
    %286 = vmatpush.bf16.msra.mxu0 0
    %287 = vmatpush.bf16.msra.mxu0 0
    %288 = vmatpush.bf16.msra.mxu0 0
    %289 = vmatpush.bf16.msra.mxu0 0
    %290 = vmatpush.bf16.msra.mxu0 %v278
    %291 = vmatpush.bf16.msra.mxu0 %v277
    %292 = vmatpush.bf16.msra.mxu0 %v276
    %293 = vmatpush.bf16.msra.mxu0 %v275
    %294 = vmatmul.bf16.gmra.mxu0 %v284
    %v295 = vpop.f32.mrf.mxu0
    %v296 = vadd.f32 0.0, %v295
    %v297 = vpop.f32.mrf.mxu0
    %298 = vdwg.mxu0
    %v307 = vunpack.c.l.b16 %v74
    %v308 = vunpack.c.l.b16 %v75
    %v309 = vunpack.c.l.b16 %v76
    %v310 = vunpack.c.l.b16 %v77
    %v311 = vunpack.c.l.b16 %v78
    %v312 = vunpack.c.l.b16 %v79
    %v313 = vunpack.c.l.b16 %v80
    %v314 = vunpack.c.l.b16 %v81
    %v315 = vpack.c.b16 %v308, %v307
    %v316 = vpack.c.b16 %v310, %v309
    %v317 = vpack.c.b16 %v312, %v311
    %v318 = vpack.c.b16 %v314, %v313
    %v324 = vsel %vm202, %v37, 0
    %326 = vmatpush.bf16.msra.mxu0 0
    %327 = vmatpush.bf16.msra.mxu0 0
    %328 = vmatpush.bf16.msra.mxu0 0
    %329 = vmatpush.bf16.msra.mxu0 0
    %330 = vmatpush.bf16.msra.mxu0 %v318
    %331 = vmatpush.bf16.msra.mxu0 %v317
    %332 = vmatpush.bf16.msra.mxu0 %v316
    %333 = vmatpush.bf16.msra.mxu0 %v315
    %334 = vmatmul.bf16.gmra.mxu0 %v324
    %v335 = vpop.f32.mrf.mxu0
    %v336 = vadd.f32 0.0, %v335
    %v337 = vpop.f32.mrf.mxu0
    %338 = vdwg.mxu0
    %v347 = vunpack.c.l.b16 %v82
    %v348 = vunpack.c.l.b16 %v83
    %v349 = vunpack.c.l.b16 %v84
    %v350 = vunpack.c.l.b16 %v85
    %v351 = vunpack.c.l.b16 %v86
    %v352 = vunpack.c.l.b16 %v87
    %v353 = vunpack.c.l.b16 %v88
    %v354 = vunpack.c.l.b16 %v89
    %v355 = vpack.c.b16 %v348, %v347
    %v356 = vpack.c.b16 %v350, %v349
    %v357 = vpack.c.b16 %v352, %v351
    %v358 = vpack.c.b16 %v354, %v353
    %v364 = vsel %vm202, %v38, 0
    %366 = vmatpush.bf16.msra.mxu0 0
    %367 = vmatpush.bf16.msra.mxu0 0
    %368 = vmatpush.bf16.msra.mxu0 0
    %369 = vmatpush.bf16.msra.mxu0 0
    %370 = vmatpush.bf16.msra.mxu0 %v358
    %371 = vmatpush.bf16.msra.mxu0 %v357
    %372 = vmatpush.bf16.msra.mxu0 %v356
    %373 = vmatpush.bf16.msra.mxu0 %v355
    %374 = vmatmul.bf16.gmra.mxu0 %v364
    %v375 = vpop.f32.mrf.mxu0
    %v376 = vadd.f32 0.0, %v375
    %v377 = vpop.f32.mrf.mxu0
    %378 = vdwg.mxu0
    %v387 = vunpack.c.l.b16 %v90
    %v388 = vunpack.c.l.b16 %v91
    %v389 = vunpack.c.l.b16 %v92
    %v390 = vunpack.c.l.b16 %v93
    %v391 = vunpack.c.l.b16 %v94
    %v392 = vunpack.c.l.b16 %v95
    %v393 = vunpack.c.l.b16 %v96
    %v394 = vunpack.c.l.b16 %v97
    %v395 = vpack.c.b16 %v388, %v387
    %v396 = vpack.c.b16 %v390, %v389
    %v397 = vpack.c.b16 %v392, %v391
    %v398 = vpack.c.b16 %v394, %v393
    %v404 = vsel %vm202, %v39, 0
    %406 = vmatpush.bf16.msra.mxu0 0
    %407 = vmatpush.bf16.msra.mxu0 0
    %408 = vmatpush.bf16.msra.mxu0 0
    %409 = vmatpush.bf16.msra.mxu0 0
    %410 = vmatpush.bf16.msra.mxu0 %v398
    %411 = vmatpush.bf16.msra.mxu0 %v397
    %412 = vmatpush.bf16.msra.mxu0 %v396
    %413 = vmatpush.bf16.msra.mxu0 %v395
    %414 = vmatmul.bf16.gmra.mxu0 %v404
    %v415 = vpop.f32.mrf.mxu0
    %v416 = vadd.f32 0.0, %v415
    %v417 = vpop.f32.mrf.mxu0
    %418 = vdwg.mxu0
    %v427 = vunpack.c.l.b16 %v98
    %v428 = vunpack.c.l.b16 %v99
    %v429 = vunpack.c.l.b16 %v100
    %v430 = vunpack.c.l.b16 %v101
    %v431 = vunpack.c.l.b16 %v102
    %v432 = vunpack.c.l.b16 %v103
    %v433 = vunpack.c.l.b16 %v104
    %v434 = vunpack.c.l.b16 %v105
    %v435 = vpack.c.b16 %v428, %v427
    %v436 = vpack.c.b16 %v430, %v429
    %v437 = vpack.c.b16 %v432, %v431
    %v438 = vpack.c.b16 %v434, %v433
    %v444 = vsel %vm202, %v40, 0
    %446 = vmatpush.bf16.msra.mxu0 0
    %447 = vmatpush.bf16.msra.mxu0 0
    %448 = vmatpush.bf16.msra.mxu0 0
    %449 = vmatpush.bf16.msra.mxu0 0
    %450 = vmatpush.bf16.msra.mxu0 %v438
    %451 = vmatpush.bf16.msra.mxu0 %v437
    %452 = vmatpush.bf16.msra.mxu0 %v436
    %453 = vmatpush.bf16.msra.mxu0 %v435
    %454 = vmatmul.bf16.gmra.mxu0 %v444
    %v455 = vpop.f32.mrf.mxu0
    %v456 = vadd.f32 0.0, %v455
    %v457 = vpop.f32.mrf.mxu0
    %458 = vdwg.mxu0
    %v467 = vunpack.c.l.b16 %v106
    %v468 = vunpack.c.l.b16 %v107
    %v469 = vunpack.c.l.b16 %v108
    %v470 = vunpack.c.l.b16 %v109
    %v471 = vunpack.c.l.b16 %v110
    %v472 = vunpack.c.l.b16 %v111
    %v473 = vunpack.c.l.b16 %v112
    %v474 = vunpack.c.l.b16 %v113
    %v475 = vpack.c.b16 %v468, %v467
    %v476 = vpack.c.b16 %v470, %v469
    %v477 = vpack.c.b16 %v472, %v471
    %v478 = vpack.c.b16 %v474, %v473
    %v484 = vsel %vm202, %v41, 0
    %486 = vmatpush.bf16.msra.mxu0 0
    %487 = vmatpush.bf16.msra.mxu0 0
    %488 = vmatpush.bf16.msra.mxu0 0
    %489 = vmatpush.bf16.msra.mxu0 0
    %490 = vmatpush.bf16.msra.mxu0 %v478
    %491 = vmatpush.bf16.msra.mxu0 %v477
    %492 = vmatpush.bf16.msra.mxu0 %v476
    %493 = vmatpush.bf16.msra.mxu0 %v475
    %494 = vmatmul.bf16.gmra.mxu0 %v484
    %v495 = vpop.f32.mrf.mxu0
    %v496 = vadd.f32 0.0, %v495
    %v497 = vpop.f32.mrf.mxu0
    %498 = vdwg.mxu0
    %v507 = vunpack.c.l.b16 %v114
    %v508 = vunpack.c.l.b16 %v115
    %v509 = vunpack.c.l.b16 %v116
    %v510 = vunpack.c.l.b16 %v117
    %v511 = vunpack.c.l.b16 %v118
    %v512 = vunpack.c.l.b16 %v119
    %v513 = vunpack.c.l.b16 %v120
    %v514 = vunpack.c.l.b16 %v121
    %v515 = vpack.c.b16 %v508, %v507
    %v516 = vpack.c.b16 %v510, %v509
    %v517 = vpack.c.b16 %v512, %v511
    %v518 = vpack.c.b16 %v514, %v513
    %v524 = vsel %vm202, %v42, 0
    %526 = vmatpush.bf16.msra.mxu0 0
    %527 = vmatpush.bf16.msra.mxu0 0
    %528 = vmatpush.bf16.msra.mxu0 0
    %529 = vmatpush.bf16.msra.mxu0 0
    %530 = vmatpush.bf16.msra.mxu0 %v518
    %531 = vmatpush.bf16.msra.mxu0 %v517
    %532 = vmatpush.bf16.msra.mxu0 %v516
    %533 = vmatpush.bf16.msra.mxu0 %v515
    %534 = vmatmul.bf16.gmra.mxu0 %v524
    %v535 = vpop.f32.mrf.mxu0
    %v536 = vadd.f32 0.0, %v535
    %v537 = vpop.f32.mrf.mxu0
    %538 = vdwg.mxu0
    %v547 = vunpack.c.l.b16 %v122
    %v548 = vunpack.c.l.b16 %v123
    %v549 = vunpack.c.l.b16 %v124
    %v550 = vunpack.c.l.b16 %v125
    %v551 = vunpack.c.l.b16 %v126
    %v552 = vunpack.c.l.b16 %v127
    %v553 = vunpack.c.l.b16 %v128
    %v554 = vunpack.c.l.b16 %v129
    %v555 = vpack.c.b16 %v548, %v547
    %v556 = vpack.c.b16 %v550, %v549
    %v557 = vpack.c.b16 %v552, %v551
    %v558 = vpack.c.b16 %v554, %v553
    %v564 = vsel %vm202, %v43, 0
    %566 = vmatpush.bf16.msra.mxu0 0
    %567 = vmatpush.bf16.msra.mxu0 0
    %568 = vmatpush.bf16.msra.mxu0 0
    %569 = vmatpush.bf16.msra.mxu0 0
    %570 = vmatpush.bf16.msra.mxu0 %v558
    %571 = vmatpush.bf16.msra.mxu0 %v557
    %572 = vmatpush.bf16.msra.mxu0 %v556
    %573 = vmatpush.bf16.msra.mxu0 %v555
    %574 = vmatmul.bf16.gmra.mxu0 %v564
    %v575 = vpop.f32.mrf.mxu0
    %v576 = vadd.f32 0.0, %v575
    %v577 = vpop.f32.mrf.mxu0
    %578 = vdwg.mxu0
    %v587 = vunpack.c.l.b16 %v130
    %v588 = vunpack.c.l.b16 %v131
    %v589 = vunpack.c.l.b16 %v132
    %v590 = vunpack.c.l.b16 %v133
    %v591 = vunpack.c.l.b16 %v134
    %v592 = vunpack.c.l.b16 %v135
    %v593 = vunpack.c.l.b16 %v136
    %v594 = vunpack.c.l.b16 %v137
    %v595 = vpack.c.b16 %v588, %v587
    %v596 = vpack.c.b16 %v590, %v589
    %v597 = vpack.c.b16 %v592, %v591
    %v598 = vpack.c.b16 %v594, %v593
    %v604 = vsel %vm202, %v44, 0
    %606 = vmatpush.bf16.msra.mxu0 0
    %607 = vmatpush.bf16.msra.mxu0 0
    %608 = vmatpush.bf16.msra.mxu0 0
    %609 = vmatpush.bf16.msra.mxu0 0
    %610 = vmatpush.bf16.msra.mxu0 %v598
    %611 = vmatpush.bf16.msra.mxu0 %v597
    %612 = vmatpush.bf16.msra.mxu0 %v596
    %613 = vmatpush.bf16.msra.mxu0 %v595
    %614 = vmatmul.bf16.gmra.mxu0 %v604
    %v615 = vpop.f32.mrf.mxu0
    %v616 = vadd.f32 0.0, %v615
    %v617 = vpop.f32.mrf.mxu0
    %618 = vdwg.mxu0
    %v627 = vunpack.c.l.b16 %v138
    %v628 = vunpack.c.l.b16 %v139
    %v629 = vunpack.c.l.b16 %v140
    %v630 = vunpack.c.l.b16 %v141
    %v631 = vunpack.c.l.b16 %v142
    %v632 = vunpack.c.l.b16 %v143
    %v633 = vunpack.c.l.b16 %v144
    %v634 = vunpack.c.l.b16 %v145
    %v635 = vpack.c.b16 %v628, %v627
    %v636 = vpack.c.b16 %v630, %v629
    %v637 = vpack.c.b16 %v632, %v631
    %v638 = vpack.c.b16 %v634, %v633
    %v644 = vsel %vm202, %v45, 0
    %646 = vmatpush.bf16.msra.mxu0 0
    %647 = vmatpush.bf16.msra.mxu0 0
    %648 = vmatpush.bf16.msra.mxu0 0
    %649 = vmatpush.bf16.msra.mxu0 0
    %650 = vmatpush.bf16.msra.mxu0 %v638
    %651 = vmatpush.bf16.msra.mxu0 %v637
    %652 = vmatpush.bf16.msra.mxu0 %v636
    %653 = vmatpush.bf16.msra.mxu0 %v635
    %654 = vmatmul.bf16.gmra.mxu0 %v644
    %v655 = vpop.f32.mrf.mxu0
    %v656 = vadd.f32 0.0, %v655
    %v657 = vpop.f32.mrf.mxu0
    %658 = vdwg.mxu0
    %v667 = vunpack.c.l.b16 %v146
    %v668 = vunpack.c.l.b16 %v147
    %v669 = vunpack.c.l.b16 %v148
    %v670 = vunpack.c.l.b16 %v149
    %v671 = vunpack.c.l.b16 %v150
    %v672 = vunpack.c.l.b16 %v151
    %v673 = vunpack.c.l.b16 %v152
    %v674 = vunpack.c.l.b16 %v153
    %v675 = vpack.c.b16 %v668, %v667
    %v676 = vpack.c.b16 %v670, %v669
    %v677 = vpack.c.b16 %v672, %v671
    %v678 = vpack.c.b16 %v674, %v673
    %v684 = vsel %vm202, %v46, 0
    %686 = vmatpush.bf16.msra.mxu0 0
    %687 = vmatpush.bf16.msra.mxu0 0
    %688 = vmatpush.bf16.msra.mxu0 0
    %689 = vmatpush.bf16.msra.mxu0 0
    %690 = vmatpush.bf16.msra.mxu0 %v678
    %691 = vmatpush.bf16.msra.mxu0 %v677
    %692 = vmatpush.bf16.msra.mxu0 %v676
    %693 = vmatpush.bf16.msra.mxu0 %v675
    %694 = vmatmul.bf16.gmra.mxu0 %v684
    %v695 = vpop.f32.mrf.mxu0
    %v696 = vadd.f32 0.0, %v695
    %v697 = vpop.f32.mrf.mxu0
    %698 = vdwg.mxu0
    %v707 = vunpack.c.l.b16 %v154
    %v708 = vunpack.c.l.b16 %v155
    %v709 = vunpack.c.l.b16 %v156
    %v710 = vunpack.c.l.b16 %v157
    %v711 = vunpack.c.l.b16 %v158
    %v712 = vunpack.c.l.b16 %v159
    %v713 = vunpack.c.l.b16 %v160
    %v714 = vunpack.c.l.b16 %v161
    %v715 = vpack.c.b16 %v708, %v707
    %v716 = vpack.c.b16 %v710, %v709
    %v717 = vpack.c.b16 %v712, %v711
    %v718 = vpack.c.b16 %v714, %v713
    %v724 = vsel %vm202, %v47, 0
    %726 = vmatpush.bf16.msra.mxu0 0
    %727 = vmatpush.bf16.msra.mxu0 0
    %728 = vmatpush.bf16.msra.mxu0 0
    %729 = vmatpush.bf16.msra.mxu0 0
    %730 = vmatpush.bf16.msra.mxu0 %v718
    %731 = vmatpush.bf16.msra.mxu0 %v717
    %732 = vmatpush.bf16.msra.mxu0 %v716
    %733 = vmatpush.bf16.msra.mxu0 %v715
    %734 = vmatmul.bf16.gmra.mxu0 %v724
    %v735 = vpop.f32.mrf.mxu0
    %v736 = vadd.f32 0.0, %v735
    %v737 = vpop.f32.mrf.mxu0
    %738 = vdwg.mxu0
    %v747 = vunpack.c.l.b16 %v162
    %v748 = vunpack.c.l.b16 %v163
    %v749 = vunpack.c.l.b16 %v164
    %v750 = vunpack.c.l.b16 %v165
    %v751 = vunpack.c.l.b16 %v166
    %v752 = vunpack.c.l.b16 %v167
    %v753 = vunpack.c.l.b16 %v168
    %v754 = vunpack.c.l.b16 %v169
    %v755 = vpack.c.b16 %v748, %v747
    %v756 = vpack.c.b16 %v750, %v749
    %v757 = vpack.c.b16 %v752, %v751
    %v758 = vpack.c.b16 %v754, %v753
    %v764 = vsel %vm202, %v48, 0
    %766 = vmatpush.bf16.msra.mxu0 0
    %767 = vmatpush.bf16.msra.mxu0 0
    %768 = vmatpush.bf16.msra.mxu0 0
    %769 = vmatpush.bf16.msra.mxu0 0
    %770 = vmatpush.bf16.msra.mxu0 %v758
    %771 = vmatpush.bf16.msra.mxu0 %v757
    %772 = vmatpush.bf16.msra.mxu0 %v756
    %773 = vmatpush.bf16.msra.mxu0 %v755
    %774 = vmatmul.bf16.gmra.mxu0 %v764
    %v775 = vpop.f32.mrf.mxu0
    %v776 = vadd.f32 0.0, %v775
    %v777 = vpop.f32.mrf.mxu0
    %778 = vdwg.mxu0
    %v787 = vunpack.c.l.b16 %v170
    %v788 = vunpack.c.l.b16 %v171
    %v789 = vunpack.c.l.b16 %v172
    %v790 = vunpack.c.l.b16 %v173
    %v791 = vunpack.c.l.b16 %v174
    %v792 = vunpack.c.l.b16 %v175
    %v793 = vunpack.c.l.b16 %v176
    %v794 = vunpack.c.l.b16 %v177
    %v795 = vpack.c.b16 %v788, %v787
    %v796 = vpack.c.b16 %v790, %v789
    %v797 = vpack.c.b16 %v792, %v791
    %v798 = vpack.c.b16 %v794, %v793
    %v804 = vsel %vm202, %v49, 0
    %806 = vmatpush.bf16.msra.mxu0 0
    %807 = vmatpush.bf16.msra.mxu0 0
    %808 = vmatpush.bf16.msra.mxu0 0
    %809 = vmatpush.bf16.msra.mxu0 0
    %810 = vmatpush.bf16.msra.mxu0 %v798
    %811 = vmatpush.bf16.msra.mxu0 %v797
    %812 = vmatpush.bf16.msra.mxu0 %v796
    %813 = vmatpush.bf16.msra.mxu0 %v795
    %814 = vmatmul.bf16.gmra.mxu0 %v804
    %v815 = vpop.f32.mrf.mxu0
    %v816 = vadd.f32 0.0, %v815
    %v817 = vpop.f32.mrf.mxu0
    %818 = vdwg.mxu0
    %vm819 = vcmask 517120
    %v820 = vsel %vm819, %v216, 0.0
    %v821 = vsel %vm819, %v256, 0.0
    %v822 = vadd.f32 %v820, %v821
    %v823 = vsel %vm819, %v296, 0.0
    %v824 = vadd.f32 %v822, %v823
    %v825 = vsel %vm819, %v336, 0.0
    %v826 = vadd.f32 %v824, %v825
    %v827 = vsel %vm819, %v376, 0.0
    %v828 = vadd.f32 %v826, %v827
    %v829 = vsel %vm819, %v416, 0.0
    %v830 = vadd.f32 %v828, %v829
    %v831 = vsel %vm819, %v456, 0.0
    %v832 = vadd.f32 %v830, %v831
    %v833 = vsel %vm819, %v496, 0.0
    %v834 = vadd.f32 %v832, %v833
    %v835 = vsel %vm819, %v536, 0.0
    %v836 = vadd.f32 %v834, %v835
    %v837 = vsel %vm819, %v576, 0.0
    %v838 = vadd.f32 %v836, %v837
    %v839 = vsel %vm819, %v616, 0.0
    %v840 = vadd.f32 %v838, %v839
    %v841 = vsel %vm819, %v656, 0.0
    %v842 = vadd.f32 %v840, %v841
    %v843 = vsel %vm819, %v696, 0.0
    %v844 = vadd.f32 %v842, %v843
    %v845 = vsel %vm819, %v736, 0.0
    %v846 = vadd.f32 %v844, %v845
    %v847 = vsel %vm819, %v776, 0.0
    %v848 = vadd.f32 %v846, %v847
    %v849 = vsel %vm819, %v816, 0.0
    %v850 = vadd.f32 %v848, %v849
    %v851 = vsel %vm819, %v850, 0.0
    %v852 = vrot.slane %v851, 4
    %v853 = vadd.f32 %v851, %v852
    %v854 = vrot.slane %v853, 2
    %v855 = vadd.f32 %v853, %v854
    %v856 = vrot.slane %v855, 1
    %v857 = vadd.f32 %v855, %v856
    %v858 = vmul.f32 %v216, %v216
    %v859 = vmul.f32 %v256, %v256
    %v860 = vmul.f32 %v296, %v296
    %v861 = vmul.f32 %v336, %v336
    %v862 = vmul.f32 %v376, %v376
    %v863 = vmul.f32 %v416, %v416
    %v864 = vmul.f32 %v456, %v456
    %v865 = vmul.f32 %v496, %v496
    %v866 = vmul.f32 %v536, %v536
    %v867 = vmul.f32 %v576, %v576
    %v868 = vmul.f32 %v616, %v616
    %v869 = vmul.f32 %v656, %v656
    %v870 = vmul.f32 %v696, %v696
    %v871 = vmul.f32 %v736, %v736
    %v872 = vmul.f32 %v776, %v776
    %v873 = vmul.f32 %v816, %v816
    %v874 = vsel %vm819, %v858, 0.0
    %v875 = vsel %vm819, %v859, 0.0
    %v876 = vadd.f32 %v874, %v875
    %v877 = vsel %vm819, %v860, 0.0
    %v878 = vadd.f32 %v876, %v877
    %v879 = vsel %vm819, %v861, 0.0
    %v880 = vadd.f32 %v878, %v879
    %v881 = vsel %vm819, %v862, 0.0
    %v882 = vadd.f32 %v880, %v881
    %v883 = vsel %vm819, %v863, 0.0
    %v884 = vadd.f32 %v882, %v883
    %v885 = vsel %vm819, %v864, 0.0
    %v886 = vadd.f32 %v884, %v885
    %v887 = vsel %vm819, %v865, 0.0
    %v888 = vadd.f32 %v886, %v887
    %v889 = vsel %vm819, %v866, 0.0
    %v890 = vadd.f32 %v888, %v889
    %v891 = vsel %vm819, %v867, 0.0
    %v892 = vadd.f32 %v890, %v891
    %v893 = vsel %vm819, %v868, 0.0
    %v894 = vadd.f32 %v892, %v893
    %v895 = vsel %vm819, %v869, 0.0
    %v896 = vadd.f32 %v894, %v895
    %v897 = vsel %vm819, %v870, 0.0
    %v898 = vadd.f32 %v896, %v897
    %v899 = vsel %vm819, %v871, 0.0
    %v900 = vadd.f32 %v898, %v899
    %v901 = vsel %vm819, %v872, 0.0
    %v902 = vadd.f32 %v900, %v901
    %v903 = vsel %vm819, %v873, 0.0
    %v904 = vadd.f32 %v902, %v903
    %v905 = vsel %vm819, %v904, 0.0
    %v906 = vrot.slane %v905, 4
    %v907 = vadd.f32 %v905, %v906
    %v908 = vrot.slane %v907, 2
    %v909 = vadd.f32 %v907, %v908
    %v910 = vrot.slane %v909, 1
    %v911 = vadd.f32 %v909, %v910
    %v912 = vmul.f32 %v857, 0.03125
    %v913 = vmul.f32 %v911, 0.03125
    %v914 = vmul.f32 %v912, %v912
    %v915 = vsub.f32 %v913, %v914
    %v916 = vmax.f32 %v915, 0.0
    %v917 = vld [vmem:[%s2] sm:$0x1]
    %v918 = vadd.f32 %v916, 1e-05
    %v919 = vrsqrt.pop %v918
    %v920 = vmul.f32 %v919, %v918
    %v921 = vmul.f32 %v920, %v919
    %v922 = vmul.f32 0.5, %v921
    %v923 = vsub.f32 1.5, %v922
    %v924 = vmul.f32 %v919, %v923
    %vm925 = vweird.f32 %v918
    %vm926 = vweird.f32 %v919
    %vm927 = vmor %vm925, %vm926
    %v928 = vsel %vm927, %v919, %v924
    %v929 = vmul.f32 %v917, %v928
    %v930 = vld [vmem:[%s3] sm:$0x1]
    %v931 = vmul.f32 %v912, %v929
    %v932 = vsub.f32 %v930, %v931
    %v934 = vperm.slane %v929, 0
    %v936 = vmul.f32 %v216, %v934
    %v937 = vmul.f32 %v256, %v934
    %v938 = vmul.f32 %v296, %v934
    %v939 = vmul.f32 %v336, %v934
    %v940 = vmul.f32 %v376, %v934
    %v941 = vmul.f32 %v416, %v934
    %v942 = vmul.f32 %v456, %v934
    %v943 = vmul.f32 %v496, %v934
    %v944 = vmul.f32 %v536, %v934
    %v945 = vmul.f32 %v576, %v934
    %v946 = vmul.f32 %v616, %v934
    %v947 = vmul.f32 %v656, %v934
    %v948 = vmul.f32 %v696, %v934
    %v949 = vmul.f32 %v736, %v934
    %v950 = vmul.f32 %v776, %v934
    %v951 = vmul.f32 %v816, %v934
    %v953 = vperm.slane %v932, 0
    %v955 = vadd.f32 %v936, %v953
    %v956 = vadd.f32 %v937, %v953
    %v957 = vadd.f32 %v938, %v953
    %v958 = vadd.f32 %v939, %v953
    %v959 = vadd.f32 %v940, %v953
    %v960 = vadd.f32 %v941, %v953
    %v961 = vadd.f32 %v942, %v953
    %v962 = vadd.f32 %v943, %v953
    %v963 = vadd.f32 %v944, %v953
    %v964 = vadd.f32 %v945, %v953
    %v965 = vadd.f32 %v946, %v953
    %v966 = vadd.f32 %v947, %v953
    %v967 = vadd.f32 %v948, %v953
    %v968 = vadd.f32 %v949, %v953
    %v969 = vadd.f32 %v950, %v953
    %v970 = vadd.f32 %v951, %v953
    %v971 = vmax.f32 %v955, 0.0
    %v972 = vmax.f32 %v956, 0.0
    %v973 = vmax.f32 %v957, 0.0
    %v974 = vmax.f32 %v958, 0.0
    %v975 = vmax.f32 %v959, 0.0
    %v976 = vmax.f32 %v960, 0.0
    %v977 = vmax.f32 %v961, 0.0
    %v978 = vmax.f32 %v962, 0.0
    %v979 = vmax.f32 %v963, 0.0
    %v980 = vmax.f32 %v964, 0.0
    %v981 = vmax.f32 %v965, 0.0
    %v982 = vmax.f32 %v966, 0.0
    %v983 = vmax.f32 %v967, 0.0
    %v984 = vmax.f32 %v968, 0.0
    %v985 = vmax.f32 %v969, 0.0
    %v986 = vmax.f32 %v970, 0.0
    %v987 = vpack.c.bf16 %v971, %v971
    %v988 = vpack.c.bf16 %v972, %v972
    %v989 = vpack.c.bf16 %v973, %v973
    %v990 = vpack.c.bf16 %v974, %v974
    %v991 = vpack.c.bf16 %v975, %v975
    %v992 = vpack.c.bf16 %v976, %v976
    %v993 = vpack.c.bf16 %v977, %v977
    %v994 = vpack.c.bf16 %v978, %v978
    %v995 = vpack.c.bf16 %v979, %v979
    %v996 = vpack.c.bf16 %v980, %v980
    %v997 = vpack.c.bf16 %v981, %v981
    %v998 = vpack.c.bf16 %v982, %v982
    %v999 = vpack.c.bf16 %v983, %v983
    %v1000 = vpack.c.bf16 %v984, %v984
    %v1001 = vpack.c.bf16 %v985, %v985
    %v1002 = vpack.c.bf16 %v986, %v986
    %vm1003 = vcmask 516096
    %1004 = vst.msk [vmem:[%s4] sm:$0x1] %vm1003, %v987
    %1005 = vst.msk [vmem:[%s4 + $0x1] sm:$0x1] %vm1003, %v988
    %1006 = vst.msk [vmem:[%s4 + $0x2] sm:$0x1] %vm1003, %v989
    %1007 = vst.msk [vmem:[%s4 + $0x3] sm:$0x1] %vm1003, %v990
    %1008 = vst.msk [vmem:[%s4 + $0x4] sm:$0x1] %vm1003, %v991
    %1009 = vst.msk [vmem:[%s4 + $0x5] sm:$0x1] %vm1003, %v992
    %1010 = vst.msk [vmem:[%s4 + $0x6] sm:$0x1] %vm1003, %v993
    %1011 = vst.msk [vmem:[%s4 + $0x7] sm:$0x1] %vm1003, %v994
    %1012 = vst.msk [vmem:[%s4 + $0x8] sm:$0x1] %vm1003, %v995
    %1013 = vst.msk [vmem:[%s4 + $0x9] sm:$0x1] %vm1003, %v996
    %1014 = vst.msk [vmem:[%s4 + $0xa] sm:$0x1] %vm1003, %v997
    %1015 = vst.msk [vmem:[%s4 + $0xb] sm:$0x1] %vm1003, %v998
    %1016 = vst.msk [vmem:[%s4 + $0xc] sm:$0x1] %vm1003, %v999
    %1017 = vst.msk [vmem:[%s4 + $0xd] sm:$0x1] %vm1003, %v1000
    %1018 = vst.msk [vmem:[%s4 + $0xe] sm:$0x1] %vm1003, %v1001
    %1019 = vst.msk [vmem:[%s4 + $0xf] sm:$0x1] %vm1003, %v1002
    // Predicated region
    $region22: #{generator_forward.4} parent=1 // pred_check
      _
    $region23: #{generator_forward.4} parent=1 // pred_check_branch
      %1021 = sbr.rel (0) target = $region25
    $region24: #{generator_forward.4} parent=1 // pred_region
      _
    $region25: #{generator_forward.4} parent=1 // pred_fallthru
      _
    // Predicated region
    $region26: #{generator_forward.4} parent=1 // pred_check
      _
    $region27: #{generator_forward.4} parent=1 // pred_check_branch
      %1023 = sbr.rel (0) target = $region29
    $region28: #{generator_forward.4} parent=1 // pred_region
      _
    $region29: #{generator_forward.4} parent=1 // pred_fallthru
      _
    %1024 = vsyncpa [#allocation3], 1

// kernel: generator_forward.5
$region0: #{generator_forward.5}
  #allocation0 [shape = 'u32[]', space=smem, size = 0x4, offset = 0x4, fixed_abs, tag = 'smem constant byte address 0x4 - core index']
  #allocation1 [shape = 'u32[72,128]{1,0:T(1,128)}', space=vmem, size = 0x9000, scoped, tag = 'internal scratch']
  %s0 = inlined_call_operand.vmem [shape: bf16[4,32,256], index: 0, kind: input, shape index: {}]
  %s1 = inlined_call_operand.vmem [shape: bf16[4,256,32], index: 1, kind: input, shape index: {}]
  %s2 = inlined_call_operand.vmem [shape: f32[1,1,32], index: 2, kind: input, shape index: {}]
  %s3 = inlined_call_operand.vmem [shape: f32[1,1,32], index: 3, kind: input, shape index: {}]
  %s4 = inlined_call_operand.vmem [shape: bf16[4,32,32], index: 4, kind: output, shape index: {}]
  %s5 = sld [smem:[#allocation0]]
  $region26: #{generator_forward.5} parent=0
    _
  %s7 = ssub.s32 1, %s5
  %s8 = scalar_select 0, %s7, %s5
  // Predicated region
  $region2: #{generator_forward.5} parent=0 // pred_check
    _
  $region3: #{generator_forward.5} parent=0 // pred_check_branch
    %10 = sbr.rel (0) target = $region5
  $region4: #{generator_forward.5} parent=0 // pred_region
    _
  $region5: #{generator_forward.5} parent=0 // pred_fallthru
    _
  // Predicated region
  $region6: #{generator_forward.5} parent=0 // pred_check
    _
  $region7: #{generator_forward.5} parent=0 // pred_check_branch
    %12 = sbr.rel (0) target = $region9
  $region8: #{generator_forward.5} parent=0 // pred_region
    _
  $region9: #{generator_forward.5} parent=0 // pred_fallthru
    _
  // Predicated region
  $region10: #{generator_forward.5} parent=0 // pred_check
    _
  $region11: #{generator_forward.5} parent=0 // pred_check_branch
    %14 = sbr.rel (0) target = $region13
  $region12: #{generator_forward.5} parent=0 // pred_region
    _
  $region13: #{generator_forward.5} parent=0 // pred_fallthru
    _
  // Predicated region
  $region14: #{generator_forward.5} parent=0 // pred_check
    _
  $region15: #{generator_forward.5} parent=0 // pred_check_branch
    %16 = sbr.rel (0) target = $region17
  $region16: #{generator_forward.5} parent=0 // pred_region
    _
  $region17: #{generator_forward.5} parent=0 // pred_fallthru
    _
  %v17 = vld [vmem:[%s0] sm:$0xff]
  %v18 = vld [vmem:[%s0 + $0x8] sm:$0xff]
  %v19 = vld [vmem:[%s0 + $0x10] sm:$0xff]
  %v20 = vld [vmem:[%s0 + $0x18] sm:$0xff]
  %v21 = vld [vmem:[%s0 + $0x20] sm:$0xff]
  %v22 = vld [vmem:[%s0 + $0x28] sm:$0xff]
  %v23 = vld [vmem:[%s0 + $0x30] sm:$0xff]
  %v24 = vld [vmem:[%s0 + $0x38] sm:$0xff]
  %v25 = vld [vmem:[%s0 + $0x40] sm:$0xff]
  %v26 = vld [vmem:[%s0 + $0x48] sm:$0xff]
  %v27 = vld [vmem:[%s0 + $0x50] sm:$0xff]
  %v28 = vld [vmem:[%s0 + $0x58] sm:$0xff]
  %v29 = vld [vmem:[%s0 + $0x60] sm:$0xff]
  %v30 = vld [vmem:[%s0 + $0x68] sm:$0xff]
  %v31 = vld [vmem:[%s0 + $0x70] sm:$0xff]
  %v32 = vld [vmem:[%s0 + $0x78] sm:$0xff]
  %v33 = vld [vmem:[%s1] sm:$0xf]
  %v34 = vld [vmem:[%s1 + $0x4] sm:$0xf]
  %v35 = vld [vmem:[%s1 + $0x8] sm:$0xf]
  %v36 = vld [vmem:[%s1 + $0xc] sm:$0xf]
  %v37 = vld [vmem:[%s1 + $0x10] sm:$0xf]
  %v38 = vld [vmem:[%s1 + $0x14] sm:$0xf]
  %v39 = vld [vmem:[%s1 + $0x18] sm:$0xf]
  %v40 = vld [vmem:[%s1 + $0x1c] sm:$0xf]
  %v41 = vld [vmem:[%s1 + $0x20] sm:$0xf]
  %v42 = vld [vmem:[%s1 + $0x24] sm:$0xf]
  %v43 = vld [vmem:[%s1 + $0x28] sm:$0xf]
  %v44 = vld [vmem:[%s1 + $0x2c] sm:$0xf]
  %v45 = vld [vmem:[%s1 + $0x30] sm:$0xf]
  %v46 = vld [vmem:[%s1 + $0x34] sm:$0xf]
  %v47 = vld [vmem:[%s1 + $0x38] sm:$0xf]
  %v48 = vld [vmem:[%s1 + $0x3c] sm:$0xf]
  %v49 = vld [vmem:[%s1 + $0x40] sm:$0xf]
  %v50 = vld [vmem:[%s1 + $0x44] sm:$0xf]
  %v51 = vld [vmem:[%s1 + $0x48] sm:$0xf]
  %v52 = vld [vmem:[%s1 + $0x4c] sm:$0xf]
  %v53 = vld [vmem:[%s1 + $0x50] sm:$0xf]
  %v54 = vld [vmem:[%s1 + $0x54] sm:$0xf]
  %v55 = vld [vmem:[%s1 + $0x58] sm:$0xf]
  %v56 = vld [vmem:[%s1 + $0x5c] sm:$0xf]
  %v57 = vld [vmem:[%s1 + $0x60] sm:$0xf]
  %v58 = vld [vmem:[%s1 + $0x64] sm:$0xf]
  %v59 = vld [vmem:[%s1 + $0x68] sm:$0xf]
  %v60 = vld [vmem:[%s1 + $0x6c] sm:$0xf]
  %v61 = vld [vmem:[%s1 + $0x70] sm:$0xf]
  %v62 = vld [vmem:[%s1 + $0x74] sm:$0xf]
  %v63 = vld [vmem:[%s1 + $0x78] sm:$0xf]
  %v64 = vld [vmem:[%s1 + $0x7c] sm:$0xf]
  %v65 = vld [vmem:[%s1 + $0x80] sm:$0xf]
  %v66 = vld [vmem:[%s1 + $0x84] sm:$0xf]
  %v67 = vld [vmem:[%s1 + $0x88] sm:$0xf]
  %v68 = vld [vmem:[%s1 + $0x8c] sm:$0xf]
  %v69 = vld [vmem:[%s1 + $0x90] sm:$0xf]
  %v70 = vld [vmem:[%s1 + $0x94] sm:$0xf]
  %v71 = vld [vmem:[%s1 + $0x98] sm:$0xf]
  %v72 = vld [vmem:[%s1 + $0x9c] sm:$0xf]
  %v73 = vld [vmem:[%s1 + $0xa0] sm:$0xf]
  %v74 = vld [vmem:[%s1 + $0xa4] sm:$0xf]
  %v75 = vld [vmem:[%s1 + $0xa8] sm:$0xf]
  %v76 = vld [vmem:[%s1 + $0xac] sm:$0xf]
  %v77 = vld [vmem:[%s1 + $0xb0] sm:$0xf]
  %v78 = vld [vmem:[%s1 + $0xb4] sm:$0xf]
  %v79 = vld [vmem:[%s1 + $0xb8] sm:$0xf]
  %v80 = vld [vmem:[%s1 + $0xbc] sm:$0xf]
  %v81 = vld [vmem:[%s1 + $0xc0] sm:$0xf]
  %v82 = vld [vmem:[%s1 + $0xc4] sm:$0xf]
  %v83 = vld [vmem:[%s1 + $0xc8] sm:$0xf]
  %v84 = vld [vmem:[%s1 + $0xcc] sm:$0xf]
  %v85 = vld [vmem:[%s1 + $0xd0] sm:$0xf]
  %v86 = vld [vmem:[%s1 + $0xd4] sm:$0xf]
  %v87 = vld [vmem:[%s1 + $0xd8] sm:$0xf]
  %v88 = vld [vmem:[%s1 + $0xdc] sm:$0xf]
  %v89 = vld [vmem:[%s1 + $0xe0] sm:$0xf]
  %v90 = vld [vmem:[%s1 + $0xe4] sm:$0xf]
  %v91 = vld [vmem:[%s1 + $0xe8] sm:$0xf]
  %v92 = vld [vmem:[%s1 + $0xec] sm:$0xf]
  %v93 = vld [vmem:[%s1 + $0xf0] sm:$0xf]
  %v94 = vld [vmem:[%s1 + $0xf4] sm:$0xf]
  %v95 = vld [vmem:[%s1 + $0xf8] sm:$0xf]
  %v96 = vld [vmem:[%s1 + $0xfc] sm:$0xf]
  %v97 = vld [vmem:[%s1 + $0x100] sm:$0xf]
  %v98 = vld [vmem:[%s1 + $0x104] sm:$0xf]
  %v99 = vld [vmem:[%s1 + $0x108] sm:$0xf]
  %v100 = vld [vmem:[%s1 + $0x10c] sm:$0xf]
  %v101 = vld [vmem:[%s1 + $0x110] sm:$0xf]
  %v102 = vld [vmem:[%s1 + $0x114] sm:$0xf]
  %v103 = vld [vmem:[%s1 + $0x118] sm:$0xf]
  %v104 = vld [vmem:[%s1 + $0x11c] sm:$0xf]
  %v105 = vld [vmem:[%s1 + $0x120] sm:$0xf]
  %v106 = vld [vmem:[%s1 + $0x124] sm:$0xf]
  %v107 = vld [vmem:[%s1 + $0x128] sm:$0xf]
  %v108 = vld [vmem:[%s1 + $0x12c] sm:$0xf]
  %v109 = vld [vmem:[%s1 + $0x130] sm:$0xf]
  %v110 = vld [vmem:[%s1 + $0x134] sm:$0xf]
  %v111 = vld [vmem:[%s1 + $0x138] sm:$0xf]
  %v112 = vld [vmem:[%s1 + $0x13c] sm:$0xf]
  %v113 = vld [vmem:[%s1 + $0x140] sm:$0xf]
  %v114 = vld [vmem:[%s1 + $0x144] sm:$0xf]
  %v115 = vld [vmem:[%s1 + $0x148] sm:$0xf]
  %v116 = vld [vmem:[%s1 + $0x14c] sm:$0xf]
  %v117 = vld [vmem:[%s1 + $0x150] sm:$0xf]
  %v118 = vld [vmem:[%s1 + $0x154] sm:$0xf]
  %v119 = vld [vmem:[%s1 + $0x158] sm:$0xf]
  %v120 = vld [vmem:[%s1 + $0x15c] sm:$0xf]
  %v121 = vld [vmem:[%s1 + $0x160] sm:$0xf]
  %v122 = vld [vmem:[%s1 + $0x164] sm:$0xf]
  %v123 = vld [vmem:[%s1 + $0x168] sm:$0xf]
  %v124 = vld [vmem:[%s1 + $0x16c] sm:$0xf]
  %v125 = vld [vmem:[%s1 + $0x170] sm:$0xf]
  %v126 = vld [vmem:[%s1 + $0x174] sm:$0xf]
  %v127 = vld [vmem:[%s1 + $0x178] sm:$0xf]
  %v128 = vld [vmem:[%s1 + $0x17c] sm:$0xf]
  %v129 = vld [vmem:[%s1 + $0x180] sm:$0xf]
  %v130 = vld [vmem:[%s1 + $0x184] sm:$0xf]
  %v131 = vld [vmem:[%s1 + $0x188] sm:$0xf]
  %v132 = vld [vmem:[%s1 + $0x18c] sm:$0xf]
  %v133 = vld [vmem:[%s1 + $0x190] sm:$0xf]
  %v134 = vld [vmem:[%s1 + $0x194] sm:$0xf]
  %v135 = vld [vmem:[%s1 + $0x198] sm:$0xf]
  %v136 = vld [vmem:[%s1 + $0x19c] sm:$0xf]
  %v137 = vld [vmem:[%s1 + $0x1a0] sm:$0xf]
  %v138 = vld [vmem:[%s1 + $0x1a4] sm:$0xf]
  %v139 = vld [vmem:[%s1 + $0x1a8] sm:$0xf]
  %v140 = vld [vmem:[%s1 + $0x1ac] sm:$0xf]
  %v141 = vld [vmem:[%s1 + $0x1b0] sm:$0xf]
  %v142 = vld [vmem:[%s1 + $0x1b4] sm:$0xf]
  %v143 = vld [vmem:[%s1 + $0x1b8] sm:$0xf]
  %v144 = vld [vmem:[%s1 + $0x1bc] sm:$0xf]
  %v145 = vld [vmem:[%s1 + $0x1c0] sm:$0xf]
  %v146 = vld [vmem:[%s1 + $0x1c4] sm:$0xf]
  %v147 = vld [vmem:[%s1 + $0x1c8] sm:$0xf]
  %v148 = vld [vmem:[%s1 + $0x1cc] sm:$0xf]
  %v149 = vld [vmem:[%s1 + $0x1d0] sm:$0xf]
  %v150 = vld [vmem:[%s1 + $0x1d4] sm:$0xf]
  %v151 = vld [vmem:[%s1 + $0x1d8] sm:$0xf]
  %v152 = vld [vmem:[%s1 + $0x1dc] sm:$0xf]
  %v153 = vld [vmem:[%s1 + $0x1e0] sm:$0xf]
  %v154 = vld [vmem:[%s1 + $0x1e4] sm:$0xf]
  %v155 = vld [vmem:[%s1 + $0x1e8] sm:$0xf]
  %v156 = vld [vmem:[%s1 + $0x1ec] sm:$0xf]
  %v157 = vld [vmem:[%s1 + $0x1f0] sm:$0xf]
  %v158 = vld [vmem:[%s1 + $0x1f4] sm:$0xf]
  %v159 = vld [vmem:[%s1 + $0x1f8] sm:$0xf]
  %v160 = vld [vmem:[%s1 + $0x1fc] sm:$0xf]
  %v165 = vunpack.c.l.b16 %v17
  %v166 = vunpack.c.h.b16 %v17
  %v167 = vunpack.c.l.b16 %v18
  %v168 = vunpack.c.h.b16 %v18
  %v169 = vunpack.c.l.b16 %v19
  %v170 = vunpack.c.h.b16 %v19
  %v171 = vunpack.c.l.b16 %v20
  %v172 = vunpack.c.h.b16 %v20
  %v173 = vpack.c.b16 %v167, %v165
  %v174 = vpack.c.b16 %v168, %v166
  %v175 = vpack.c.b16 %v171, %v169
  %v176 = vpack.c.b16 %v172, %v170
  %v213 = vunpack.c.l.b16 %v33
  %v214 = vunpack.c.l.b16 %v34
  %v215 = vunpack.c.l.b16 %v35
  %v216 = vunpack.c.l.b16 %v36
  %v217 = vunpack.c.l.b16 %v37
  %v218 = vunpack.c.l.b16 %v38
  %v219 = vunpack.c.l.b16 %v39
  %v220 = vunpack.c.l.b16 %v40
  %v221 = vunpack.c.l.b16 %v41
  %v222 = vunpack.c.l.b16 %v42
  %v223 = vunpack.c.l.b16 %v43
  %v224 = vunpack.c.l.b16 %v44
  %v225 = vunpack.c.l.b16 %v45
  %v226 = vunpack.c.l.b16 %v46
  %v227 = vunpack.c.l.b16 %v47
  %v228 = vunpack.c.l.b16 %v48
  %v229 = vunpack.c.l.b16 %v49
  %v230 = vunpack.c.l.b16 %v50
  %v231 = vunpack.c.l.b16 %v51
  %v232 = vunpack.c.l.b16 %v52
  %v233 = vunpack.c.l.b16 %v53
  %v234 = vunpack.c.l.b16 %v54
  %v235 = vunpack.c.l.b16 %v55
  %v236 = vunpack.c.l.b16 %v56
  %v237 = vunpack.c.l.b16 %v57
  %v238 = vunpack.c.l.b16 %v58
  %v239 = vunpack.c.l.b16 %v59
  %v240 = vunpack.c.l.b16 %v60
  %v241 = vunpack.c.l.b16 %v61
  %v242 = vunpack.c.l.b16 %v62
  %v243 = vunpack.c.l.b16 %v63
  %v244 = vunpack.c.l.b16 %v64
  %v245 = vpack.c.b16 %v214, %v213
  %v246 = vpack.c.b16 %v216, %v215
  %v247 = vpack.c.b16 %v218, %v217
  %v248 = vpack.c.b16 %v220, %v219
  %v249 = vpack.c.b16 %v222, %v221
  %v250 = vpack.c.b16 %v224, %v223
  %v251 = vpack.c.b16 %v226, %v225
  %v252 = vpack.c.b16 %v228, %v227
  %v253 = vpack.c.b16 %v230, %v229
  %v254 = vpack.c.b16 %v232, %v231
  %v255 = vpack.c.b16 %v234, %v233
  %v256 = vpack.c.b16 %v236, %v235
  %v257 = vpack.c.b16 %v238, %v237
  %v258 = vpack.c.b16 %v240, %v239
  %v259 = vpack.c.b16 %v242, %v241
  %v260 = vpack.c.b16 %v244, %v243
  %277 = vmatpush.bf16.msra.mxu0 %v252
  %278 = vmatpush.bf16.msra.mxu0 %v251
  %279 = vmatpush.bf16.msra.mxu0 %v250
  %280 = vmatpush.bf16.msra.mxu0 %v249
  %281 = vmatpush.bf16.msra.mxu0 %v248
  %282 = vmatpush.bf16.msra.mxu0 %v247
  %283 = vmatpush.bf16.msra.mxu0 %v246
  %284 = vmatpush.bf16.msra.mxu0 %v245
  %285 = vmatmul.bf16.gmra.mxu0 %v173
  %v286 = vpop.f32.mrf.mxu0
  %v287 = vadd.f32 0.0, %v286
  %v288 = vpop.f32.mrf.mxu0
  %v289 = vadd.f32 0.0, %v288
  %290 = vmatmul.bf16.gmra.mxu0 %v175
  %v291 = vpop.f32.mrf.mxu0
  %v292 = vadd.f32 0.0, %v291
  %v293 = vpop.f32.mrf.mxu0
  %v294 = vadd.f32 0.0, %v293
  %295 = vdwg.mxu0
  %296 = vmatpush.bf16.msra.mxu0 %v260
  %297 = vmatpush.bf16.msra.mxu0 %v259
  %298 = vmatpush.bf16.msra.mxu0 %v258
  %299 = vmatpush.bf16.msra.mxu0 %v257
  %300 = vmatpush.bf16.msra.mxu0 %v256
  %301 = vmatpush.bf16.msra.mxu0 %v255
  %302 = vmatpush.bf16.msra.mxu0 %v254
  %303 = vmatpush.bf16.msra.mxu0 %v253
  %304 = vmatmul.bf16.gmra.mxu0 %v174
  %v305 = vpop.f32.mrf.mxu0
  %v306 = vadd.f32 %v287, %v305
  %v307 = vpop.f32.mrf.mxu0
  %v308 = vadd.f32 %v289, %v307
  %309 = vmatmul.bf16.gmra.mxu0 %v176
  %v310 = vpop.f32.mrf.mxu0
  %v311 = vadd.f32 %v292, %v310
  %v312 = vpop.f32.mrf.mxu0
  %v313 = vadd.f32 %v294, %v312
  %314 = vdwg.mxu0
  %v319 = vunpack.c.l.b16 %v21
  %v320 = vunpack.c.h.b16 %v21
  %v321 = vunpack.c.l.b16 %v22
  %v322 = vunpack.c.h.b16 %v22
  %v323 = vunpack.c.l.b16 %v23
  %v324 = vunpack.c.h.b16 %v23
  %v325 = vunpack.c.l.b16 %v24
  %v326 = vunpack.c.h.b16 %v24
  %v327 = vpack.c.b16 %v321, %v319
  %v328 = vpack.c.b16 %v322, %v320
  %v329 = vpack.c.b16 %v325, %v323
  %v330 = vpack.c.b16 %v326, %v324
  %v367 = vunpack.c.l.b16 %v65
  %v368 = vunpack.c.l.b16 %v66
  %v369 = vunpack.c.l.b16 %v67
  %v370 = vunpack.c.l.b16 %v68
  %v371 = vunpack.c.l.b16 %v69
  %v372 = vunpack.c.l.b16 %v70
  %v373 = vunpack.c.l.b16 %v71
  %v374 = vunpack.c.l.b16 %v72
  %v375 = vunpack.c.l.b16 %v73
  %v376 = vunpack.c.l.b16 %v74
  %v377 = vunpack.c.l.b16 %v75
  %v378 = vunpack.c.l.b16 %v76
  %v379 = vunpack.c.l.b16 %v77
  %v380 = vunpack.c.l.b16 %v78
  %v381 = vunpack.c.l.b16 %v79
  %v382 = vunpack.c.l.b16 %v80
  %v383 = vunpack.c.l.b16 %v81
  %v384 = vunpack.c.l.b16 %v82
  %v385 = vunpack.c.l.b16 %v83
  %v386 = vunpack.c.l.b16 %v84
  %v387 = vunpack.c.l.b16 %v85
  %v388 = vunpack.c.l.b16 %v86
  %v389 = vunpack.c.l.b16 %v87
  %v390 = vunpack.c.l.b16 %v88
  %v391 = vunpack.c.l.b16 %v89
  %v392 = vunpack.c.l.b16 %v90
  %v393 = vunpack.c.l.b16 %v91
  %v394 = vunpack.c.l.b16 %v92
  %v395 = vunpack.c.l.b16 %v93
  %v396 = vunpack.c.l.b16 %v94
  %v397 = vunpack.c.l.b16 %v95
  %v398 = vunpack.c.l.b16 %v96
  %v399 = vpack.c.b16 %v368, %v367
  %v400 = vpack.c.b16 %v370, %v369
  %v401 = vpack.c.b16 %v372, %v371
  %v402 = vpack.c.b16 %v374, %v373
  %v403 = vpack.c.b16 %v376, %v375
  %v404 = vpack.c.b16 %v378, %v377
  %v405 = vpack.c.b16 %v380, %v379
  %v406 = vpack.c.b16 %v382, %v381
  %v407 = vpack.c.b16 %v384, %v383
  %v408 = vpack.c.b16 %v386, %v385
  %v409 = vpack.c.b16 %v388, %v387
  %v410 = vpack.c.b16 %v390, %v389
  %v411 = vpack.c.b16 %v392, %v391
  %v412 = vpack.c.b16 %v394, %v393
  %v413 = vpack.c.b16 %v396, %v395
  %v414 = vpack.c.b16 %v398, %v397
  %431 = vmatpush.bf16.msra.mxu0 %v406
  %432 = vmatpush.bf16.msra.mxu0 %v405
  %433 = vmatpush.bf16.msra.mxu0 %v404
  %434 = vmatpush.bf16.msra.mxu0 %v403
  %435 = vmatpush.bf16.msra.mxu0 %v402
  %436 = vmatpush.bf16.msra.mxu0 %v401
  %437 = vmatpush.bf16.msra.mxu0 %v400
  %438 = vmatpush.bf16.msra.mxu0 %v399
  %439 = vmatmul.bf16.gmra.mxu0 %v327
  %v440 = vpop.f32.mrf.mxu0
  %v441 = vadd.f32 0.0, %v440
  %v442 = vpop.f32.mrf.mxu0
  %v443 = vadd.f32 0.0, %v442
  %444 = vmatmul.bf16.gmra.mxu0 %v329
  %v445 = vpop.f32.mrf.mxu0
  %v446 = vadd.f32 0.0, %v445
  %v447 = vpop.f32.mrf.mxu0
  %v448 = vadd.f32 0.0, %v447
  %449 = vdwg.mxu0
  %450 = vmatpush.bf16.msra.mxu0 %v414
  %451 = vmatpush.bf16.msra.mxu0 %v413
  %452 = vmatpush.bf16.msra.mxu0 %v412
  %453 = vmatpush.bf16.msra.mxu0 %v411
  %454 = vmatpush.bf16.msra.mxu0 %v410
  %455 = vmatpush.bf16.msra.mxu0 %v409
  %456 = vmatpush.bf16.msra.mxu0 %v408
  %457 = vmatpush.bf16.msra.mxu0 %v407
  %458 = vmatmul.bf16.gmra.mxu0 %v328
  %v459 = vpop.f32.mrf.mxu0
  %v460 = vadd.f32 %v441, %v459
  %v461 = vpop.f32.mrf.mxu0
  %v462 = vadd.f32 %v443, %v461
  %463 = vmatmul.bf16.gmra.mxu0 %v330
  %v464 = vpop.f32.mrf.mxu0
  %v465 = vadd.f32 %v446, %v464
  %v466 = vpop.f32.mrf.mxu0
  %v467 = vadd.f32 %v448, %v466
  %468 = vdwg.mxu0
  %v473 = vunpack.c.l.b16 %v25
  %v474 = vunpack.c.h.b16 %v25
  %v475 = vunpack.c.l.b16 %v26
  %v476 = vunpack.c.h.b16 %v26
  %v477 = vunpack.c.l.b16 %v27
  %v478 = vunpack.c.h.b16 %v27
  %v479 = vunpack.c.l.b16 %v28
  %v480 = vunpack.c.h.b16 %v28
  %v481 = vpack.c.b16 %v475, %v473
  %v482 = vpack.c.b16 %v476, %v474
  %v483 = vpack.c.b16 %v479, %v477
  %v484 = vpack.c.b16 %v480, %v478
  %v521 = vunpack.c.l.b16 %v97
  %v522 = vunpack.c.l.b16 %v98
  %v523 = vunpack.c.l.b16 %v99
  %v524 = vunpack.c.l.b16 %v100
  %v525 = vunpack.c.l.b16 %v101
  %v526 = vunpack.c.l.b16 %v102
  %v527 = vunpack.c.l.b16 %v103
  %v528 = vunpack.c.l.b16 %v104
  %v529 = vunpack.c.l.b16 %v105
  %v530 = vunpack.c.l.b16 %v106
  %v531 = vunpack.c.l.b16 %v107
  %v532 = vunpack.c.l.b16 %v108
  %v533 = vunpack.c.l.b16 %v109
  %v534 = vunpack.c.l.b16 %v110
  %v535 = vunpack.c.l.b16 %v111
  %v536 = vunpack.c.l.b16 %v112
  %v537 = vunpack.c.l.b16 %v113
  %v538 = vunpack.c.l.b16 %v114
  %v539 = vunpack.c.l.b16 %v115
  %v540 = vunpack.c.l.b16 %v116
  %v541 = vunpack.c.l.b16 %v117
  %v542 = vunpack.c.l.b16 %v118
  %v543 = vunpack.c.l.b16 %v119
  %v544 = vunpack.c.l.b16 %v120
  %v545 = vunpack.c.l.b16 %v121
  %v546 = vunpack.c.l.b16 %v122
  %v547 = vunpack.c.l.b16 %v123
  %v548 = vunpack.c.l.b16 %v124
  %v549 = vunpack.c.l.b16 %v125
  %v550 = vunpack.c.l.b16 %v126
  %v551 = vunpack.c.l.b16 %v127
  %v552 = vunpack.c.l.b16 %v128
  %v553 = vpack.c.b16 %v522, %v521
  %v554 = vpack.c.b16 %v524, %v523
  %v555 = vpack.c.b16 %v526, %v525
  %v556 = vpack.c.b16 %v528, %v527
  %v557 = vpack.c.b16 %v530, %v529
  %v558 = vpack.c.b16 %v532, %v531
  %v559 = vpack.c.b16 %v534, %v533
  %v560 = vpack.c.b16 %v536, %v535
  %v561 = vpack.c.b16 %v538, %v537
  %v562 = vpack.c.b16 %v540, %v539
  %v563 = vpack.c.b16 %v542, %v541
  %v564 = vpack.c.b16 %v544, %v543
  %v565 = vpack.c.b16 %v546, %v545
  %v566 = vpack.c.b16 %v548, %v547
  %v567 = vpack.c.b16 %v550, %v549
  %v568 = vpack.c.b16 %v552, %v551
  %585 = vmatpush.bf16.msra.mxu0 %v560
  %586 = vmatpush.bf16.msra.mxu0 %v559
  %587 = vmatpush.bf16.msra.mxu0 %v558
  %588 = vmatpush.bf16.msra.mxu0 %v557
  %589 = vmatpush.bf16.msra.mxu0 %v556
  %590 = vmatpush.bf16.msra.mxu0 %v555
  %591 = vmatpush.bf16.msra.mxu0 %v554
  %592 = vmatpush.bf16.msra.mxu0 %v553
  %593 = vmatmul.bf16.gmra.mxu0 %v481
  %v594 = vpop.f32.mrf.mxu0
  %v595 = vadd.f32 0.0, %v594
  %v596 = vpop.f32.mrf.mxu0
  %v597 = vadd.f32 0.0, %v596
  %598 = vmatmul.bf16.gmra.mxu0 %v483
  %v599 = vpop.f32.mrf.mxu0
  %v600 = vadd.f32 0.0, %v599
  %v601 = vpop.f32.mrf.mxu0
  %v602 = vadd.f32 0.0, %v601
  %603 = vdwg.mxu0
  %604 = vmatpush.bf16.msra.mxu0 %v568
  %605 = vmatpush.bf16.msra.mxu0 %v567
  %606 = vmatpush.bf16.msra.mxu0 %v566
  %607 = vmatpush.bf16.msra.mxu0 %v565
  %608 = vmatpush.bf16.msra.mxu0 %v564
  %609 = vmatpush.bf16.msra.mxu0 %v563
  %610 = vmatpush.bf16.msra.mxu0 %v562
  %611 = vmatpush.bf16.msra.mxu0 %v561
  %612 = vmatmul.bf16.gmra.mxu0 %v482
  %v613 = vpop.f32.mrf.mxu0
  %v614 = vadd.f32 %v595, %v613
  %v615 = vpop.f32.mrf.mxu0
  %v616 = vadd.f32 %v597, %v615
  %617 = vmatmul.bf16.gmra.mxu0 %v484
  %v618 = vpop.f32.mrf.mxu0
  %v619 = vadd.f32 %v600, %v618
  %v620 = vpop.f32.mrf.mxu0
  %v621 = vadd.f32 %v602, %v620
  %622 = vdwg.mxu0
  %v627 = vunpack.c.l.b16 %v29
  %v628 = vunpack.c.h.b16 %v29
  %v629 = vunpack.c.l.b16 %v30
  %v630 = vunpack.c.h.b16 %v30
  %v631 = vunpack.c.l.b16 %v31
  %v632 = vunpack.c.h.b16 %v31
  %v633 = vunpack.c.l.b16 %v32
  %v634 = vunpack.c.h.b16 %v32
  %v635 = vpack.c.b16 %v629, %v627
  %v636 = vpack.c.b16 %v630, %v628
  %v637 = vpack.c.b16 %v633, %v631
  %v638 = vpack.c.b16 %v634, %v632
  %v675 = vunpack.c.l.b16 %v129
  %v676 = vunpack.c.l.b16 %v130
  %v677 = vunpack.c.l.b16 %v131
  %v678 = vunpack.c.l.b16 %v132
  %v679 = vunpack.c.l.b16 %v133
  %v680 = vunpack.c.l.b16 %v134
  %v681 = vunpack.c.l.b16 %v135
  %v682 = vunpack.c.l.b16 %v136
  %v683 = vunpack.c.l.b16 %v137
  %v684 = vunpack.c.l.b16 %v138
  %v685 = vunpack.c.l.b16 %v139
  %v686 = vunpack.c.l.b16 %v140
  %v687 = vunpack.c.l.b16 %v141
  %v688 = vunpack.c.l.b16 %v142
  %v689 = vunpack.c.l.b16 %v143
  %v690 = vunpack.c.l.b16 %v144
  %v691 = vunpack.c.l.b16 %v145
  %v692 = vunpack.c.l.b16 %v146
  %v693 = vunpack.c.l.b16 %v147
  %v694 = vunpack.c.l.b16 %v148
  %v695 = vunpack.c.l.b16 %v149
  %v696 = vunpack.c.l.b16 %v150
  %v697 = vunpack.c.l.b16 %v151
  %v698 = vunpack.c.l.b16 %v152
  %v699 = vunpack.c.l.b16 %v153
  %v700 = vunpack.c.l.b16 %v154
  %v701 = vunpack.c.l.b16 %v155
  %v702 = vunpack.c.l.b16 %v156
  %v703 = vunpack.c.l.b16 %v157
  %v704 = vunpack.c.l.b16 %v158
  %v705 = vunpack.c.l.b16 %v159
  %v706 = vunpack.c.l.b16 %v160
  %v707 = vpack.c.b16 %v676, %v675
  %v708 = vpack.c.b16 %v678, %v677
  %v709 = vpack.c.b16 %v680, %v679
  %v710 = vpack.c.b16 %v682, %v681
  %v711 = vpack.c.b16 %v684, %v683
  %v712 = vpack.c.b16 %v686, %v685
  %v713 = vpack.c.b16 %v688, %v687
  %v714 = vpack.c.b16 %v690, %v689
  %v715 = vpack.c.b16 %v692, %v691
  %v716 = vpack.c.b16 %v694, %v693
  %v717 = vpack.c.b16 %v696, %v695
  %v718 = vpack.c.b16 %v698, %v697
  %v719 = vpack.c.b16 %v700, %v699
  %v720 = vpack.c.b16 %v702, %v701
  %v721 = vpack.c.b16 %v704, %v703
  %v722 = vpack.c.b16 %v706, %v705
  %739 = vmatpush.bf16.msra.mxu0 %v714
  %740 = vmatpush.bf16.msra.mxu0 %v713
  %741 = vmatpush.bf16.msra.mxu0 %v712
  %742 = vmatpush.bf16.msra.mxu0 %v711
  %743 = vmatpush.bf16.msra.mxu0 %v710
  %744 = vmatpush.bf16.msra.mxu0 %v709
  %745 = vmatpush.bf16.msra.mxu0 %v708
  %746 = vmatpush.bf16.msra.mxu0 %v707
  %747 = vmatmul.bf16.gmra.mxu0 %v635
  %v748 = vpop.f32.mrf.mxu0
  %v749 = vadd.f32 0.0, %v748
  %v750 = vpop.f32.mrf.mxu0
  %v751 = vadd.f32 0.0, %v750
  %752 = vmatmul.bf16.gmra.mxu0 %v637
  %v753 = vpop.f32.mrf.mxu0
  %v754 = vadd.f32 0.0, %v753
  %v755 = vpop.f32.mrf.mxu0
  %v756 = vadd.f32 0.0, %v755
  %757 = vdwg.mxu0
  %758 = vmatpush.bf16.msra.mxu0 %v722
  %759 = vmatpush.bf16.msra.mxu0 %v721
  %760 = vmatpush.bf16.msra.mxu0 %v720
  %761 = vmatpush.bf16.msra.mxu0 %v719
  %762 = vmatpush.bf16.msra.mxu0 %v718
  %763 = vmatpush.bf16.msra.mxu0 %v717
  %764 = vmatpush.bf16.msra.mxu0 %v716
  %765 = vmatpush.bf16.msra.mxu0 %v715
  %766 = vmatmul.bf16.gmra.mxu0 %v636
  %v767 = vpop.f32.mrf.mxu0
  %v768 = vadd.f32 %v749, %v767
  %v769 = vpop.f32.mrf.mxu0
  %v770 = vadd.f32 %v751, %v769
  %771 = vmatmul.bf16.gmra.mxu0 %v638
  %v772 = vpop.f32.mrf.mxu0
  %v773 = vadd.f32 %v754, %v772
  %v774 = vpop.f32.mrf.mxu0
  %v775 = vadd.f32 %v756, %v774
  %776 = vdwg.mxu0
  %vm777 = vcmask 261120
  %v778 = vsel %vm777, %v306, 0.0
  %v779 = vsel %vm777, %v460, 0.0
  %v780 = vadd.f32 %v778, %v779
  %v781 = vsel %vm777, %v614, 0.0
  %v782 = vadd.f32 %v780, %v781
  %v783 = vsel %vm777, %v768, 0.0
  %v784 = vadd.f32 %v782, %v783
  %v785 = vsel %vm777, %v308, 0.0
  %v786 = vsel %vm777, %v462, 0.0
  %v787 = vadd.f32 %v785, %v786
  %v788 = vsel %vm777, %v616, 0.0
  %v789 = vadd.f32 %v787, %v788
  %v790 = vsel %vm777, %v770, 0.0
  %v791 = vadd.f32 %v789, %v790
  %v792 = vsel %vm777, %v311, 0.0
  %v793 = vsel %vm777, %v465, 0.0
  %v794 = vadd.f32 %v792, %v793
  %v795 = vsel %vm777, %v619, 0.0
  %v796 = vadd.f32 %v794, %v795
  %v797 = vsel %vm777, %v773, 0.0
  %v798 = vadd.f32 %v796, %v797
  %v799 = vsel %vm777, %v313, 0.0
  %v800 = vsel %vm777, %v467, 0.0
  %v801 = vadd.f32 %v799, %v800
  %v802 = vsel %vm777, %v621, 0.0
  %v803 = vadd.f32 %v801, %v802
  %v804 = vsel %vm777, %v775, 0.0
  %v805 = vadd.f32 %v803, %v804
  %v806 = vsel %vm777, %v784, 0.0
  %v807 = vsel %vm777, %v791, 0.0
  %v808 = vadd.f32 %v806, %v807
  %v809 = vsel %vm777, %v798, 0.0
  %v810 = vadd.f32 %v808, %v809
  %v811 = vsel %vm777, %v805, 0.0
  %v812 = vadd.f32 %v810, %v811
  %v813 = vrot.slane %v812, 4
  %v814 = vadd.f32 %v812, %v813
  %v815 = vrot.slane %v814, 2
  %v816 = vadd.f32 %v814, %v815
  %v817 = vrot.slane %v816, 1
  %v818 = vadd.f32 %v816, %v817
  %v819 = vmul.f32 %v306, %v306
  %v820 = vmul.f32 %v308, %v308
  %v821 = vmul.f32 %v311, %v311
  %v822 = vmul.f32 %v313, %v313
  %v823 = vmul.f32 %v460, %v460
  %v824 = vmul.f32 %v462, %v462
  %v825 = vmul.f32 %v465, %v465
  %v826 = vmul.f32 %v467, %v467
  %v827 = vmul.f32 %v614, %v614
  %v828 = vmul.f32 %v616, %v616
  %v829 = vmul.f32 %v619, %v619
  %v830 = vmul.f32 %v621, %v621
  %v831 = vmul.f32 %v768, %v768
  %v832 = vmul.f32 %v770, %v770
  %v833 = vmul.f32 %v773, %v773
  %v834 = vmul.f32 %v775, %v775
  %v835 = vsel %vm777, %v819, 0.0
  %v836 = vsel %vm777, %v823, 0.0
  %v837 = vadd.f32 %v835, %v836
  %v838 = vsel %vm777, %v827, 0.0
  %v839 = vadd.f32 %v837, %v838
  %v840 = vsel %vm777, %v831, 0.0
  %v841 = vadd.f32 %v839, %v840
  %v842 = vsel %vm777, %v820, 0.0
  %v843 = vsel %vm777, %v824, 0.0
  %v844 = vadd.f32 %v842, %v843
  %v845 = vsel %vm777, %v828, 0.0
  %v846 = vadd.f32 %v844, %v845
  %v847 = vsel %vm777, %v832, 0.0
  %v848 = vadd.f32 %v846, %v847
  %v849 = vsel %vm777, %v821, 0.0
  %v850 = vsel %vm777, %v825, 0.0
  %v851 = vadd.f32 %v849, %v850
  %v852 = vsel %vm777, %v829, 0.0
  %v853 = vadd.f32 %v851, %v852
  %v854 = vsel %vm777, %v833, 0.0
  %v855 = vadd.f32 %v853, %v854
  %v856 = vsel %vm777, %v822, 0.0
  %v857 = vsel %vm777, %v826, 0.0
  %v858 = vadd.f32 %v856, %v857
  %v859 = vsel %vm777, %v830, 0.0
  %v860 = vadd.f32 %v858, %v859
  %v861 = vsel %vm777, %v834, 0.0
  %v862 = vadd.f32 %v860, %v861
  %v863 = vsel %vm777, %v841, 0.0
  %v864 = vsel %vm777, %v848, 0.0
  %v865 = vadd.f32 %v863, %v864
  %v866 = vsel %vm777, %v855, 0.0
  %v867 = vadd.f32 %v865, %v866
  %v868 = vsel %vm777, %v862, 0.0
  %v869 = vadd.f32 %v867, %v868
  %v870 = vrot.slane %v869, 4
  %v871 = vadd.f32 %v869, %v870
  %v872 = vrot.slane %v871, 2
  %v873 = vadd.f32 %v871, %v872
  %v874 = vrot.slane %v873, 1
  %v875 = vadd.f32 %v873, %v874
  %v876 = vmul.f32 %v818, 0.0078125
  %v877 = vmul.f32 %v875, 0.0078125
  %v878 = vmul.f32 %v876, %v876
  %v879 = vsub.f32 %v877, %v878
  %v880 = vmax.f32 %v879, 0.0
  %v881 = vld [vmem:[%s2] sm:$0x1]
  %v882 = vadd.f32 %v880, 1e-05
  %v883 = vrsqrt.pop %v882
  %v884 = vmul.f32 %v883, %v882
  %v885 = vmul.f32 %v884, %v883
  %v886 = vmul.f32 0.5, %v885
  %v887 = vsub.f32 1.5, %v886
  %v888 = vmul.f32 %v883, %v887
  %vm889 = vweird.f32 %v882
  %vm890 = vweird.f32 %v883
  %vm891 = vmor %vm889, %vm890
  %v892 = vsel %vm891, %v883, %v888
  %v893 = vmul.f32 %v881, %v892
  %v894 = vld [vmem:[%s3] sm:$0x1]
  %v895 = vmul.f32 %v876, %v893
  %v896 = vsub.f32 %v894, %v895
  %v898 = vperm.slane %v893, 0
  %v900 = vmul.f32 %v306, %v898
  %v901 = vmul.f32 %v308, %v898
  %v902 = vmul.f32 %v311, %v898
  %v903 = vmul.f32 %v313, %v898
  %v904 = vmul.f32 %v460, %v898
  %v905 = vmul.f32 %v462, %v898
  %v906 = vmul.f32 %v465, %v898
  %v907 = vmul.f32 %v467, %v898
  %v908 = vmul.f32 %v614, %v898
  %v909 = vmul.f32 %v616, %v898
  %v910 = vmul.f32 %v619, %v898
  %v911 = vmul.f32 %v621, %v898
  %v912 = vmul.f32 %v768, %v898
  %v913 = vmul.f32 %v770, %v898
  %v914 = vmul.f32 %v773, %v898
  %v915 = vmul.f32 %v775, %v898
  %v917 = vperm.slane %v896, 0
  %v919 = vadd.f32 %v900, %v917
  %v920 = vadd.f32 %v901, %v917
  %v921 = vadd.f32 %v902, %v917
  %v922 = vadd.f32 %v903, %v917
  %v923 = vadd.f32 %v904, %v917
  %v924 = vadd.f32 %v905, %v917
  %v925 = vadd.f32 %v906, %v917
  %v926 = vadd.f32 %v907, %v917
  %v927 = vadd.f32 %v908, %v917
  %v928 = vadd.f32 %v909, %v917
  %v929 = vadd.f32 %v910, %v917
  %v930 = vadd.f32 %v911, %v917
  %v931 = vadd.f32 %v912, %v917
  %v932 = vadd.f32 %v913, %v917
  %v933 = vadd.f32 %v914, %v917
  %v934 = vadd.f32 %v915, %v917
  %v935 = vmax.f32 %v919, 0.0
  %v936 = vmax.f32 %v920, 0.0
  %v937 = vmax.f32 %v921, 0.0
  %v938 = vmax.f32 %v922, 0.0
  %v939 = vmax.f32 %v923, 0.0
  %v940 = vmax.f32 %v924, 0.0
  %v941 = vmax.f32 %v925, 0.0
  %v942 = vmax.f32 %v926, 0.0
  %v943 = vmax.f32 %v927, 0.0
  %v944 = vmax.f32 %v928, 0.0
  %v945 = vmax.f32 %v929, 0.0
  %v946 = vmax.f32 %v930, 0.0
  %v947 = vmax.f32 %v931, 0.0
  %v948 = vmax.f32 %v932, 0.0
  %v949 = vmax.f32 %v933, 0.0
  %v950 = vmax.f32 %v934, 0.0
  %v951 = vpack.c.bf16 %v935, %v935
  %v952 = vpack.c.bf16 %v936, %v936
  %v953 = vpack.c.bf16 %v937, %v937
  %v954 = vpack.c.bf16 %v938, %v938
  %v955 = vpack.c.bf16 %v939, %v939
  %v956 = vpack.c.bf16 %v940, %v940
  %v957 = vpack.c.bf16 %v941, %v941
  %v958 = vpack.c.bf16 %v942, %v942
  %v959 = vpack.c.bf16 %v943, %v943
  %v960 = vpack.c.bf16 %v944, %v944
  %v961 = vpack.c.bf16 %v945, %v945
  %v962 = vpack.c.bf16 %v946, %v946
  %v963 = vpack.c.bf16 %v947, %v947
  %v964 = vpack.c.bf16 %v948, %v948
  %v965 = vpack.c.bf16 %v949, %v949
  %v966 = vpack.c.bf16 %v950, %v950
  %vm967 = vcmask 257024
  %968 = vst.msk [vmem:[%s4] sm:$0xf] %vm967, %v951
  %969 = vst.msk [vmem:[%s4 + $0x4] sm:$0xf] %vm967, %v952
  %970 = vst.msk [vmem:[%s4 + $0x8] sm:$0xf] %vm967, %v953
  %971 = vst.msk [vmem:[%s4 + $0xc] sm:$0xf] %vm967, %v954
  %972 = vst.msk [vmem:[%s4 + $0x10] sm:$0xf] %vm967, %v955
  %973 = vst.msk [vmem:[%s4 + $0x14] sm:$0xf] %vm967, %v956
  %974 = vst.msk [vmem:[%s4 + $0x18] sm:$0xf] %vm967, %v957
  %975 = vst.msk [vmem:[%s4 + $0x1c] sm:$0xf] %vm967, %v958
  %976 = vst.msk [vmem:[%s4 + $0x20] sm:$0xf] %vm967, %v959
  %977 = vst.msk [vmem:[%s4 + $0x24] sm:$0xf] %vm967, %v960
  %978 = vst.msk [vmem:[%s4 + $0x28] sm:$0xf] %vm967, %v961
  %979 = vst.msk [vmem:[%s4 + $0x2c] sm:$0xf] %vm967, %v962
  %980 = vst.msk [vmem:[%s4 + $0x30] sm:$0xf] %vm967, %v963
  %981 = vst.msk [vmem:[%s4 + $0x34] sm:$0xf] %vm967, %v964
  %982 = vst.msk [vmem:[%s4 + $0x38] sm:$0xf] %vm967, %v965
  %983 = vst.msk [vmem:[%s4 + $0x3c] sm:$0xf] %vm967, %v966
  // Predicated region
  $region18: #{generator_forward.5} parent=0 // pred_check
    _
  $region19: #{generator_forward.5} parent=0 // pred_check_branch
    %985 = sbr.rel (0) target = $region21
  $region20: #{generator_forward.5} parent=0 // pred_region
    _
  $region21: #{generator_forward.5} parent=0 // pred_fallthru
    _
  // Predicated region
  $region22: #{generator_forward.5} parent=0 // pred_check
    _
  $region23: #{generator_forward.5} parent=0 // pred_check_branch
    %987 = sbr.rel (0) target = $region25
  $region24: #{generator_forward.5} parent=0 // pred_region
    _
  $region25: #{generator_forward.5} parent=0 // pred_fallthru
    _

// kernel: generator_forward.6
$region0: #{generator_forward.6}
  #allocation0 [shape = 'u32[]', space=smem, size = 0x4, offset = 0x4, fixed_abs, tag = 'smem constant byte address 0x4 - core index']
  #allocation1 [shape = 'u32[72,128]{1,0:T(1,128)}', space=vmem, size = 0x9000, scoped, tag = 'internal scratch']
  %s0 = inlined_call_operand.vmem [shape: bf16[4,128,128], index: 0, kind: input, shape index: {}]
  %s1 = inlined_call_operand.vmem [shape: bf16[4,128,16], index: 1, kind: input, shape index: {}]
  %s2 = inlined_call_operand.vmem [shape: f32[1,1,16], index: 2, kind: input, shape index: {}]
  %s3 = inlined_call_operand.vmem [shape: f32[1,1,16], index: 3, kind: input, shape index: {}]
  %s4 = inlined_call_operand.vmem [shape: bf16[4,128,16], index: 4, kind: output, shape index: {}]
  %s5 = sld [smem:[#allocation0]]
  $region26: #{generator_forward.6} parent=0
    _
  %s7 = ssub.s32 1, %s5
  %s8 = scalar_select 0, %s7, %s5
  // Predicated region
  $region2: #{generator_forward.6} parent=0 // pred_check
    _
  $region3: #{generator_forward.6} parent=0 // pred_check_branch
    %10 = sbr.rel (0) target = $region5
  $region4: #{generator_forward.6} parent=0 // pred_region
    _
  $region5: #{generator_forward.6} parent=0 // pred_fallthru
    _
  // Predicated region
  $region6: #{generator_forward.6} parent=0 // pred_check
    _
  $region7: #{generator_forward.6} parent=0 // pred_check_branch
    %12 = sbr.rel (0) target = $region9
  $region8: #{generator_forward.6} parent=0 // pred_region
    _
  $region9: #{generator_forward.6} parent=0 // pred_fallthru
    _
  // Predicated region
  $region10: #{generator_forward.6} parent=0 // pred_check
    _
  $region11: #{generator_forward.6} parent=0 // pred_check_branch
    %14 = sbr.rel (0) target = $region13
  $region12: #{generator_forward.6} parent=0 // pred_region
    _
  $region13: #{generator_forward.6} parent=0 // pred_fallthru
    _
  // Predicated region
  $region14: #{generator_forward.6} parent=0 // pred_check
    _
  $region15: #{generator_forward.6} parent=0 // pred_check_branch
    %16 = sbr.rel (0) target = $region17
  $region16: #{generator_forward.6} parent=0 // pred_region
    _
  $region17: #{generator_forward.6} parent=0 // pred_fallthru
    _
  %v17 = vld [vmem:[%s0] sm:$0xf]
  %v18 = vld [vmem:[%s0 + $0x4] sm:$0xf]
  %v19 = vld [vmem:[%s0 + $0x8] sm:$0xf]
  %v20 = vld [vmem:[%s0 + $0xc] sm:$0xf]
  %v21 = vld [vmem:[%s0 + $0x10] sm:$0xf]
  %v22 = vld [vmem:[%s0 + $0x14] sm:$0xf]
  %v23 = vld [vmem:[%s0 + $0x18] sm:$0xf]
  %v24 = vld [vmem:[%s0 + $0x1c] sm:$0xf]
  %v25 = vld [vmem:[%s0 + $0x20] sm:$0xf]
  %v26 = vld [vmem:[%s0 + $0x24] sm:$0xf]
  %v27 = vld [vmem:[%s0 + $0x28] sm:$0xf]
  %v28 = vld [vmem:[%s0 + $0x2c] sm:$0xf]
  %v29 = vld [vmem:[%s0 + $0x30] sm:$0xf]
  %v30 = vld [vmem:[%s0 + $0x34] sm:$0xf]
  %v31 = vld [vmem:[%s0 + $0x38] sm:$0xf]
  %v32 = vld [vmem:[%s0 + $0x3c] sm:$0xf]
  %v33 = vld [vmem:[%s0 + $0x40] sm:$0xf]
  %v34 = vld [vmem:[%s0 + $0x44] sm:$0xf]
  %v35 = vld [vmem:[%s0 + $0x48] sm:$0xf]
  %v36 = vld [vmem:[%s0 + $0x4c] sm:$0xf]
  %v37 = vld [vmem:[%s0 + $0x50] sm:$0xf]
  %v38 = vld [vmem:[%s0 + $0x54] sm:$0xf]
  %v39 = vld [vmem:[%s0 + $0x58] sm:$0xf]
  %v40 = vld [vmem:[%s0 + $0x5c] sm:$0xf]
  %v41 = vld [vmem:[%s0 + $0x60] sm:$0xf]
  %v42 = vld [vmem:[%s0 + $0x64] sm:$0xf]
  %v43 = vld [vmem:[%s0 + $0x68] sm:$0xf]
  %v44 = vld [vmem:[%s0 + $0x6c] sm:$0xf]
  %v45 = vld [vmem:[%s0 + $0x70] sm:$0xf]
  %v46 = vld [vmem:[%s0 + $0x74] sm:$0xf]
  %v47 = vld [vmem:[%s0 + $0x78] sm:$0xf]
  %v48 = vld [vmem:[%s0 + $0x7c] sm:$0xf]
  %v49 = vld [vmem:[%s0 + $0x80] sm:$0xf]
  %v50 = vld [vmem:[%s0 + $0x84] sm:$0xf]
  %v51 = vld [vmem:[%s0 + $0x88] sm:$0xf]
  %v52 = vld [vmem:[%s0 + $0x8c] sm:$0xf]
  %v53 = vld [vmem:[%s0 + $0x90] sm:$0xf]
  %v54 = vld [vmem:[%s0 + $0x94] sm:$0xf]
  %v55 = vld [vmem:[%s0 + $0x98] sm:$0xf]
  %v56 = vld [vmem:[%s0 + $0x9c] sm:$0xf]
  %v57 = vld [vmem:[%s0 + $0xa0] sm:$0xf]
  %v58 = vld [vmem:[%s0 + $0xa4] sm:$0xf]
  %v59 = vld [vmem:[%s0 + $0xa8] sm:$0xf]
  %v60 = vld [vmem:[%s0 + $0xac] sm:$0xf]
  %v61 = vld [vmem:[%s0 + $0xb0] sm:$0xf]
  %v62 = vld [vmem:[%s0 + $0xb4] sm:$0xf]
  %v63 = vld [vmem:[%s0 + $0xb8] sm:$0xf]
  %v64 = vld [vmem:[%s0 + $0xbc] sm:$0xf]
  %v65 = vld [vmem:[%s0 + $0xc0] sm:$0xf]
  %v66 = vld [vmem:[%s0 + $0xc4] sm:$0xf]
  %v67 = vld [vmem:[%s0 + $0xc8] sm:$0xf]
  %v68 = vld [vmem:[%s0 + $0xcc] sm:$0xf]
  %v69 = vld [vmem:[%s0 + $0xd0] sm:$0xf]
  %v70 = vld [vmem:[%s0 + $0xd4] sm:$0xf]
  %v71 = vld [vmem:[%s0 + $0xd8] sm:$0xf]
  %v72 = vld [vmem:[%s0 + $0xdc] sm:$0xf]
  %v73 = vld [vmem:[%s0 + $0xe0] sm:$0xf]
  %v74 = vld [vmem:[%s0 + $0xe4] sm:$0xf]
  %v75 = vld [vmem:[%s0 + $0xe8] sm:$0xf]
  %v76 = vld [vmem:[%s0 + $0xec] sm:$0xf]
  %v77 = vld [vmem:[%s0 + $0xf0] sm:$0xf]
  %v78 = vld [vmem:[%s0 + $0xf4] sm:$0xf]
  %v79 = vld [vmem:[%s0 + $0xf8] sm:$0xf]
  %v80 = vld [vmem:[%s0 + $0xfc] sm:$0xf]
  %v81 = vld [vmem:[%s1] sm:$0xf]
  %v82 = vld [vmem:[%s1 + $0x4] sm:$0xf]
  %v83 = vld [vmem:[%s1 + $0x8] sm:$0xf]
  %v84 = vld [vmem:[%s1 + $0xc] sm:$0xf]
  %v85 = vld [vmem:[%s1 + $0x10] sm:$0xf]
  %v86 = vld [vmem:[%s1 + $0x14] sm:$0xf]
  %v87 = vld [vmem:[%s1 + $0x18] sm:$0xf]
  %v88 = vld [vmem:[%s1 + $0x1c] sm:$0xf]
  %v89 = vld [vmem:[%s1 + $0x20] sm:$0xf]
  %v90 = vld [vmem:[%s1 + $0x24] sm:$0xf]
  %v91 = vld [vmem:[%s1 + $0x28] sm:$0xf]
  %v92 = vld [vmem:[%s1 + $0x2c] sm:$0xf]
  %v93 = vld [vmem:[%s1 + $0x30] sm:$0xf]
  %v94 = vld [vmem:[%s1 + $0x34] sm:$0xf]
  %v95 = vld [vmem:[%s1 + $0x38] sm:$0xf]
  %v96 = vld [vmem:[%s1 + $0x3c] sm:$0xf]
  %v97 = vld [vmem:[%s1 + $0x40] sm:$0xf]
  %v98 = vld [vmem:[%s1 + $0x44] sm:$0xf]
  %v99 = vld [vmem:[%s1 + $0x48] sm:$0xf]
  %v100 = vld [vmem:[%s1 + $0x4c] sm:$0xf]
  %v101 = vld [vmem:[%s1 + $0x50] sm:$0xf]
  %v102 = vld [vmem:[%s1 + $0x54] sm:$0xf]
  %v103 = vld [vmem:[%s1 + $0x58] sm:$0xf]
  %v104 = vld [vmem:[%s1 + $0x5c] sm:$0xf]
  %v105 = vld [vmem:[%s1 + $0x60] sm:$0xf]
  %v106 = vld [vmem:[%s1 + $0x64] sm:$0xf]
  %v107 = vld [vmem:[%s1 + $0x68] sm:$0xf]
  %v108 = vld [vmem:[%s1 + $0x6c] sm:$0xf]
  %v109 = vld [vmem:[%s1 + $0x70] sm:$0xf]
  %v110 = vld [vmem:[%s1 + $0x74] sm:$0xf]
  %v111 = vld [vmem:[%s1 + $0x78] sm:$0xf]
  %v112 = vld [vmem:[%s1 + $0x7c] sm:$0xf]
  %v113 = vld [vmem:[%s1 + $0x80] sm:$0xf]
  %v114 = vld [vmem:[%s1 + $0x84] sm:$0xf]
  %v115 = vld [vmem:[%s1 + $0x88] sm:$0xf]
  %v116 = vld [vmem:[%s1 + $0x8c] sm:$0xf]
  %v117 = vld [vmem:[%s1 + $0x90] sm:$0xf]
  %v118 = vld [vmem:[%s1 + $0x94] sm:$0xf]
  %v119 = vld [vmem:[%s1 + $0x98] sm:$0xf]
  %v120 = vld [vmem:[%s1 + $0x9c] sm:$0xf]
  %v121 = vld [vmem:[%s1 + $0xa0] sm:$0xf]
  %v122 = vld [vmem:[%s1 + $0xa4] sm:$0xf]
  %v123 = vld [vmem:[%s1 + $0xa8] sm:$0xf]
  %v124 = vld [vmem:[%s1 + $0xac] sm:$0xf]
  %v125 = vld [vmem:[%s1 + $0xb0] sm:$0xf]
  %v126 = vld [vmem:[%s1 + $0xb4] sm:$0xf]
  %v127 = vld [vmem:[%s1 + $0xb8] sm:$0xf]
  %v128 = vld [vmem:[%s1 + $0xbc] sm:$0xf]
  %v129 = vld [vmem:[%s1 + $0xc0] sm:$0xf]
  %v130 = vld [vmem:[%s1 + $0xc4] sm:$0xf]
  %v131 = vld [vmem:[%s1 + $0xc8] sm:$0xf]
  %v132 = vld [vmem:[%s1 + $0xcc] sm:$0xf]
  %v133 = vld [vmem:[%s1 + $0xd0] sm:$0xf]
  %v134 = vld [vmem:[%s1 + $0xd4] sm:$0xf]
  %v135 = vld [vmem:[%s1 + $0xd8] sm:$0xf]
  %v136 = vld [vmem:[%s1 + $0xdc] sm:$0xf]
  %v137 = vld [vmem:[%s1 + $0xe0] sm:$0xf]
  %v138 = vld [vmem:[%s1 + $0xe4] sm:$0xf]
  %v139 = vld [vmem:[%s1 + $0xe8] sm:$0xf]
  %v140 = vld [vmem:[%s1 + $0xec] sm:$0xf]
  %v141 = vld [vmem:[%s1 + $0xf0] sm:$0xf]
  %v142 = vld [vmem:[%s1 + $0xf4] sm:$0xf]
  %v143 = vld [vmem:[%s1 + $0xf8] sm:$0xf]
  %v144 = vld [vmem:[%s1 + $0xfc] sm:$0xf]
  %v161 = vunpack.c.l.b16 %v17
  %v162 = vunpack.c.l.b16 %v18
  %v163 = vunpack.c.l.b16 %v19
  %v164 = vunpack.c.l.b16 %v20
  %v165 = vunpack.c.l.b16 %v21
  %v166 = vunpack.c.l.b16 %v22
  %v167 = vunpack.c.l.b16 %v23
  %v168 = vunpack.c.l.b16 %v24
  %v169 = vunpack.c.l.b16 %v25
  %v170 = vunpack.c.l.b16 %v26
  %v171 = vunpack.c.l.b16 %v27
  %v172 = vunpack.c.l.b16 %v28
  %v173 = vunpack.c.l.b16 %v29
  %v174 = vunpack.c.l.b16 %v30
  %v175 = vunpack.c.l.b16 %v31
  %v176 = vunpack.c.l.b16 %v32
  %v177 = vpack.c.b16 %v162, %v161
  %v178 = vpack.c.b16 %v164, %v163
  %v179 = vpack.c.b16 %v166, %v165
  %v180 = vpack.c.b16 %v168, %v167
  %v181 = vpack.c.b16 %v170, %v169
  %v182 = vpack.c.b16 %v172, %v171
  %v183 = vpack.c.b16 %v174, %v173
  %v184 = vpack.c.b16 %v176, %v175
  %v209 = vunpack.c.l.b16 %v81
  %v210 = vunpack.c.l.b16 %v82
  %v211 = vunpack.c.l.b16 %v83
  %v212 = vunpack.c.l.b16 %v84
  %v213 = vunpack.c.l.b16 %v85
  %v214 = vunpack.c.l.b16 %v86
  %v215 = vunpack.c.l.b16 %v87
  %v216 = vunpack.c.l.b16 %v88
  %v217 = vunpack.c.l.b16 %v89
  %v218 = vunpack.c.l.b16 %v90
  %v219 = vunpack.c.l.b16 %v91
  %v220 = vunpack.c.l.b16 %v92
  %v221 = vunpack.c.l.b16 %v93
  %v222 = vunpack.c.l.b16 %v94
  %v223 = vunpack.c.l.b16 %v95
  %v224 = vunpack.c.l.b16 %v96
  %v225 = vpack.c.b16 %v210, %v209
  %v226 = vpack.c.b16 %v212, %v211
  %v227 = vpack.c.b16 %v214, %v213
  %v228 = vpack.c.b16 %v216, %v215
  %v229 = vpack.c.b16 %v218, %v217
  %v230 = vpack.c.b16 %v220, %v219
  %v231 = vpack.c.b16 %v222, %v221
  %v232 = vpack.c.b16 %v224, %v223
  %241 = vmatpush.bf16.msra.mxu0 %v232
  %242 = vmatpush.bf16.msra.mxu0 %v231
  %243 = vmatpush.bf16.msra.mxu0 %v230
  %244 = vmatpush.bf16.msra.mxu0 %v229
  %245 = vmatpush.bf16.msra.mxu0 %v228
  %246 = vmatpush.bf16.msra.mxu0 %v227
  %247 = vmatpush.bf16.msra.mxu0 %v226
  %248 = vmatpush.bf16.msra.mxu0 %v225
  %249 = vmatmul.bf16.gmra.mxu0 %v177
  %v250 = vpop.f32.mrf.mxu0
  %v251 = vadd.f32 0.0, %v250
  %v252 = vpop.f32.mrf.mxu0
  %v253 = vadd.f32 0.0, %v252
  %254 = vmatmul.bf16.gmra.mxu0 %v178
  %v255 = vpop.f32.mrf.mxu0
  %v256 = vadd.f32 0.0, %v255
  %v257 = vpop.f32.mrf.mxu0
  %v258 = vadd.f32 0.0, %v257
  %259 = vmatmul.bf16.gmra.mxu0 %v179
  %v260 = vpop.f32.mrf.mxu0
  %v261 = vadd.f32 0.0, %v260
  %v262 = vpop.f32.mrf.mxu0
  %v263 = vadd.f32 0.0, %v262
  %264 = vmatmul.bf16.gmra.mxu0 %v180
  %v265 = vpop.f32.mrf.mxu0
  %v266 = vadd.f32 0.0, %v265
  %v267 = vpop.f32.mrf.mxu0
  %v268 = vadd.f32 0.0, %v267
  %269 = vmatmul.bf16.gmra.mxu0 %v181
  %v270 = vpop.f32.mrf.mxu0
  %v271 = vadd.f32 0.0, %v270
  %v272 = vpop.f32.mrf.mxu0
  %v273 = vadd.f32 0.0, %v272
  %274 = vmatmul.bf16.gmra.mxu0 %v182
  %v275 = vpop.f32.mrf.mxu0
  %v276 = vadd.f32 0.0, %v275
  %v277 = vpop.f32.mrf.mxu0
  %v278 = vadd.f32 0.0, %v277
  %279 = vmatmul.bf16.gmra.mxu0 %v183
  %v280 = vpop.f32.mrf.mxu0
  %v281 = vadd.f32 0.0, %v280
  %v282 = vpop.f32.mrf.mxu0
  %v283 = vadd.f32 0.0, %v282
  %284 = vmatmul.bf16.gmra.mxu0 %v184
  %v285 = vpop.f32.mrf.mxu0
  %v286 = vadd.f32 0.0, %v285
  %v287 = vpop.f32.mrf.mxu0
  %v288 = vadd.f32 0.0, %v287
  %289 = vdwg.mxu0
  %v306 = vunpack.c.l.b16 %v33
  %v307 = vunpack.c.l.b16 %v34
  %v308 = vunpack.c.l.b16 %v35
  %v309 = vunpack.c.l.b16 %v36
  %v310 = vunpack.c.l.b16 %v37
  %v311 = vunpack.c.l.b16 %v38
  %v312 = vunpack.c.l.b16 %v39
  %v313 = vunpack.c.l.b16 %v40
  %v314 = vunpack.c.l.b16 %v41
  %v315 = vunpack.c.l.b16 %v42
  %v316 = vunpack.c.l.b16 %v43
  %v317 = vunpack.c.l.b16 %v44
  %v318 = vunpack.c.l.b16 %v45
  %v319 = vunpack.c.l.b16 %v46
  %v320 = vunpack.c.l.b16 %v47
  %v321 = vunpack.c.l.b16 %v48
  %v322 = vpack.c.b16 %v307, %v306
  %v323 = vpack.c.b16 %v309, %v308
  %v324 = vpack.c.b16 %v311, %v310
  %v325 = vpack.c.b16 %v313, %v312
  %v326 = vpack.c.b16 %v315, %v314
  %v327 = vpack.c.b16 %v317, %v316
  %v328 = vpack.c.b16 %v319, %v318
  %v329 = vpack.c.b16 %v321, %v320
  %v354 = vunpack.c.l.b16 %v97
  %v355 = vunpack.c.l.b16 %v98
  %v356 = vunpack.c.l.b16 %v99
  %v357 = vunpack.c.l.b16 %v100
  %v358 = vunpack.c.l.b16 %v101
  %v359 = vunpack.c.l.b16 %v102
  %v360 = vunpack.c.l.b16 %v103
  %v361 = vunpack.c.l.b16 %v104
  %v362 = vunpack.c.l.b16 %v105
  %v363 = vunpack.c.l.b16 %v106
  %v364 = vunpack.c.l.b16 %v107
  %v365 = vunpack.c.l.b16 %v108
  %v366 = vunpack.c.l.b16 %v109
  %v367 = vunpack.c.l.b16 %v110
  %v368 = vunpack.c.l.b16 %v111
  %v369 = vunpack.c.l.b16 %v112
  %v370 = vpack.c.b16 %v355, %v354
  %v371 = vpack.c.b16 %v357, %v356
  %v372 = vpack.c.b16 %v359, %v358
  %v373 = vpack.c.b16 %v361, %v360
  %v374 = vpack.c.b16 %v363, %v362
  %v375 = vpack.c.b16 %v365, %v364
  %v376 = vpack.c.b16 %v367, %v366
  %v377 = vpack.c.b16 %v369, %v368
  %386 = vmatpush.bf16.msra.mxu0 %v377
  %387 = vmatpush.bf16.msra.mxu0 %v376
  %388 = vmatpush.bf16.msra.mxu0 %v375
  %389 = vmatpush.bf16.msra.mxu0 %v374
  %390 = vmatpush.bf16.msra.mxu0 %v373
  %391 = vmatpush.bf16.msra.mxu0 %v372
  %392 = vmatpush.bf16.msra.mxu0 %v371
  %393 = vmatpush.bf16.msra.mxu0 %v370
  %394 = vmatmul.bf16.gmra.mxu0 %v322
  %v395 = vpop.f32.mrf.mxu0
  %v396 = vadd.f32 0.0, %v395
  %v397 = vpop.f32.mrf.mxu0
  %v398 = vadd.f32 0.0, %v397
  %399 = vmatmul.bf16.gmra.mxu0 %v323
  %v400 = vpop.f32.mrf.mxu0
  %v401 = vadd.f32 0.0, %v400
  %v402 = vpop.f32.mrf.mxu0
  %v403 = vadd.f32 0.0, %v402
  %404 = vmatmul.bf16.gmra.mxu0 %v324
  %v405 = vpop.f32.mrf.mxu0
  %v406 = vadd.f32 0.0, %v405
  %v407 = vpop.f32.mrf.mxu0
  %v408 = vadd.f32 0.0, %v407
  %409 = vmatmul.bf16.gmra.mxu0 %v325
  %v410 = vpop.f32.mrf.mxu0
  %v411 = vadd.f32 0.0, %v410
  %v412 = vpop.f32.mrf.mxu0
  %v413 = vadd.f32 0.0, %v412
  %414 = vmatmul.bf16.gmra.mxu0 %v326
  %v415 = vpop.f32.mrf.mxu0
  %v416 = vadd.f32 0.0, %v415
  %v417 = vpop.f32.mrf.mxu0
  %v418 = vadd.f32 0.0, %v417
  %419 = vmatmul.bf16.gmra.mxu0 %v327
  %v420 = vpop.f32.mrf.mxu0
  %v421 = vadd.f32 0.0, %v420
  %v422 = vpop.f32.mrf.mxu0
  %v423 = vadd.f32 0.0, %v422
  %424 = vmatmul.bf16.gmra.mxu0 %v328
  %v425 = vpop.f32.mrf.mxu0
  %v426 = vadd.f32 0.0, %v425
  %v427 = vpop.f32.mrf.mxu0
  %v428 = vadd.f32 0.0, %v427
  %429 = vmatmul.bf16.gmra.mxu0 %v329
  %v430 = vpop.f32.mrf.mxu0
  %v431 = vadd.f32 0.0, %v430
  %v432 = vpop.f32.mrf.mxu0
  %v433 = vadd.f32 0.0, %v432
  %434 = vdwg.mxu0
  %v451 = vunpack.c.l.b16 %v49
  %v452 = vunpack.c.l.b16 %v50
  %v453 = vunpack.c.l.b16 %v51
  %v454 = vunpack.c.l.b16 %v52
  %v455 = vunpack.c.l.b16 %v53
  %v456 = vunpack.c.l.b16 %v54
  %v457 = vunpack.c.l.b16 %v55
  %v458 = vunpack.c.l.b16 %v56
  %v459 = vunpack.c.l.b16 %v57
  %v460 = vunpack.c.l.b16 %v58
  %v461 = vunpack.c.l.b16 %v59
  %v462 = vunpack.c.l.b16 %v60
  %v463 = vunpack.c.l.b16 %v61
  %v464 = vunpack.c.l.b16 %v62
  %v465 = vunpack.c.l.b16 %v63
  %v466 = vunpack.c.l.b16 %v64
  %v467 = vpack.c.b16 %v452, %v451
  %v468 = vpack.c.b16 %v454, %v453
  %v469 = vpack.c.b16 %v456, %v455
  %v470 = vpack.c.b16 %v458, %v457
  %v471 = vpack.c.b16 %v460, %v459
  %v472 = vpack.c.b16 %v462, %v461
  %v473 = vpack.c.b16 %v464, %v463
  %v474 = vpack.c.b16 %v466, %v465
  %v499 = vunpack.c.l.b16 %v113
  %v500 = vunpack.c.l.b16 %v114
  %v501 = vunpack.c.l.b16 %v115
  %v502 = vunpack.c.l.b16 %v116
  %v503 = vunpack.c.l.b16 %v117
  %v504 = vunpack.c.l.b16 %v118
  %v505 = vunpack.c.l.b16 %v119
  %v506 = vunpack.c.l.b16 %v120
  %v507 = vunpack.c.l.b16 %v121
  %v508 = vunpack.c.l.b16 %v122
  %v509 = vunpack.c.l.b16 %v123
  %v510 = vunpack.c.l.b16 %v124
  %v511 = vunpack.c.l.b16 %v125
  %v512 = vunpack.c.l.b16 %v126
  %v513 = vunpack.c.l.b16 %v127
  %v514 = vunpack.c.l.b16 %v128
  %v515 = vpack.c.b16 %v500, %v499
  %v516 = vpack.c.b16 %v502, %v501
  %v517 = vpack.c.b16 %v504, %v503
  %v518 = vpack.c.b16 %v506, %v505
  %v519 = vpack.c.b16 %v508, %v507
  %v520 = vpack.c.b16 %v510, %v509
  %v521 = vpack.c.b16 %v512, %v511
  %v522 = vpack.c.b16 %v514, %v513
  %531 = vmatpush.bf16.msra.mxu0 %v522
  %532 = vmatpush.bf16.msra.mxu0 %v521
  %533 = vmatpush.bf16.msra.mxu0 %v520
  %534 = vmatpush.bf16.msra.mxu0 %v519
  %535 = vmatpush.bf16.msra.mxu0 %v518
  %536 = vmatpush.bf16.msra.mxu0 %v517
  %537 = vmatpush.bf16.msra.mxu0 %v516
  %538 = vmatpush.bf16.msra.mxu0 %v515
  %539 = vmatmul.bf16.gmra.mxu0 %v467
  %v540 = vpop.f32.mrf.mxu0
  %v541 = vadd.f32 0.0, %v540
  %v542 = vpop.f32.mrf.mxu0
  %v543 = vadd.f32 0.0, %v542
  %544 = vmatmul.bf16.gmra.mxu0 %v468
  %v545 = vpop.f32.mrf.mxu0
  %v546 = vadd.f32 0.0, %v545
  %v547 = vpop.f32.mrf.mxu0
  %v548 = vadd.f32 0.0, %v547
  %549 = vmatmul.bf16.gmra.mxu0 %v469
  %v550 = vpop.f32.mrf.mxu0
  %v551 = vadd.f32 0.0, %v550
  %v552 = vpop.f32.mrf.mxu0
  %v553 = vadd.f32 0.0, %v552
  %554 = vmatmul.bf16.gmra.mxu0 %v470
  %v555 = vpop.f32.mrf.mxu0
  %v556 = vadd.f32 0.0, %v555
  %v557 = vpop.f32.mrf.mxu0
  %v558 = vadd.f32 0.0, %v557
  %559 = vmatmul.bf16.gmra.mxu0 %v471
  %v560 = vpop.f32.mrf.mxu0
  %v561 = vadd.f32 0.0, %v560
  %v562 = vpop.f32.mrf.mxu0
  %v563 = vadd.f32 0.0, %v562
  %564 = vmatmul.bf16.gmra.mxu0 %v472
  %v565 = vpop.f32.mrf.mxu0
  %v566 = vadd.f32 0.0, %v565
  %v567 = vpop.f32.mrf.mxu0
  %v568 = vadd.f32 0.0, %v567
  %569 = vmatmul.bf16.gmra.mxu0 %v473
  %v570 = vpop.f32.mrf.mxu0
  %v571 = vadd.f32 0.0, %v570
  %v572 = vpop.f32.mrf.mxu0
  %v573 = vadd.f32 0.0, %v572
  %574 = vmatmul.bf16.gmra.mxu0 %v474
  %v575 = vpop.f32.mrf.mxu0
  %v576 = vadd.f32 0.0, %v575
  %v577 = vpop.f32.mrf.mxu0
  %v578 = vadd.f32 0.0, %v577
  %579 = vdwg.mxu0
  %v596 = vunpack.c.l.b16 %v65
  %v597 = vunpack.c.l.b16 %v66
  %v598 = vunpack.c.l.b16 %v67
  %v599 = vunpack.c.l.b16 %v68
  %v600 = vunpack.c.l.b16 %v69
  %v601 = vunpack.c.l.b16 %v70
  %v602 = vunpack.c.l.b16 %v71
  %v603 = vunpack.c.l.b16 %v72
  %v604 = vunpack.c.l.b16 %v73
  %v605 = vunpack.c.l.b16 %v74
  %v606 = vunpack.c.l.b16 %v75
  %v607 = vunpack.c.l.b16 %v76
  %v608 = vunpack.c.l.b16 %v77
  %v609 = vunpack.c.l.b16 %v78
  %v610 = vunpack.c.l.b16 %v79
  %v611 = vunpack.c.l.b16 %v80
  %v612 = vpack.c.b16 %v597, %v596
  %v613 = vpack.c.b16 %v599, %v598
  %v614 = vpack.c.b16 %v601, %v600
  %v615 = vpack.c.b16 %v603, %v602
  %v616 = vpack.c.b16 %v605, %v604
  %v617 = vpack.c.b16 %v607, %v606
  %v618 = vpack.c.b16 %v609, %v608
  %v619 = vpack.c.b16 %v611, %v610
  %v644 = vunpack.c.l.b16 %v129
  %v645 = vunpack.c.l.b16 %v130
  %v646 = vunpack.c.l.b16 %v131
  %v647 = vunpack.c.l.b16 %v132
  %v648 = vunpack.c.l.b16 %v133
  %v649 = vunpack.c.l.b16 %v134
  %v650 = vunpack.c.l.b16 %v135
  %v651 = vunpack.c.l.b16 %v136
  %v652 = vunpack.c.l.b16 %v137
  %v653 = vunpack.c.l.b16 %v138
  %v654 = vunpack.c.l.b16 %v139
  %v655 = vunpack.c.l.b16 %v140
  %v656 = vunpack.c.l.b16 %v141
  %v657 = vunpack.c.l.b16 %v142
  %v658 = vunpack.c.l.b16 %v143
  %v659 = vunpack.c.l.b16 %v144
  %v660 = vpack.c.b16 %v645, %v644
  %v661 = vpack.c.b16 %v647, %v646
  %v662 = vpack.c.b16 %v649, %v648
  %v663 = vpack.c.b16 %v651, %v650
  %v664 = vpack.c.b16 %v653, %v652
  %v665 = vpack.c.b16 %v655, %v654
  %v666 = vpack.c.b16 %v657, %v656
  %v667 = vpack.c.b16 %v659, %v658
  %676 = vmatpush.bf16.msra.mxu0 %v667
  %677 = vmatpush.bf16.msra.mxu0 %v666
  %678 = vmatpush.bf16.msra.mxu0 %v665
  %679 = vmatpush.bf16.msra.mxu0 %v664
  %680 = vmatpush.bf16.msra.mxu0 %v663
  %681 = vmatpush.bf16.msra.mxu0 %v662
  %682 = vmatpush.bf16.msra.mxu0 %v661
  %683 = vmatpush.bf16.msra.mxu0 %v660
  %684 = vmatmul.bf16.gmra.mxu0 %v612
  %v685 = vpop.f32.mrf.mxu0
  %v686 = vadd.f32 0.0, %v685
  %v687 = vpop.f32.mrf.mxu0
  %v688 = vadd.f32 0.0, %v687
  %689 = vmatmul.bf16.gmra.mxu0 %v613
  %v690 = vpop.f32.mrf.mxu0
  %v691 = vadd.f32 0.0, %v690
  %v692 = vpop.f32.mrf.mxu0
  %v693 = vadd.f32 0.0, %v692
  %694 = vmatmul.bf16.gmra.mxu0 %v614
  %v695 = vpop.f32.mrf.mxu0
  %v696 = vadd.f32 0.0, %v695
  %v697 = vpop.f32.mrf.mxu0
  %v698 = vadd.f32 0.0, %v697
  %699 = vmatmul.bf16.gmra.mxu0 %v615
  %v700 = vpop.f32.mrf.mxu0
  %v701 = vadd.f32 0.0, %v700
  %v702 = vpop.f32.mrf.mxu0
  %v703 = vadd.f32 0.0, %v702
  %704 = vmatmul.bf16.gmra.mxu0 %v616
  %v705 = vpop.f32.mrf.mxu0
  %v706 = vadd.f32 0.0, %v705
  %v707 = vpop.f32.mrf.mxu0
  %v708 = vadd.f32 0.0, %v707
  %709 = vmatmul.bf16.gmra.mxu0 %v617
  %v710 = vpop.f32.mrf.mxu0
  %v711 = vadd.f32 0.0, %v710
  %v712 = vpop.f32.mrf.mxu0
  %v713 = vadd.f32 0.0, %v712
  %714 = vmatmul.bf16.gmra.mxu0 %v618
  %v715 = vpop.f32.mrf.mxu0
  %v716 = vadd.f32 0.0, %v715
  %v717 = vpop.f32.mrf.mxu0
  %v718 = vadd.f32 0.0, %v717
  %719 = vmatmul.bf16.gmra.mxu0 %v619
  %v720 = vpop.f32.mrf.mxu0
  %v721 = vadd.f32 0.0, %v720
  %v722 = vpop.f32.mrf.mxu0
  %v723 = vadd.f32 0.0, %v722
  %724 = vdwg.mxu0
  %vm725 = vcmask 130048
  %v726 = vsel %vm725, %v251, 0.0
  %v727 = vsel %vm725, %v396, 0.0
  %v728 = vadd.f32 %v726, %v727
  %v729 = vsel %vm725, %v541, 0.0
  %v730 = vadd.f32 %v728, %v729
  %v731 = vsel %vm725, %v686, 0.0
  %v732 = vadd.f32 %v730, %v731
  %v733 = vsel %vm725, %v253, 0.0
  %v734 = vsel %vm725, %v398, 0.0
  %v735 = vadd.f32 %v733, %v734
  %v736 = vsel %vm725, %v543, 0.0
  %v737 = vadd.f32 %v735, %v736
  %v738 = vsel %vm725, %v688, 0.0
  %v739 = vadd.f32 %v737, %v738
  %v740 = vsel %vm725, %v256, 0.0
  %v741 = vsel %vm725, %v401, 0.0
  %v742 = vadd.f32 %v740, %v741
  %v743 = vsel %vm725, %v546, 0.0
  %v744 = vadd.f32 %v742, %v743
  %v745 = vsel %vm725, %v691, 0.0
  %v746 = vadd.f32 %v744, %v745
  %v747 = vsel %vm725, %v258, 0.0
  %v748 = vsel %vm725, %v403, 0.0
  %v749 = vadd.f32 %v747, %v748
  %v750 = vsel %vm725, %v548, 0.0
  %v751 = vadd.f32 %v749, %v750
  %v752 = vsel %vm725, %v693, 0.0
  %v753 = vadd.f32 %v751, %v752
  %v754 = vsel %vm725, %v261, 0.0
  %v755 = vsel %vm725, %v406, 0.0
  %v756 = vadd.f32 %v754, %v755
  %v757 = vsel %vm725, %v551, 0.0
  %v758 = vadd.f32 %v756, %v757
  %v759 = vsel %vm725, %v696, 0.0
  %v760 = vadd.f32 %v758, %v759
  %v761 = vsel %vm725, %v263, 0.0
  %v762 = vsel %vm725, %v408, 0.0
  %v763 = vadd.f32 %v761, %v762
  %v764 = vsel %vm725, %v553, 0.0
  %v765 = vadd.f32 %v763, %v764
  %v766 = vsel %vm725, %v698, 0.0
  %v767 = vadd.f32 %v765, %v766
  %v768 = vsel %vm725, %v266, 0.0
  %v769 = vsel %vm725, %v411, 0.0
  %v770 = vadd.f32 %v768, %v769
  %v771 = vsel %vm725, %v556, 0.0
  %v772 = vadd.f32 %v770, %v771
  %v773 = vsel %vm725, %v701, 0.0
  %v774 = vadd.f32 %v772, %v773
  %v775 = vsel %vm725, %v268, 0.0
  %v776 = vsel %vm725, %v413, 0.0
  %v777 = vadd.f32 %v775, %v776
  %v778 = vsel %vm725, %v558, 0.0
  %v779 = vadd.f32 %v777, %v778
  %v780 = vsel %vm725, %v703, 0.0
  %v781 = vadd.f32 %v779, %v780
  %v782 = vsel %vm725, %v271, 0.0
  %v783 = vsel %vm725, %v416, 0.0
  %v784 = vadd.f32 %v782, %v783
  %v785 = vsel %vm725, %v561, 0.0
  %v786 = vadd.f32 %v784, %v785
  %v787 = vsel %vm725, %v706, 0.0
  %v788 = vadd.f32 %v786, %v787
  %v789 = vsel %vm725, %v273, 0.0
  %v790 = vsel %vm725, %v418, 0.0
  %v791 = vadd.f32 %v789, %v790
  %v792 = vsel %vm725, %v563, 0.0
  %v793 = vadd.f32 %v791, %v792
  %v794 = vsel %vm725, %v708, 0.0
  %v795 = vadd.f32 %v793, %v794
  %v796 = vsel %vm725, %v276, 0.0
  %v797 = vsel %vm725, %v421, 0.0
  %v798 = vadd.f32 %v796, %v797
  %v799 = vsel %vm725, %v566, 0.0
  %v800 = vadd.f32 %v798, %v799
  %v801 = vsel %vm725, %v711, 0.0
  %v802 = vadd.f32 %v800, %v801
  %v803 = vsel %vm725, %v278, 0.0
  %v804 = vsel %vm725, %v423, 0.0
  %v805 = vadd.f32 %v803, %v804
  %v806 = vsel %vm725, %v568, 0.0
  %v807 = vadd.f32 %v805, %v806
  %v808 = vsel %vm725, %v713, 0.0
  %v809 = vadd.f32 %v807, %v808
  %v810 = vsel %vm725, %v281, 0.0
  %v811 = vsel %vm725, %v426, 0.0
  %v812 = vadd.f32 %v810, %v811
  %v813 = vsel %vm725, %v571, 0.0
  %v814 = vadd.f32 %v812, %v813
  %v815 = vsel %vm725, %v716, 0.0
  %v816 = vadd.f32 %v814, %v815
  %v817 = vsel %vm725, %v283, 0.0
  %v818 = vsel %vm725, %v428, 0.0
  %v819 = vadd.f32 %v817, %v818
  %v820 = vsel %vm725, %v573, 0.0
  %v821 = vadd.f32 %v819, %v820
  %v822 = vsel %vm725, %v718, 0.0
  %v823 = vadd.f32 %v821, %v822
  %v824 = vsel %vm725, %v286, 0.0
  %v825 = vsel %vm725, %v431, 0.0
  %v826 = vadd.f32 %v824, %v825
  %v827 = vsel %vm725, %v576, 0.0
  %v828 = vadd.f32 %v826, %v827
  %v829 = vsel %vm725, %v721, 0.0
  %v830 = vadd.f32 %v828, %v829
  %v831 = vsel %vm725, %v288, 0.0
  %v832 = vsel %vm725, %v433, 0.0
  %v833 = vadd.f32 %v831, %v832
  %v834 = vsel %vm725, %v578, 0.0
  %v835 = vadd.f32 %v833, %v834
  %v836 = vsel %vm725, %v723, 0.0
  %v837 = vadd.f32 %v835, %v836
  %v838 = vsel %vm725, %v732, 0.0
  %v839 = vsel %vm725, %v739, 0.0
  %v840 = vadd.f32 %v838, %v839
  %v841 = vsel %vm725, %v746, 0.0
  %v842 = vadd.f32 %v840, %v841
  %v843 = vsel %vm725, %v753, 0.0
  %v844 = vadd.f32 %v842, %v843
  %v845 = vsel %vm725, %v760, 0.0
  %v846 = vadd.f32 %v844, %v845
  %v847 = vsel %vm725, %v767, 0.0
  %v848 = vadd.f32 %v846, %v847
  %v849 = vsel %vm725, %v774, 0.0
  %v850 = vadd.f32 %v848, %v849
  %v851 = vsel %vm725, %v781, 0.0
  %v852 = vadd.f32 %v850, %v851
  %v853 = vsel %vm725, %v788, 0.0
  %v854 = vadd.f32 %v852, %v853
  %v855 = vsel %vm725, %v795, 0.0
  %v856 = vadd.f32 %v854, %v855
  %v857 = vsel %vm725, %v802, 0.0
  %v858 = vadd.f32 %v856, %v857
  %v859 = vsel %vm725, %v809, 0.0
  %v860 = vadd.f32 %v858, %v859
  %v861 = vsel %vm725, %v816, 0.0
  %v862 = vadd.f32 %v860, %v861
  %v863 = vsel %vm725, %v823, 0.0
  %v864 = vadd.f32 %v862, %v863
  %v865 = vsel %vm725, %v830, 0.0
  %v866 = vadd.f32 %v864, %v865
  %v867 = vsel %vm725, %v837, 0.0
  %v868 = vadd.f32 %v866, %v867
  %v869 = vrot.slane %v868, 4
  %v870 = vadd.f32 %v868, %v869
  %v871 = vrot.slane %v870, 2
  %v872 = vadd.f32 %v870, %v871
  %v873 = vrot.slane %v872, 1
  %v874 = vadd.f32 %v872, %v873
  %v875 = vmul.f32 %v251, %v251
  %v876 = vmul.f32 %v253, %v253
  %v877 = vmul.f32 %v256, %v256
  %v878 = vmul.f32 %v258, %v258
  %v879 = vmul.f32 %v261, %v261
  %v880 = vmul.f32 %v263, %v263
  %v881 = vmul.f32 %v266, %v266
  %v882 = vmul.f32 %v268, %v268
  %v883 = vmul.f32 %v271, %v271
  %v884 = vmul.f32 %v273, %v273
  %v885 = vmul.f32 %v276, %v276
  %v886 = vmul.f32 %v278, %v278
  %v887 = vmul.f32 %v281, %v281
  %v888 = vmul.f32 %v283, %v283
  %v889 = vmul.f32 %v286, %v286
  %v890 = vmul.f32 %v288, %v288
  %v891 = vmul.f32 %v396, %v396
  %v892 = vmul.f32 %v398, %v398
  %v893 = vmul.f32 %v401, %v401
  %v894 = vmul.f32 %v403, %v403
  %v895 = vmul.f32 %v406, %v406
  %v896 = vmul.f32 %v408, %v408
  %v897 = vmul.f32 %v411, %v411
  %v898 = vmul.f32 %v413, %v413
  %v899 = vmul.f32 %v416, %v416
  %v900 = vmul.f32 %v418, %v418
  %v901 = vmul.f32 %v421, %v421
  %v902 = vmul.f32 %v423, %v423
  %v903 = vmul.f32 %v426, %v426
  %v904 = vmul.f32 %v428, %v428
  %v905 = vmul.f32 %v431, %v431
  %v906 = vmul.f32 %v433, %v433
  %v907 = vmul.f32 %v541, %v541
  %v908 = vmul.f32 %v543, %v543
  %v909 = vmul.f32 %v546, %v546
  %v910 = vmul.f32 %v548, %v548
  %v911 = vmul.f32 %v551, %v551
  %v912 = vmul.f32 %v553, %v553
  %v913 = vmul.f32 %v556, %v556
  %v914 = vmul.f32 %v558, %v558
  %v915 = vmul.f32 %v561, %v561
  %v916 = vmul.f32 %v563, %v563
  %v917 = vmul.f32 %v566, %v566
  %v918 = vmul.f32 %v568, %v568
  %v919 = vmul.f32 %v571, %v571
  %v920 = vmul.f32 %v573, %v573
  %v921 = vmul.f32 %v576, %v576
  %v922 = vmul.f32 %v578, %v578
  %v923 = vmul.f32 %v686, %v686
  %v924 = vmul.f32 %v688, %v688
  %v925 = vmul.f32 %v691, %v691
  %v926 = vmul.f32 %v693, %v693
  %v927 = vmul.f32 %v696, %v696
  %v928 = vmul.f32 %v698, %v698
  %v929 = vmul.f32 %v701, %v701
  %v930 = vmul.f32 %v703, %v703
  %v931 = vmul.f32 %v706, %v706
  %v932 = vmul.f32 %v708, %v708
  %v933 = vmul.f32 %v711, %v711
  %v934 = vmul.f32 %v713, %v713
  %v935 = vmul.f32 %v716, %v716
  %v936 = vmul.f32 %v718, %v718
  %v937 = vmul.f32 %v721, %v721
  %v938 = vmul.f32 %v723, %v723
  %v939 = vsel %vm725, %v875, 0.0
  %v940 = vsel %vm725, %v891, 0.0
  %v941 = vadd.f32 %v939, %v940
  %v942 = vsel %vm725, %v907, 0.0
  %v943 = vadd.f32 %v941, %v942
  %v944 = vsel %vm725, %v923, 0.0
  %v945 = vadd.f32 %v943, %v944
  %v946 = vsel %vm725, %v876, 0.0
  %v947 = vsel %vm725, %v892, 0.0
  %v948 = vadd.f32 %v946, %v947
  %v949 = vsel %vm725, %v908, 0.0
  %v950 = vadd.f32 %v948, %v949
  %v951 = vsel %vm725, %v924, 0.0
  %v952 = vadd.f32 %v950, %v951
  %v953 = vsel %vm725, %v877, 0.0
  %v954 = vsel %vm725, %v893, 0.0
  %v955 = vadd.f32 %v953, %v954
  %v956 = vsel %vm725, %v909, 0.0
  %v957 = vadd.f32 %v955, %v956
  %v958 = vsel %vm725, %v925, 0.0
  %v959 = vadd.f32 %v957, %v958
  %v960 = vsel %vm725, %v878, 0.0
  %v961 = vsel %vm725, %v894, 0.0
  %v962 = vadd.f32 %v960, %v961
  %v963 = vsel %vm725, %v910, 0.0
  %v964 = vadd.f32 %v962, %v963
  %v965 = vsel %vm725, %v926, 0.0
  %v966 = vadd.f32 %v964, %v965
  %v967 = vsel %vm725, %v879, 0.0
  %v968 = vsel %vm725, %v895, 0.0
  %v969 = vadd.f32 %v967, %v968
  %v970 = vsel %vm725, %v911, 0.0
  %v971 = vadd.f32 %v969, %v970
  %v972 = vsel %vm725, %v927, 0.0
  %v973 = vadd.f32 %v971, %v972
  %v974 = vsel %vm725, %v880, 0.0
  %v975 = vsel %vm725, %v896, 0.0
  %v976 = vadd.f32 %v974, %v975
  %v977 = vsel %vm725, %v912, 0.0
  %v978 = vadd.f32 %v976, %v977
  %v979 = vsel %vm725, %v928, 0.0
  %v980 = vadd.f32 %v978, %v979
  %v981 = vsel %vm725, %v881, 0.0
  %v982 = vsel %vm725, %v897, 0.0
  %v983 = vadd.f32 %v981, %v982
  %v984 = vsel %vm725, %v913, 0.0
  %v985 = vadd.f32 %v983, %v984
  %v986 = vsel %vm725, %v929, 0.0
  %v987 = vadd.f32 %v985, %v986
  %v988 = vsel %vm725, %v882, 0.0
  %v989 = vsel %vm725, %v898, 0.0
  %v990 = vadd.f32 %v988, %v989
  %v991 = vsel %vm725, %v914, 0.0
  %v992 = vadd.f32 %v990, %v991
  %v993 = vsel %vm725, %v930, 0.0
  %v994 = vadd.f32 %v992, %v993
  %v995 = vsel %vm725, %v883, 0.0
  %v996 = vsel %vm725, %v899, 0.0
  %v997 = vadd.f32 %v995, %v996
  %v998 = vsel %vm725, %v915, 0.0
  %v999 = vadd.f32 %v997, %v998
  %v1000 = vsel %vm725, %v931, 0.0
  %v1001 = vadd.f32 %v999, %v1000
  %v1002 = vsel %vm725, %v884, 0.0
  %v1003 = vsel %vm725, %v900, 0.0
  %v1004 = vadd.f32 %v1002, %v1003
  %v1005 = vsel %vm725, %v916, 0.0
  %v1006 = vadd.f32 %v1004, %v1005
  %v1007 = vsel %vm725, %v932, 0.0
  %v1008 = vadd.f32 %v1006, %v1007
  %v1009 = vsel %vm725, %v885, 0.0
  %v1010 = vsel %vm725, %v901, 0.0
  %v1011 = vadd.f32 %v1009, %v1010
  %v1012 = vsel %vm725, %v917, 0.0
  %v1013 = vadd.f32 %v1011, %v1012
  %v1014 = vsel %vm725, %v933, 0.0
  %v1015 = vadd.f32 %v1013, %v1014
  %v1016 = vsel %vm725, %v886, 0.0
  %v1017 = vsel %vm725, %v902, 0.0
  %v1018 = vadd.f32 %v1016, %v1017
  %v1019 = vsel %vm725, %v918, 0.0
  %v1020 = vadd.f32 %v1018, %v1019
  %v1021 = vsel %vm725, %v934, 0.0
  %v1022 = vadd.f32 %v1020, %v1021
  %v1023 = vsel %vm725, %v887, 0.0
  %v1024 = vsel %vm725, %v903, 0.0
  %v1025 = vadd.f32 %v1023, %v1024
  %v1026 = vsel %vm725, %v919, 0.0
  %v1027 = vadd.f32 %v1025, %v1026
  %v1028 = vsel %vm725, %v935, 0.0
  %v1029 = vadd.f32 %v1027, %v1028
  %v1030 = vsel %vm725, %v888, 0.0
  %v1031 = vsel %vm725, %v904, 0.0
  %v1032 = vadd.f32 %v1030, %v1031
  %v1033 = vsel %vm725, %v920, 0.0
  %v1034 = vadd.f32 %v1032, %v1033
  %v1035 = vsel %vm725, %v936, 0.0
  %v1036 = vadd.f32 %v1034, %v1035
  %v1037 = vsel %vm725, %v889, 0.0
  %v1038 = vsel %vm725, %v905, 0.0
  %v1039 = vadd.f32 %v1037, %v1038
  %v1040 = vsel %vm725, %v921, 0.0
  %v1041 = vadd.f32 %v1039, %v1040
  %v1042 = vsel %vm725, %v937, 0.0
  %v1043 = vadd.f32 %v1041, %v1042
  %v1044 = vsel %vm725, %v890, 0.0
  %v1045 = vsel %vm725, %v906, 0.0
  %v1046 = vadd.f32 %v1044, %v1045
  %v1047 = vsel %vm725, %v922, 0.0
  %v1048 = vadd.f32 %v1046, %v1047
  %v1049 = vsel %vm725, %v938, 0.0
  %v1050 = vadd.f32 %v1048, %v1049
  %v1051 = vsel %vm725, %v945, 0.0
  %v1052 = vsel %vm725, %v952, 0.0
  %v1053 = vadd.f32 %v1051, %v1052
  %v1054 = vsel %vm725, %v959, 0.0
  %v1055 = vadd.f32 %v1053, %v1054
  %v1056 = vsel %vm725, %v966, 0.0
  %v1057 = vadd.f32 %v1055, %v1056
  %v1058 = vsel %vm725, %v973, 0.0
  %v1059 = vadd.f32 %v1057, %v1058
  %v1060 = vsel %vm725, %v980, 0.0
  %v1061 = vadd.f32 %v1059, %v1060
  %v1062 = vsel %vm725, %v987, 0.0
  %v1063 = vadd.f32 %v1061, %v1062
  %v1064 = vsel %vm725, %v994, 0.0
  %v1065 = vadd.f32 %v1063, %v1064
  %v1066 = vsel %vm725, %v1001, 0.0
  %v1067 = vadd.f32 %v1065, %v1066
  %v1068 = vsel %vm725, %v1008, 0.0
  %v1069 = vadd.f32 %v1067, %v1068
  %v1070 = vsel %vm725, %v1015, 0.0
  %v1071 = vadd.f32 %v1069, %v1070
  %v1072 = vsel %vm725, %v1022, 0.0
  %v1073 = vadd.f32 %v1071, %v1072
  %v1074 = vsel %vm725, %v1029, 0.0
  %v1075 = vadd.f32 %v1073, %v1074
  %v1076 = vsel %vm725, %v1036, 0.0
  %v1077 = vadd.f32 %v1075, %v1076
  %v1078 = vsel %vm725, %v1043, 0.0
  %v1079 = vadd.f32 %v1077, %v1078
  %v1080 = vsel %vm725, %v1050, 0.0
  %v1081 = vadd.f32 %v1079, %v1080
  %v1082 = vrot.slane %v1081, 4
  %v1083 = vadd.f32 %v1081, %v1082
  %v1084 = vrot.slane %v1083, 2
  %v1085 = vadd.f32 %v1083, %v1084
  %v1086 = vrot.slane %v1085, 1
  %v1087 = vadd.f32 %v1085, %v1086
  %v1088 = vmul.f32 %v874, 0.001953125
  %v1089 = vmul.f32 %v1087, 0.001953125
  %v1090 = vmul.f32 %v1088, %v1088
  %v1091 = vsub.f32 %v1089, %v1090
  %v1092 = vmax.f32 %v1091, 0.0
  %v1093 = vld [vmem:[%s2] sm:$0x1]
  %v1094 = vadd.f32 %v1092, 1e-05
  %v1095 = vrsqrt.pop %v1094
  %v1096 = vmul.f32 %v1095, %v1094
  %v1097 = vmul.f32 %v1096, %v1095
  %v1098 = vmul.f32 0.5, %v1097
  %v1099 = vsub.f32 1.5, %v1098
  %v1100 = vmul.f32 %v1095, %v1099
  %vm1101 = vweird.f32 %v1094
  %vm1102 = vweird.f32 %v1095
  %vm1103 = vmor %vm1101, %vm1102
  %v1104 = vsel %vm1103, %v1095, %v1100
  %v1105 = vmul.f32 %v1093, %v1104
  %v1106 = vld [vmem:[%s3] sm:$0x1]
  %v1107 = vmul.f32 %v1088, %v1105
  %v1108 = vsub.f32 %v1106, %v1107
  %v1110 = vperm.slane %v1105, 0
  %v1112 = vmul.f32 %v251, %v1110
  %v1113 = vmul.f32 %v253, %v1110
  %v1114 = vmul.f32 %v256, %v1110
  %v1115 = vmul.f32 %v258, %v1110
  %v1116 = vmul.f32 %v261, %v1110
  %v1117 = vmul.f32 %v263, %v1110
  %v1118 = vmul.f32 %v266, %v1110
  %v1119 = vmul.f32 %v268, %v1110
  %v1120 = vmul.f32 %v271, %v1110
  %v1121 = vmul.f32 %v273, %v1110
  %v1122 = vmul.f32 %v276, %v1110
  %v1123 = vmul.f32 %v278, %v1110
  %v1124 = vmul.f32 %v281, %v1110
  %v1125 = vmul.f32 %v283, %v1110
  %v1126 = vmul.f32 %v286, %v1110
  %v1127 = vmul.f32 %v288, %v1110
  %v1128 = vmul.f32 %v396, %v1110
  %v1129 = vmul.f32 %v398, %v1110
  %v1130 = vmul.f32 %v401, %v1110
  %v1131 = vmul.f32 %v403, %v1110
  %v1132 = vmul.f32 %v406, %v1110
  %v1133 = vmul.f32 %v408, %v1110
  %v1134 = vmul.f32 %v411, %v1110
  %v1135 = vmul.f32 %v413, %v1110
  %v1136 = vmul.f32 %v416, %v1110
  %v1137 = vmul.f32 %v418, %v1110
  %v1138 = vmul.f32 %v421, %v1110
  %v1139 = vmul.f32 %v423, %v1110
  %v1140 = vmul.f32 %v426, %v1110
  %v1141 = vmul.f32 %v428, %v1110
  %v1142 = vmul.f32 %v431, %v1110
  %v1143 = vmul.f32 %v433, %v1110
  %v1144 = vmul.f32 %v541, %v1110
  %v1145 = vmul.f32 %v543, %v1110
  %v1146 = vmul.f32 %v546, %v1110
  %v1147 = vmul.f32 %v548, %v1110
  %v1148 = vmul.f32 %v551, %v1110
  %v1149 = vmul.f32 %v553, %v1110
  %v1150 = vmul.f32 %v556, %v1110
  %v1151 = vmul.f32 %v558, %v1110
  %v1152 = vmul.f32 %v561, %v1110
  %v1153 = vmul.f32 %v563, %v1110
  %v1154 = vmul.f32 %v566, %v1110
  %v1155 = vmul.f32 %v568, %v1110
  %v1156 = vmul.f32 %v571, %v1110
  %v1157 = vmul.f32 %v573, %v1110
  %v1158 = vmul.f32 %v576, %v1110
  %v1159 = vmul.f32 %v578, %v1110
  %v1160 = vmul.f32 %v686, %v1110
  %v1161 = vmul.f32 %v688, %v1110
  %v1162 = vmul.f32 %v691, %v1110
  %v1163 = vmul.f32 %v693, %v1110
  %v1164 = vmul.f32 %v696, %v1110
  %v1165 = vmul.f32 %v698, %v1110
  %v1166 = vmul.f32 %v701, %v1110
  %v1167 = vmul.f32 %v703, %v1110
  %v1168 = vmul.f32 %v706, %v1110
  %v1169 = vmul.f32 %v708, %v1110
  %v1170 = vmul.f32 %v711, %v1110
  %v1171 = vmul.f32 %v713, %v1110
  %v1172 = vmul.f32 %v716, %v1110
  %v1173 = vmul.f32 %v718, %v1110
  %v1174 = vmul.f32 %v721, %v1110
  %v1175 = vmul.f32 %v723, %v1110
  %v1177 = vperm.slane %v1108, 0
  %v1179 = vadd.f32 %v1112, %v1177
  %v1180 = vadd.f32 %v1113, %v1177
  %v1181 = vadd.f32 %v1114, %v1177
  %v1182 = vadd.f32 %v1115, %v1177
  %v1183 = vadd.f32 %v1116, %v1177
  %v1184 = vadd.f32 %v1117, %v1177
  %v1185 = vadd.f32 %v1118, %v1177
  %v1186 = vadd.f32 %v1119, %v1177
  %v1187 = vadd.f32 %v1120, %v1177
  %v1188 = vadd.f32 %v1121, %v1177
  %v1189 = vadd.f32 %v1122, %v1177
  %v1190 = vadd.f32 %v1123, %v1177
  %v1191 = vadd.f32 %v1124, %v1177
  %v1192 = vadd.f32 %v1125, %v1177
  %v1193 = vadd.f32 %v1126, %v1177
  %v1194 = vadd.f32 %v1127, %v1177
  %v1195 = vadd.f32 %v1128, %v1177
  %v1196 = vadd.f32 %v1129, %v1177
  %v1197 = vadd.f32 %v1130, %v1177
  %v1198 = vadd.f32 %v1131, %v1177
  %v1199 = vadd.f32 %v1132, %v1177
  %v1200 = vadd.f32 %v1133, %v1177
  %v1201 = vadd.f32 %v1134, %v1177
  %v1202 = vadd.f32 %v1135, %v1177
  %v1203 = vadd.f32 %v1136, %v1177
  %v1204 = vadd.f32 %v1137, %v1177
  %v1205 = vadd.f32 %v1138, %v1177
  %v1206 = vadd.f32 %v1139, %v1177
  %v1207 = vadd.f32 %v1140, %v1177
  %v1208 = vadd.f32 %v1141, %v1177
  %v1209 = vadd.f32 %v1142, %v1177
  %v1210 = vadd.f32 %v1143, %v1177
  %v1211 = vadd.f32 %v1144, %v1177
  %v1212 = vadd.f32 %v1145, %v1177
  %v1213 = vadd.f32 %v1146, %v1177
  %v1214 = vadd.f32 %v1147, %v1177
  %v1215 = vadd.f32 %v1148, %v1177
  %v1216 = vadd.f32 %v1149, %v1177
  %v1217 = vadd.f32 %v1150, %v1177
  %v1218 = vadd.f32 %v1151, %v1177
  %v1219 = vadd.f32 %v1152, %v1177
  %v1220 = vadd.f32 %v1153, %v1177
  %v1221 = vadd.f32 %v1154, %v1177
  %v1222 = vadd.f32 %v1155, %v1177
  %v1223 = vadd.f32 %v1156, %v1177
  %v1224 = vadd.f32 %v1157, %v1177
  %v1225 = vadd.f32 %v1158, %v1177
  %v1226 = vadd.f32 %v1159, %v1177
  %v1227 = vadd.f32 %v1160, %v1177
  %v1228 = vadd.f32 %v1161, %v1177
  %v1229 = vadd.f32 %v1162, %v1177
  %v1230 = vadd.f32 %v1163, %v1177
  %v1231 = vadd.f32 %v1164, %v1177
  %v1232 = vadd.f32 %v1165, %v1177
  %v1233 = vadd.f32 %v1166, %v1177
  %v1234 = vadd.f32 %v1167, %v1177
  %v1235 = vadd.f32 %v1168, %v1177
  %v1236 = vadd.f32 %v1169, %v1177
  %v1237 = vadd.f32 %v1170, %v1177
  %v1238 = vadd.f32 %v1171, %v1177
  %v1239 = vadd.f32 %v1172, %v1177
  %v1240 = vadd.f32 %v1173, %v1177
  %v1241 = vadd.f32 %v1174, %v1177
  %v1242 = vadd.f32 %v1175, %v1177
  %v1243 = vmax.f32 %v1179, 0.0
  %v1244 = vmax.f32 %v1180, 0.0
  %v1245 = vmax.f32 %v1181, 0.0
  %v1246 = vmax.f32 %v1182, 0.0
  %v1247 = vmax.f32 %v1183, 0.0
  %v1248 = vmax.f32 %v1184, 0.0
  %v1249 = vmax.f32 %v1185, 0.0
  %v1250 = vmax.f32 %v1186, 0.0
  %v1251 = vmax.f32 %v1187, 0.0
  %v1252 = vmax.f32 %v1188, 0.0
  %v1253 = vmax.f32 %v1189, 0.0
  %v1254 = vmax.f32 %v1190, 0.0
  %v1255 = vmax.f32 %v1191, 0.0
  %v1256 = vmax.f32 %v1192, 0.0
  %v1257 = vmax.f32 %v1193, 0.0
  %v1258 = vmax.f32 %v1194, 0.0
  %v1259 = vmax.f32 %v1195, 0.0
  %v1260 = vmax.f32 %v1196, 0.0
  %v1261 = vmax.f32 %v1197, 0.0
  %v1262 = vmax.f32 %v1198, 0.0
  %v1263 = vmax.f32 %v1199, 0.0
  %v1264 = vmax.f32 %v1200, 0.0
  %v1265 = vmax.f32 %v1201, 0.0
  %v1266 = vmax.f32 %v1202, 0.0
  %v1267 = vmax.f32 %v1203, 0.0
  %v1268 = vmax.f32 %v1204, 0.0
  %v1269 = vmax.f32 %v1205, 0.0
  %v1270 = vmax.f32 %v1206, 0.0
  %v1271 = vmax.f32 %v1207, 0.0
  %v1272 = vmax.f32 %v1208, 0.0
  %v1273 = vmax.f32 %v1209, 0.0
  %v1274 = vmax.f32 %v1210, 0.0
  %v1275 = vmax.f32 %v1211, 0.0
  %v1276 = vmax.f32 %v1212, 0.0
  %v1277 = vmax.f32 %v1213, 0.0
  %v1278 = vmax.f32 %v1214, 0.0
  %v1279 = vmax.f32 %v1215, 0.0
  %v1280 = vmax.f32 %v1216, 0.0
  %v1281 = vmax.f32 %v1217, 0.0
  %v1282 = vmax.f32 %v1218, 0.0
  %v1283 = vmax.f32 %v1219, 0.0
  %v1284 = vmax.f32 %v1220, 0.0
  %v1285 = vmax.f32 %v1221, 0.0
  %v1286 = vmax.f32 %v1222, 0.0
  %v1287 = vmax.f32 %v1223, 0.0
  %v1288 = vmax.f32 %v1224, 0.0
  %v1289 = vmax.f32 %v1225, 0.0
  %v1290 = vmax.f32 %v1226, 0.0
  %v1291 = vmax.f32 %v1227, 0.0
  %v1292 = vmax.f32 %v1228, 0.0
  %v1293 = vmax.f32 %v1229, 0.0
  %v1294 = vmax.f32 %v1230, 0.0
  %v1295 = vmax.f32 %v1231, 0.0
  %v1296 = vmax.f32 %v1232, 0.0
  %v1297 = vmax.f32 %v1233, 0.0
  %v1298 = vmax.f32 %v1234, 0.0
  %v1299 = vmax.f32 %v1235, 0.0
  %v1300 = vmax.f32 %v1236, 0.0
  %v1301 = vmax.f32 %v1237, 0.0
  %v1302 = vmax.f32 %v1238, 0.0
  %v1303 = vmax.f32 %v1239, 0.0
  %v1304 = vmax.f32 %v1240, 0.0
  %v1305 = vmax.f32 %v1241, 0.0
  %v1306 = vmax.f32 %v1242, 0.0
  %v1307 = vpack.c.bf16 %v1243, %v1243
  %v1308 = vpack.c.bf16 %v1244, %v1244
  %v1309 = vpack.c.bf16 %v1245, %v1245
  %v1310 = vpack.c.bf16 %v1246, %v1246
  %v1311 = vpack.c.bf16 %v1247, %v1247
  %v1312 = vpack.c.bf16 %v1248, %v1248
  %v1313 = vpack.c.bf16 %v1249, %v1249
  %v1314 = vpack.c.bf16 %v1250, %v1250
  %v1315 = vpack.c.bf16 %v1251, %v1251
  %v1316 = vpack.c.bf16 %v1252, %v1252
  %v1317 = vpack.c.bf16 %v1253, %v1253
  %v1318 = vpack.c.bf16 %v1254, %v1254
  %v1319 = vpack.c.bf16 %v1255, %v1255
  %v1320 = vpack.c.bf16 %v1256, %v1256
  %v1321 = vpack.c.bf16 %v1257, %v1257
  %v1322 = vpack.c.bf16 %v1258, %v1258
  %v1323 = vpack.c.bf16 %v1259, %v1259
  %v1324 = vpack.c.bf16 %v1260, %v1260
  %v1325 = vpack.c.bf16 %v1261, %v1261
  %v1326 = vpack.c.bf16 %v1262, %v1262
  %v1327 = vpack.c.bf16 %v1263, %v1263
  %v1328 = vpack.c.bf16 %v1264, %v1264
  %v1329 = vpack.c.bf16 %v1265, %v1265
  %v1330 = vpack.c.bf16 %v1266, %v1266
  %v1331 = vpack.c.bf16 %v1267, %v1267
  %v1332 = vpack.c.bf16 %v1268, %v1268
  %v1333 = vpack.c.bf16 %v1269, %v1269
  %v1334 = vpack.c.bf16 %v1270, %v1270
  %v1335 = vpack.c.bf16 %v1271, %v1271
  %v1336 = vpack.c.bf16 %v1272, %v1272
  %v1337 = vpack.c.bf16 %v1273, %v1273
  %v1338 = vpack.c.bf16 %v1274, %v1274
  %v1339 = vpack.c.bf16 %v1275, %v1275
  %v1340 = vpack.c.bf16 %v1276, %v1276
  %v1341 = vpack.c.bf16 %v1277, %v1277
  %v1342 = vpack.c.bf16 %v1278, %v1278
  %v1343 = vpack.c.bf16 %v1279, %v1279
  %v1344 = vpack.c.bf16 %v1280, %v1280
  %v1345 = vpack.c.bf16 %v1281, %v1281
  %v1346 = vpack.c.bf16 %v1282, %v1282
  %v1347 = vpack.c.bf16 %v1283, %v1283
  %v1348 = vpack.c.bf16 %v1284, %v1284
  %v1349 = vpack.c.bf16 %v1285, %v1285
  %v1350 = vpack.c.bf16 %v1286, %v1286
  %v1351 = vpack.c.bf16 %v1287, %v1287
  %v1352 = vpack.c.bf16 %v1288, %v1288
  %v1353 = vpack.c.bf16 %v1289, %v1289
  %v1354 = vpack.c.bf16 %v1290, %v1290
  %v1355 = vpack.c.bf16 %v1291, %v1291
  %v1356 = vpack.c.bf16 %v1292, %v1292
  %v1357 = vpack.c.bf16 %v1293, %v1293
  %v1358 = vpack.c.bf16 %v1294, %v1294
  %v1359 = vpack.c.bf16 %v1295, %v1295
  %v1360 = vpack.c.bf16 %v1296, %v1296
  %v1361 = vpack.c.bf16 %v1297, %v1297
  %v1362 = vpack.c.bf16 %v1298, %v1298
  %v1363 = vpack.c.bf16 %v1299, %v1299
  %v1364 = vpack.c.bf16 %v1300, %v1300
  %v1365 = vpack.c.bf16 %v1301, %v1301
  %v1366 = vpack.c.bf16 %v1302, %v1302
  %v1367 = vpack.c.bf16 %v1303, %v1303
  %v1368 = vpack.c.bf16 %v1304, %v1304
  %v1369 = vpack.c.bf16 %v1305, %v1305
  %v1370 = vpack.c.bf16 %v1306, %v1306
  %vm1371 = vcmask 125952
  %1372 = vst.msk [vmem:[%s4] sm:$0xf] %vm1371, %v1307
  %1373 = vst.msk [vmem:[%s4 + $0x4] sm:$0xf] %vm1371, %v1308
  %1374 = vst.msk [vmem:[%s4 + $0x8] sm:$0xf] %vm1371, %v1309
  %1375 = vst.msk [vmem:[%s4 + $0xc] sm:$0xf] %vm1371, %v1310
  %1376 = vst.msk [vmem:[%s4 + $0x10] sm:$0xf] %vm1371, %v1311
  %1377 = vst.msk [vmem:[%s4 + $0x14] sm:$0xf] %vm1371, %v1312
  %1378 = vst.msk [vmem:[%s4 + $0x18] sm:$0xf] %vm1371, %v1313
  %1379 = vst.msk [vmem:[%s4 + $0x1c] sm:$0xf] %vm1371, %v1314
  %1380 = vst.msk [vmem:[%s4 + $0x20] sm:$0xf] %vm1371, %v1315
  %1381 = vst.msk [vmem:[%s4 + $0x24] sm:$0xf] %vm1371, %v1316
  %1382 = vst.msk [vmem:[%s4 + $0x28] sm:$0xf] %vm1371, %v1317
  %1383 = vst.msk [vmem:[%s4 + $0x2c] sm:$0xf] %vm1371, %v1318
  %1384 = vst.msk [vmem:[%s4 + $0x30] sm:$0xf] %vm1371, %v1319
  %1385 = vst.msk [vmem:[%s4 + $0x34] sm:$0xf] %vm1371, %v1320
  %1386 = vst.msk [vmem:[%s4 + $0x38] sm:$0xf] %vm1371, %v1321
  %1387 = vst.msk [vmem:[%s4 + $0x3c] sm:$0xf] %vm1371, %v1322
  %1388 = vst.msk [vmem:[%s4 + $0x40] sm:$0xf] %vm1371, %v1323
  %1389 = vst.msk [vmem:[%s4 + $0x44] sm:$0xf] %vm1371, %v1324
  %1390 = vst.msk [vmem:[%s4 + $0x48] sm:$0xf] %vm1371, %v1325
  %1391 = vst.msk [vmem:[%s4 + $0x4c] sm:$0xf] %vm1371, %v1326
  %1392 = vst.msk [vmem:[%s4 + $0x50] sm:$0xf] %vm1371, %v1327
  %1393 = vst.msk [vmem:[%s4 + $0x54] sm:$0xf] %vm1371, %v1328
  %1394 = vst.msk [vmem:[%s4 + $0x58] sm:$0xf] %vm1371, %v1329
  %1395 = vst.msk [vmem:[%s4 + $0x5c] sm:$0xf] %vm1371, %v1330
  %1396 = vst.msk [vmem:[%s4 + $0x60] sm:$0xf] %vm1371, %v1331
  %1397 = vst.msk [vmem:[%s4 + $0x64] sm:$0xf] %vm1371, %v1332
  %1398 = vst.msk [vmem:[%s4 + $0x68] sm:$0xf] %vm1371, %v1333
  %1399 = vst.msk [vmem:[%s4 + $0x6c] sm:$0xf] %vm1371, %v1334
  %1400 = vst.msk [vmem:[%s4 + $0x70] sm:$0xf] %vm1371, %v1335
  %1401 = vst.msk [vmem:[%s4 + $0x74] sm:$0xf] %vm1371, %v1336
  %1402 = vst.msk [vmem:[%s4 + $0x78] sm:$0xf] %vm1371, %v1337
  %1403 = vst.msk [vmem:[%s4 + $0x7c] sm:$0xf] %vm1371, %v1338
  %1404 = vst.msk [vmem:[%s4 + $0x80] sm:$0xf] %vm1371, %v1339
  %1405 = vst.msk [vmem:[%s4 + $0x84] sm:$0xf] %vm1371, %v1340
  %1406 = vst.msk [vmem:[%s4 + $0x88] sm:$0xf] %vm1371, %v1341
  %1407 = vst.msk [vmem:[%s4 + $0x8c] sm:$0xf] %vm1371, %v1342
  %1408 = vst.msk [vmem:[%s4 + $0x90] sm:$0xf] %vm1371, %v1343
  %1409 = vst.msk [vmem:[%s4 + $0x94] sm:$0xf] %vm1371, %v1344
  %1410 = vst.msk [vmem:[%s4 + $0x98] sm:$0xf] %vm1371, %v1345
  %1411 = vst.msk [vmem:[%s4 + $0x9c] sm:$0xf] %vm1371, %v1346
  %1412 = vst.msk [vmem:[%s4 + $0xa0] sm:$0xf] %vm1371, %v1347
  %1413 = vst.msk [vmem:[%s4 + $0xa4] sm:$0xf] %vm1371, %v1348
  %1414 = vst.msk [vmem:[%s4 + $0xa8] sm:$0xf] %vm1371, %v1349
  %1415 = vst.msk [vmem:[%s4 + $0xac] sm:$0xf] %vm1371, %v1350
  %1416 = vst.msk [vmem:[%s4 + $0xb0] sm:$0xf] %vm1371, %v1351
  %1417 = vst.msk [vmem:[%s4 + $0xb4] sm:$0xf] %vm1371, %v1352
  %1418 = vst.msk [vmem:[%s4 + $0xb8] sm:$0xf] %vm1371, %v1353
  %1419 = vst.msk [vmem:[%s4 + $0xbc] sm:$0xf] %vm1371, %v1354
  %1420 = vst.msk [vmem:[%s4 + $0xc0] sm:$0xf] %vm1371, %v1355
  %1421 = vst.msk [vmem:[%s4 + $0xc4] sm:$0xf] %vm1371, %v1356
  %1422 = vst.msk [vmem:[%s4 + $0xc8] sm:$0xf] %vm1371, %v1357
  %1423 = vst.msk [vmem:[%s4 + $0xcc] sm:$0xf] %vm1371, %v1358
  %1424 = vst.msk [vmem:[%s4 + $0xd0] sm:$0xf] %vm1371, %v1359
  %1425 = vst.msk [vmem:[%s4 + $0xd4] sm:$0xf] %vm1371, %v1360
  %1426 = vst.msk [vmem:[%s4 + $0xd8] sm:$0xf] %vm1371, %v1361
  %1427 = vst.msk [vmem:[%s4 + $0xdc] sm:$0xf] %vm1371, %v1362
  %1428 = vst.msk [vmem:[%s4 + $0xe0] sm:$0xf] %vm1371, %v1363
  %1429 = vst.msk [vmem:[%s4 + $0xe4] sm:$0xf] %vm1371, %v1364
  %1430 = vst.msk [vmem:[%s4 + $0xe8] sm:$0xf] %vm1371, %v1365
  %1431 = vst.msk [vmem:[%s4 + $0xec] sm:$0xf] %vm1371, %v1366
  %1432 = vst.msk [vmem:[%s4 + $0xf0] sm:$0xf] %vm1371, %v1367
  %1433 = vst.msk [vmem:[%s4 + $0xf4] sm:$0xf] %vm1371, %v1368
  %1434 = vst.msk [vmem:[%s4 + $0xf8] sm:$0xf] %vm1371, %v1369
  %1435 = vst.msk [vmem:[%s4 + $0xfc] sm:$0xf] %vm1371, %v1370
  // Predicated region
  $region18: #{generator_forward.6} parent=0 // pred_check
    _
  $region19: #{generator_forward.6} parent=0 // pred_check_branch
    %1437 = sbr.rel (0) target = $region21
  $region20: #{generator_forward.6} parent=0 // pred_region
    _
  $region21: #{generator_forward.6} parent=0 // pred_fallthru
    _
  // Predicated region
  $region22: #{generator_forward.6} parent=0 // pred_check
    _
  $region23: #{generator_forward.6} parent=0 // pred_check_branch
    %1439 = sbr.rel (0) target = $region25
  $region24: #{generator_forward.6} parent=0 // pred_region
    _
  $region25: #{generator_forward.6} parent=0 // pred_fallthru
    _

// kernel: generator_forward.7
$region0: #{generator_forward.7}
  #allocation0 [shape = 'u32[]', space=smem, size = 0x4, offset = 0x4, fixed_abs, tag = 'smem constant byte address 0x4 - core index']
  #allocation1 [shape = 'u32[72,128]{1,0:T(1,128)}', space=vmem, size = 0x9000, scoped, tag = 'internal scratch']
  %s0 = inlined_call_operand.vmem [shape: bf16[4,512,64], index: 0, kind: input, shape index: {}]
  %s1 = inlined_call_operand.vmem [shape: bf16[4,64,8], index: 1, kind: input, shape index: {}]
  %s2 = inlined_call_operand.vmem [shape: f32[4,512,8], index: 2, kind: output, shape index: {}]
  %s3 = sld [smem:[#allocation0]]
  $region18: #{generator_forward.7} parent=0
    _
  %s5 = ssub.s32 1, %s3
  %s6 = scalar_select 0, %s5, %s3
  // Predicated region
  $region2: #{generator_forward.7} parent=0 // pred_check
    _
  $region3: #{generator_forward.7} parent=0 // pred_check_branch
    %8 = sbr.rel (0) target = $region5
  $region4: #{generator_forward.7} parent=0 // pred_region
    _
  $region5: #{generator_forward.7} parent=0 // pred_fallthru
    _
  // Predicated region
  $region6: #{generator_forward.7} parent=0 // pred_check
    _
  $region7: #{generator_forward.7} parent=0 // pred_check_branch
    %10 = sbr.rel (0) target = $region9
  $region8: #{generator_forward.7} parent=0 // pred_region
    _
  $region9: #{generator_forward.7} parent=0 // pred_fallthru
    _
  %v12 = vld [vmem:[%s0] sm:$0xf]
  %v13 = vld [vmem:[%s0 + $0x4] sm:$0xf]
  %v14 = vld [vmem:[%s0 + $0x8] sm:$0xf]
  %v15 = vld [vmem:[%s0 + $0xc] sm:$0xf]
  %v16 = vld [vmem:[%s0 + $0x10] sm:$0xf]
  %v17 = vld [vmem:[%s0 + $0x14] sm:$0xf]
  %v18 = vld [vmem:[%s0 + $0x18] sm:$0xf]
  %v19 = vld [vmem:[%s0 + $0x1c] sm:$0xf]
  %v20 = vld [vmem:[%s0 + $0x20] sm:$0xf]
  %v21 = vld [vmem:[%s0 + $0x24] sm:$0xf]
  %v22 = vld [vmem:[%s0 + $0x28] sm:$0xf]
  %v23 = vld [vmem:[%s0 + $0x2c] sm:$0xf]
  %v24 = vld [vmem:[%s0 + $0x30] sm:$0xf]
  %v25 = vld [vmem:[%s0 + $0x34] sm:$0xf]
  %v26 = vld [vmem:[%s0 + $0x38] sm:$0xf]
  %v27 = vld [vmem:[%s0 + $0x3c] sm:$0xf]
  %v28 = vld [vmem:[%s0 + $0x40] sm:$0xf]
  %v29 = vld [vmem:[%s0 + $0x44] sm:$0xf]
  %v30 = vld [vmem:[%s0 + $0x48] sm:$0xf]
  %v31 = vld [vmem:[%s0 + $0x4c] sm:$0xf]
  %v32 = vld [vmem:[%s0 + $0x50] sm:$0xf]
  %v33 = vld [vmem:[%s0 + $0x54] sm:$0xf]
  %v34 = vld [vmem:[%s0 + $0x58] sm:$0xf]
  %v35 = vld [vmem:[%s0 + $0x5c] sm:$0xf]
  %v36 = vld [vmem:[%s0 + $0x60] sm:$0xf]
  %v37 = vld [vmem:[%s0 + $0x64] sm:$0xf]
  %v38 = vld [vmem:[%s0 + $0x68] sm:$0xf]
  %v39 = vld [vmem:[%s0 + $0x6c] sm:$0xf]
  %v40 = vld [vmem:[%s0 + $0x70] sm:$0xf]
  %v41 = vld [vmem:[%s0 + $0x74] sm:$0xf]
  %v42 = vld [vmem:[%s0 + $0x78] sm:$0xf]
  %v43 = vld [vmem:[%s0 + $0x7c] sm:$0xf]
  %v44 = vld [vmem:[%s0 + $0x80] sm:$0xf]
  %v45 = vld [vmem:[%s0 + $0x84] sm:$0xf]
  %v46 = vld [vmem:[%s0 + $0x88] sm:$0xf]
  %v47 = vld [vmem:[%s0 + $0x8c] sm:$0xf]
  %v48 = vld [vmem:[%s0 + $0x90] sm:$0xf]
  %v49 = vld [vmem:[%s0 + $0x94] sm:$0xf]
  %v50 = vld [vmem:[%s0 + $0x98] sm:$0xf]
  %v51 = vld [vmem:[%s0 + $0x9c] sm:$0xf]
  %v52 = vld [vmem:[%s0 + $0xa0] sm:$0xf]
  %v53 = vld [vmem:[%s0 + $0xa4] sm:$0xf]
  %v54 = vld [vmem:[%s0 + $0xa8] sm:$0xf]
  %v55 = vld [vmem:[%s0 + $0xac] sm:$0xf]
  %v56 = vld [vmem:[%s0 + $0xb0] sm:$0xf]
  %v57 = vld [vmem:[%s0 + $0xb4] sm:$0xf]
  %v58 = vld [vmem:[%s0 + $0xb8] sm:$0xf]
  %v59 = vld [vmem:[%s0 + $0xbc] sm:$0xf]
  %v60 = vld [vmem:[%s0 + $0xc0] sm:$0xf]
  %v61 = vld [vmem:[%s0 + $0xc4] sm:$0xf]
  %v62 = vld [vmem:[%s0 + $0xc8] sm:$0xf]
  %v63 = vld [vmem:[%s0 + $0xcc] sm:$0xf]
  %v64 = vld [vmem:[%s0 + $0xd0] sm:$0xf]
  %v65 = vld [vmem:[%s0 + $0xd4] sm:$0xf]
  %v66 = vld [vmem:[%s0 + $0xd8] sm:$0xf]
  %v67 = vld [vmem:[%s0 + $0xdc] sm:$0xf]
  %v68 = vld [vmem:[%s0 + $0xe0] sm:$0xf]
  %v69 = vld [vmem:[%s0 + $0xe4] sm:$0xf]
  %v70 = vld [vmem:[%s0 + $0xe8] sm:$0xf]
  %v71 = vld [vmem:[%s0 + $0xec] sm:$0xf]
  %v72 = vld [vmem:[%s0 + $0xf0] sm:$0xf]
  %v73 = vld [vmem:[%s0 + $0xf4] sm:$0xf]
  %v74 = vld [vmem:[%s0 + $0xf8] sm:$0xf]
  %v75 = vld [vmem:[%s0 + $0xfc] sm:$0xf]
  %v76 = vld [vmem:[%s0 + $0x100] sm:$0xf]
  %v77 = vld [vmem:[%s0 + $0x104] sm:$0xf]
  %v78 = vld [vmem:[%s0 + $0x108] sm:$0xf]
  %v79 = vld [vmem:[%s0 + $0x10c] sm:$0xf]
  %v80 = vld [vmem:[%s0 + $0x110] sm:$0xf]
  %v81 = vld [vmem:[%s0 + $0x114] sm:$0xf]
  %v82 = vld [vmem:[%s0 + $0x118] sm:$0xf]
  %v83 = vld [vmem:[%s0 + $0x11c] sm:$0xf]
  %v84 = vld [vmem:[%s0 + $0x120] sm:$0xf]
  %v85 = vld [vmem:[%s0 + $0x124] sm:$0xf]
  %v86 = vld [vmem:[%s0 + $0x128] sm:$0xf]
  %v87 = vld [vmem:[%s0 + $0x12c] sm:$0xf]
  %v88 = vld [vmem:[%s0 + $0x130] sm:$0xf]
  %v89 = vld [vmem:[%s0 + $0x134] sm:$0xf]
  %v90 = vld [vmem:[%s0 + $0x138] sm:$0xf]
  %v91 = vld [vmem:[%s0 + $0x13c] sm:$0xf]
  %v92 = vld [vmem:[%s0 + $0x140] sm:$0xf]
  %v93 = vld [vmem:[%s0 + $0x144] sm:$0xf]
  %v94 = vld [vmem:[%s0 + $0x148] sm:$0xf]
  %v95 = vld [vmem:[%s0 + $0x14c] sm:$0xf]
  %v96 = vld [vmem:[%s0 + $0x150] sm:$0xf]
  %v97 = vld [vmem:[%s0 + $0x154] sm:$0xf]
  %v98 = vld [vmem:[%s0 + $0x158] sm:$0xf]
  %v99 = vld [vmem:[%s0 + $0x15c] sm:$0xf]
  %v100 = vld [vmem:[%s0 + $0x160] sm:$0xf]
  %v101 = vld [vmem:[%s0 + $0x164] sm:$0xf]
  %v102 = vld [vmem:[%s0 + $0x168] sm:$0xf]
  %v103 = vld [vmem:[%s0 + $0x16c] sm:$0xf]
  %v104 = vld [vmem:[%s0 + $0x170] sm:$0xf]
  %v105 = vld [vmem:[%s0 + $0x174] sm:$0xf]
  %v106 = vld [vmem:[%s0 + $0x178] sm:$0xf]
  %v107 = vld [vmem:[%s0 + $0x17c] sm:$0xf]
  %v108 = vld [vmem:[%s0 + $0x180] sm:$0xf]
  %v109 = vld [vmem:[%s0 + $0x184] sm:$0xf]
  %v110 = vld [vmem:[%s0 + $0x188] sm:$0xf]
  %v111 = vld [vmem:[%s0 + $0x18c] sm:$0xf]
  %v112 = vld [vmem:[%s0 + $0x190] sm:$0xf]
  %v113 = vld [vmem:[%s0 + $0x194] sm:$0xf]
  %v114 = vld [vmem:[%s0 + $0x198] sm:$0xf]
  %v115 = vld [vmem:[%s0 + $0x19c] sm:$0xf]
  %v116 = vld [vmem:[%s0 + $0x1a0] sm:$0xf]
  %v117 = vld [vmem:[%s0 + $0x1a4] sm:$0xf]
  %v118 = vld [vmem:[%s0 + $0x1a8] sm:$0xf]
  %v119 = vld [vmem:[%s0 + $0x1ac] sm:$0xf]
  %v120 = vld [vmem:[%s0 + $0x1b0] sm:$0xf]
  %v121 = vld [vmem:[%s0 + $0x1b4] sm:$0xf]
  %v122 = vld [vmem:[%s0 + $0x1b8] sm:$0xf]
  %v123 = vld [vmem:[%s0 + $0x1bc] sm:$0xf]
  %v124 = vld [vmem:[%s0 + $0x1c0] sm:$0xf]
  %v125 = vld [vmem:[%s0 + $0x1c4] sm:$0xf]
  %v126 = vld [vmem:[%s0 + $0x1c8] sm:$0xf]
  %v127 = vld [vmem:[%s0 + $0x1cc] sm:$0xf]
  %v128 = vld [vmem:[%s0 + $0x1d0] sm:$0xf]
  %v129 = vld [vmem:[%s0 + $0x1d4] sm:$0xf]
  %v130 = vld [vmem:[%s0 + $0x1d8] sm:$0xf]
  %v131 = vld [vmem:[%s0 + $0x1dc] sm:$0xf]
  %v132 = vld [vmem:[%s0 + $0x1e0] sm:$0xf]
  %v133 = vld [vmem:[%s0 + $0x1e4] sm:$0xf]
  %v134 = vld [vmem:[%s0 + $0x1e8] sm:$0xf]
  %v135 = vld [vmem:[%s0 + $0x1ec] sm:$0xf]
  %v136 = vld [vmem:[%s0 + $0x1f0] sm:$0xf]
  %v137 = vld [vmem:[%s0 + $0x1f4] sm:$0xf]
  %v138 = vld [vmem:[%s0 + $0x1f8] sm:$0xf]
  %v139 = vld [vmem:[%s0 + $0x1fc] sm:$0xf]
  %v140 = vld [vmem:[%s0 + $0x200] sm:$0xf]
  %v141 = vld [vmem:[%s0 + $0x204] sm:$0xf]
  %v142 = vld [vmem:[%s0 + $0x208] sm:$0xf]
  %v143 = vld [vmem:[%s0 + $0x20c] sm:$0xf]
  %v144 = vld [vmem:[%s0 + $0x210] sm:$0xf]
  %v145 = vld [vmem:[%s0 + $0x214] sm:$0xf]
  %v146 = vld [vmem:[%s0 + $0x218] sm:$0xf]
  %v147 = vld [vmem:[%s0 + $0x21c] sm:$0xf]
  %v148 = vld [vmem:[%s0 + $0x220] sm:$0xf]
  %v149 = vld [vmem:[%s0 + $0x224] sm:$0xf]
  %v150 = vld [vmem:[%s0 + $0x228] sm:$0xf]
  %v151 = vld [vmem:[%s0 + $0x22c] sm:$0xf]
  %v152 = vld [vmem:[%s0 + $0x230] sm:$0xf]
  %v153 = vld [vmem:[%s0 + $0x234] sm:$0xf]
  %v154 = vld [vmem:[%s0 + $0x238] sm:$0xf]
  %v155 = vld [vmem:[%s0 + $0x23c] sm:$0xf]
  %v156 = vld [vmem:[%s0 + $0x240] sm:$0xf]
  %v157 = vld [vmem:[%s0 + $0x244] sm:$0xf]
  %v158 = vld [vmem:[%s0 + $0x248] sm:$0xf]
  %v159 = vld [vmem:[%s0 + $0x24c] sm:$0xf]
  %v160 = vld [vmem:[%s0 + $0x250] sm:$0xf]
  %v161 = vld [vmem:[%s0 + $0x254] sm:$0xf]
  %v162 = vld [vmem:[%s0 + $0x258] sm:$0xf]
  %v163 = vld [vmem:[%s0 + $0x25c] sm:$0xf]
  %v164 = vld [vmem:[%s0 + $0x260] sm:$0xf]
  %v165 = vld [vmem:[%s0 + $0x264] sm:$0xf]
  %v166 = vld [vmem:[%s0 + $0x268] sm:$0xf]
  %v167 = vld [vmem:[%s0 + $0x26c] sm:$0xf]
  %v168 = vld [vmem:[%s0 + $0x270] sm:$0xf]
  %v169 = vld [vmem:[%s0 + $0x274] sm:$0xf]
  %v170 = vld [vmem:[%s0 + $0x278] sm:$0xf]
  %v171 = vld [vmem:[%s0 + $0x27c] sm:$0xf]
  %v172 = vld [vmem:[%s0 + $0x280] sm:$0xf]
  %v173 = vld [vmem:[%s0 + $0x284] sm:$0xf]
  %v174 = vld [vmem:[%s0 + $0x288] sm:$0xf]
  %v175 = vld [vmem:[%s0 + $0x28c] sm:$0xf]
  %v176 = vld [vmem:[%s0 + $0x290] sm:$0xf]
  %v177 = vld [vmem:[%s0 + $0x294] sm:$0xf]
  %v178 = vld [vmem:[%s0 + $0x298] sm:$0xf]
  %v179 = vld [vmem:[%s0 + $0x29c] sm:$0xf]
  %v180 = vld [vmem:[%s0 + $0x2a0] sm:$0xf]
  %v181 = vld [vmem:[%s0 + $0x2a4] sm:$0xf]
  %v182 = vld [vmem:[%s0 + $0x2a8] sm:$0xf]
  %v183 = vld [vmem:[%s0 + $0x2ac] sm:$0xf]
  %v184 = vld [vmem:[%s0 + $0x2b0] sm:$0xf]
  %v185 = vld [vmem:[%s0 + $0x2b4] sm:$0xf]
  %v186 = vld [vmem:[%s0 + $0x2b8] sm:$0xf]
  %v187 = vld [vmem:[%s0 + $0x2bc] sm:$0xf]
  %v188 = vld [vmem:[%s0 + $0x2c0] sm:$0xf]
  %v189 = vld [vmem:[%s0 + $0x2c4] sm:$0xf]
  %v190 = vld [vmem:[%s0 + $0x2c8] sm:$0xf]
  %v191 = vld [vmem:[%s0 + $0x2cc] sm:$0xf]
  %v192 = vld [vmem:[%s0 + $0x2d0] sm:$0xf]
  %v193 = vld [vmem:[%s0 + $0x2d4] sm:$0xf]
  %v194 = vld [vmem:[%s0 + $0x2d8] sm:$0xf]
  %v195 = vld [vmem:[%s0 + $0x2dc] sm:$0xf]
  %v196 = vld [vmem:[%s0 + $0x2e0] sm:$0xf]
  %v197 = vld [vmem:[%s0 + $0x2e4] sm:$0xf]
  %v198 = vld [vmem:[%s0 + $0x2e8] sm:$0xf]
  %v199 = vld [vmem:[%s0 + $0x2ec] sm:$0xf]
  %v200 = vld [vmem:[%s0 + $0x2f0] sm:$0xf]
  %v201 = vld [vmem:[%s0 + $0x2f4] sm:$0xf]
  %v202 = vld [vmem:[%s0 + $0x2f8] sm:$0xf]
  %v203 = vld [vmem:[%s0 + $0x2fc] sm:$0xf]
  %v204 = vld [vmem:[%s0 + $0x300] sm:$0xf]
  %v205 = vld [vmem:[%s0 + $0x304] sm:$0xf]
  %v206 = vld [vmem:[%s0 + $0x308] sm:$0xf]
  %v207 = vld [vmem:[%s0 + $0x30c] sm:$0xf]
  %v208 = vld [vmem:[%s0 + $0x310] sm:$0xf]
  %v209 = vld [vmem:[%s0 + $0x314] sm:$0xf]
  %v210 = vld [vmem:[%s0 + $0x318] sm:$0xf]
  %v211 = vld [vmem:[%s0 + $0x31c] sm:$0xf]
  %v212 = vld [vmem:[%s0 + $0x320] sm:$0xf]
  %v213 = vld [vmem:[%s0 + $0x324] sm:$0xf]
  %v214 = vld [vmem:[%s0 + $0x328] sm:$0xf]
  %v215 = vld [vmem:[%s0 + $0x32c] sm:$0xf]
  %v216 = vld [vmem:[%s0 + $0x330] sm:$0xf]
  %v217 = vld [vmem:[%s0 + $0x334] sm:$0xf]
  %v218 = vld [vmem:[%s0 + $0x338] sm:$0xf]
  %v219 = vld [vmem:[%s0 + $0x33c] sm:$0xf]
  %v220 = vld [vmem:[%s0 + $0x340] sm:$0xf]
  %v221 = vld [vmem:[%s0 + $0x344] sm:$0xf]
  %v222 = vld [vmem:[%s0 + $0x348] sm:$0xf]
  %v223 = vld [vmem:[%s0 + $0x34c] sm:$0xf]
  %v224 = vld [vmem:[%s0 + $0x350] sm:$0xf]
  %v225 = vld [vmem:[%s0 + $0x354] sm:$0xf]
  %v226 = vld [vmem:[%s0 + $0x358] sm:$0xf]
  %v227 = vld [vmem:[%s0 + $0x35c] sm:$0xf]
  %v228 = vld [vmem:[%s0 + $0x360] sm:$0xf]
  %v229 = vld [vmem:[%s0 + $0x364] sm:$0xf]
  %v230 = vld [vmem:[%s0 + $0x368] sm:$0xf]
  %v231 = vld [vmem:[%s0 + $0x36c] sm:$0xf]
  %v232 = vld [vmem:[%s0 + $0x370] sm:$0xf]
  %v233 = vld [vmem:[%s0 + $0x374] sm:$0xf]
  %v234 = vld [vmem:[%s0 + $0x378] sm:$0xf]
  %v235 = vld [vmem:[%s0 + $0x37c] sm:$0xf]
  %v236 = vld [vmem:[%s0 + $0x380] sm:$0xf]
  %v237 = vld [vmem:[%s0 + $0x384] sm:$0xf]
  %v238 = vld [vmem:[%s0 + $0x388] sm:$0xf]
  %v239 = vld [vmem:[%s0 + $0x38c] sm:$0xf]
  %v240 = vld [vmem:[%s0 + $0x390] sm:$0xf]
  %v241 = vld [vmem:[%s0 + $0x394] sm:$0xf]
  %v242 = vld [vmem:[%s0 + $0x398] sm:$0xf]
  %v243 = vld [vmem:[%s0 + $0x39c] sm:$0xf]
  %v244 = vld [vmem:[%s0 + $0x3a0] sm:$0xf]
  %v245 = vld [vmem:[%s0 + $0x3a4] sm:$0xf]
  %v246 = vld [vmem:[%s0 + $0x3a8] sm:$0xf]
  %v247 = vld [vmem:[%s0 + $0x3ac] sm:$0xf]
  %v248 = vld [vmem:[%s0 + $0x3b0] sm:$0xf]
  %v249 = vld [vmem:[%s0 + $0x3b4] sm:$0xf]
  %v250 = vld [vmem:[%s0 + $0x3b8] sm:$0xf]
  %v251 = vld [vmem:[%s0 + $0x3bc] sm:$0xf]
  %v252 = vld [vmem:[%s0 + $0x3c0] sm:$0xf]
  %v253 = vld [vmem:[%s0 + $0x3c4] sm:$0xf]
  %v254 = vld [vmem:[%s0 + $0x3c8] sm:$0xf]
  %v255 = vld [vmem:[%s0 + $0x3cc] sm:$0xf]
  %v256 = vld [vmem:[%s0 + $0x3d0] sm:$0xf]
  %v257 = vld [vmem:[%s0 + $0x3d4] sm:$0xf]
  %v258 = vld [vmem:[%s0 + $0x3d8] sm:$0xf]
  %v259 = vld [vmem:[%s0 + $0x3dc] sm:$0xf]
  %v260 = vld [vmem:[%s0 + $0x3e0] sm:$0xf]
  %v261 = vld [vmem:[%s0 + $0x3e4] sm:$0xf]
  %v262 = vld [vmem:[%s0 + $0x3e8] sm:$0xf]
  %v263 = vld [vmem:[%s0 + $0x3ec] sm:$0xf]
  %v264 = vld [vmem:[%s0 + $0x3f0] sm:$0xf]
  %v265 = vld [vmem:[%s0 + $0x3f4] sm:$0xf]
  %v266 = vld [vmem:[%s0 + $0x3f8] sm:$0xf]
  %v267 = vld [vmem:[%s0 + $0x3fc] sm:$0xf]
  %v268 = vld [vmem:[%s1] sm:$0xf]
  %v269 = vld [vmem:[%s1 + $0x4] sm:$0xf]
  %v270 = vld [vmem:[%s1 + $0x8] sm:$0xf]
  %v271 = vld [vmem:[%s1 + $0xc] sm:$0xf]
  %v272 = vld [vmem:[%s1 + $0x10] sm:$0xf]
  %v273 = vld [vmem:[%s1 + $0x14] sm:$0xf]
  %v274 = vld [vmem:[%s1 + $0x18] sm:$0xf]
  %v275 = vld [vmem:[%s1 + $0x1c] sm:$0xf]
  %v276 = vld [vmem:[%s1 + $0x20] sm:$0xf]
  %v277 = vld [vmem:[%s1 + $0x24] sm:$0xf]
  %v278 = vld [vmem:[%s1 + $0x28] sm:$0xf]
  %v279 = vld [vmem:[%s1 + $0x2c] sm:$0xf]
  %v280 = vld [vmem:[%s1 + $0x30] sm:$0xf]
  %v281 = vld [vmem:[%s1 + $0x34] sm:$0xf]
  %v282 = vld [vmem:[%s1 + $0x38] sm:$0xf]
  %v283 = vld [vmem:[%s1 + $0x3c] sm:$0xf]
  %v284 = vld [vmem:[%s1 + $0x40] sm:$0xf]
  %v285 = vld [vmem:[%s1 + $0x44] sm:$0xf]
  %v286 = vld [vmem:[%s1 + $0x48] sm:$0xf]
  %v287 = vld [vmem:[%s1 + $0x4c] sm:$0xf]
  %v288 = vld [vmem:[%s1 + $0x50] sm:$0xf]
  %v289 = vld [vmem:[%s1 + $0x54] sm:$0xf]
  %v290 = vld [vmem:[%s1 + $0x58] sm:$0xf]
  %v291 = vld [vmem:[%s1 + $0x5c] sm:$0xf]
  %v292 = vld [vmem:[%s1 + $0x60] sm:$0xf]
  %v293 = vld [vmem:[%s1 + $0x64] sm:$0xf]
  %v294 = vld [vmem:[%s1 + $0x68] sm:$0xf]
  %v295 = vld [vmem:[%s1 + $0x6c] sm:$0xf]
  %v296 = vld [vmem:[%s1 + $0x70] sm:$0xf]
  %v297 = vld [vmem:[%s1 + $0x74] sm:$0xf]
  %v298 = vld [vmem:[%s1 + $0x78] sm:$0xf]
  %v299 = vld [vmem:[%s1 + $0x7c] sm:$0xf]
  %v364 = vunpack.c.l.b16 %v12
  %v365 = vunpack.c.l.b16 %v13
  %v366 = vunpack.c.l.b16 %v14
  %v367 = vunpack.c.l.b16 %v15
  %v368 = vunpack.c.l.b16 %v16
  %v369 = vunpack.c.l.b16 %v17
  %v370 = vunpack.c.l.b16 %v18
  %v371 = vunpack.c.l.b16 %v19
  %v372 = vunpack.c.l.b16 %v20
  %v373 = vunpack.c.l.b16 %v21
  %v374 = vunpack.c.l.b16 %v22
  %v375 = vunpack.c.l.b16 %v23
  %v376 = vunpack.c.l.b16 %v24
  %v377 = vunpack.c.l.b16 %v25
  %v378 = vunpack.c.l.b16 %v26
  %v379 = vunpack.c.l.b16 %v27
  %v380 = vunpack.c.l.b16 %v28
  %v381 = vunpack.c.l.b16 %v29
  %v382 = vunpack.c.l.b16 %v30
  %v383 = vunpack.c.l.b16 %v31
  %v384 = vunpack.c.l.b16 %v32
  %v385 = vunpack.c.l.b16 %v33
  %v386 = vunpack.c.l.b16 %v34
  %v387 = vunpack.c.l.b16 %v35
  %v388 = vunpack.c.l.b16 %v36
  %v389 = vunpack.c.l.b16 %v37
  %v390 = vunpack.c.l.b16 %v38
  %v391 = vunpack.c.l.b16 %v39
  %v392 = vunpack.c.l.b16 %v40
  %v393 = vunpack.c.l.b16 %v41
  %v394 = vunpack.c.l.b16 %v42
  %v395 = vunpack.c.l.b16 %v43
  %v396 = vunpack.c.l.b16 %v44
  %v397 = vunpack.c.l.b16 %v45
  %v398 = vunpack.c.l.b16 %v46
  %v399 = vunpack.c.l.b16 %v47
  %v400 = vunpack.c.l.b16 %v48
  %v401 = vunpack.c.l.b16 %v49
  %v402 = vunpack.c.l.b16 %v50
  %v403 = vunpack.c.l.b16 %v51
  %v404 = vunpack.c.l.b16 %v52
  %v405 = vunpack.c.l.b16 %v53
  %v406 = vunpack.c.l.b16 %v54
  %v407 = vunpack.c.l.b16 %v55
  %v408 = vunpack.c.l.b16 %v56
  %v409 = vunpack.c.l.b16 %v57
  %v410 = vunpack.c.l.b16 %v58
  %v411 = vunpack.c.l.b16 %v59
  %v412 = vunpack.c.l.b16 %v60
  %v413 = vunpack.c.l.b16 %v61
  %v414 = vunpack.c.l.b16 %v62
  %v415 = vunpack.c.l.b16 %v63
  %v416 = vunpack.c.l.b16 %v64
  %v417 = vunpack.c.l.b16 %v65
  %v418 = vunpack.c.l.b16 %v66
  %v419 = vunpack.c.l.b16 %v67
  %v420 = vunpack.c.l.b16 %v68
  %v421 = vunpack.c.l.b16 %v69
  %v422 = vunpack.c.l.b16 %v70
  %v423 = vunpack.c.l.b16 %v71
  %v424 = vunpack.c.l.b16 %v72
  %v425 = vunpack.c.l.b16 %v73
  %v426 = vunpack.c.l.b16 %v74
  %v427 = vunpack.c.l.b16 %v75
  %v428 = vpack.c.b16 %v365, %v364
  %v429 = vpack.c.b16 %v367, %v366
  %v430 = vpack.c.b16 %v369, %v368
  %v431 = vpack.c.b16 %v371, %v370
  %v432 = vpack.c.b16 %v373, %v372
  %v433 = vpack.c.b16 %v375, %v374
  %v434 = vpack.c.b16 %v377, %v376
  %v435 = vpack.c.b16 %v379, %v378
  %v436 = vpack.c.b16 %v381, %v380
  %v437 = vpack.c.b16 %v383, %v382
  %v438 = vpack.c.b16 %v385, %v384
  %v439 = vpack.c.b16 %v387, %v386
  %v440 = vpack.c.b16 %v389, %v388
  %v441 = vpack.c.b16 %v391, %v390
  %v442 = vpack.c.b16 %v393, %v392
  %v443 = vpack.c.b16 %v395, %v394
  %v444 = vpack.c.b16 %v397, %v396
  %v445 = vpack.c.b16 %v399, %v398
  %v446 = vpack.c.b16 %v401, %v400
  %v447 = vpack.c.b16 %v403, %v402
  %v448 = vpack.c.b16 %v405, %v404
  %v449 = vpack.c.b16 %v407, %v406
  %v450 = vpack.c.b16 %v409, %v408
  %v451 = vpack.c.b16 %v411, %v410
  %v452 = vpack.c.b16 %v413, %v412
  %v453 = vpack.c.b16 %v415, %v414
  %v454 = vpack.c.b16 %v417, %v416
  %v455 = vpack.c.b16 %v419, %v418
  %v456 = vpack.c.b16 %v421, %v420
  %v457 = vpack.c.b16 %v423, %v422
  %v458 = vpack.c.b16 %v425, %v424
  %v459 = vpack.c.b16 %v427, %v426
  %v468 = vunpack.c.l.b16 %v268
  %v469 = vunpack.c.l.b16 %v269
  %v470 = vunpack.c.l.b16 %v270
  %v471 = vunpack.c.l.b16 %v271
  %v472 = vunpack.c.l.b16 %v272
  %v473 = vunpack.c.l.b16 %v273
  %v474 = vunpack.c.l.b16 %v274
  %v475 = vunpack.c.l.b16 %v275
  %v476 = vpack.c.b16 %v469, %v468
  %v477 = vpack.c.b16 %v471, %v470
  %v478 = vpack.c.b16 %v473, %v472
  %v479 = vpack.c.b16 %v475, %v474
  %vm484 = vcmask 523264
  %v486 = vsel %vm484, %v428, 0
  %v489 = vsel %vm484, %v429, 0
  %v492 = vsel %vm484, %v430, 0
  %v495 = vsel %vm484, %v431, 0
  %v498 = vsel %vm484, %v432, 0
  %v501 = vsel %vm484, %v433, 0
  %v504 = vsel %vm484, %v434, 0
  %v507 = vsel %vm484, %v435, 0
  %v510 = vsel %vm484, %v436, 0
  %v513 = vsel %vm484, %v437, 0
  %v516 = vsel %vm484, %v438, 0
  %v519 = vsel %vm484, %v439, 0
  %v522 = vsel %vm484, %v440, 0
  %v525 = vsel %vm484, %v441, 0
  %v528 = vsel %vm484, %v442, 0
  %v531 = vsel %vm484, %v443, 0
  %v534 = vsel %vm484, %v444, 0
  %v537 = vsel %vm484, %v445, 0
  %v540 = vsel %vm484, %v446, 0
  %v543 = vsel %vm484, %v447, 0
  %v546 = vsel %vm484, %v448, 0
  %v549 = vsel %vm484, %v449, 0
  %v552 = vsel %vm484, %v450, 0
  %v555 = vsel %vm484, %v451, 0
  %v558 = vsel %vm484, %v452, 0
  %v561 = vsel %vm484, %v453, 0
  %v564 = vsel %vm484, %v454, 0
  %v567 = vsel %vm484, %v455, 0
  %v570 = vsel %vm484, %v456, 0
  %v573 = vsel %vm484, %v457, 0
  %v576 = vsel %vm484, %v458, 0
  %v579 = vsel %vm484, %v459, 0
  %581 = vmatpush.bf16.msra.mxu0 0
  %582 = vmatpush.bf16.msra.mxu0 0
  %583 = vmatpush.bf16.msra.mxu0 0
  %584 = vmatpush.bf16.msra.mxu0 0
  %585 = vmatpush.bf16.msra.mxu0 %v479
  %586 = vmatpush.bf16.msra.mxu0 %v478
  %587 = vmatpush.bf16.msra.mxu0 %v477
  %588 = vmatpush.bf16.msra.mxu0 %v476
  %589 = vmatmul.bf16.gmra.mxu0 %v486
  %v590 = vpop.f32.mrf.mxu0
  %v591 = vadd.f32 0.0, %v590
  %v592 = vpop.f32.mrf.mxu0
  %v593 = vadd.f32 0.0, %v592
  %594 = vmatmul.bf16.gmra.mxu0 %v489
  %v595 = vpop.f32.mrf.mxu0
  %v596 = vadd.f32 0.0, %v595
  %v597 = vpop.f32.mrf.mxu0
  %v598 = vadd.f32 0.0, %v597
  %599 = vmatmul.bf16.gmra.mxu0 %v492
  %v600 = vpop.f32.mrf.mxu0
  %v601 = vadd.f32 0.0, %v600
  %v602 = vpop.f32.mrf.mxu0
  %v603 = vadd.f32 0.0, %v602
  %604 = vmatmul.bf16.gmra.mxu0 %v495
  %v605 = vpop.f32.mrf.mxu0
  %v606 = vadd.f32 0.0, %v605
  %v607 = vpop.f32.mrf.mxu0
  %v608 = vadd.f32 0.0, %v607
  %609 = vmatmul.bf16.gmra.mxu0 %v498
  %v610 = vpop.f32.mrf.mxu0
  %v611 = vadd.f32 0.0, %v610
  %v612 = vpop.f32.mrf.mxu0
  %v613 = vadd.f32 0.0, %v612
  %614 = vmatmul.bf16.gmra.mxu0 %v501
  %v615 = vpop.f32.mrf.mxu0
  %v616 = vadd.f32 0.0, %v615
  %v617 = vpop.f32.mrf.mxu0
  %v618 = vadd.f32 0.0, %v617
  %619 = vmatmul.bf16.gmra.mxu0 %v504
  %v620 = vpop.f32.mrf.mxu0
  %v621 = vadd.f32 0.0, %v620
  %v622 = vpop.f32.mrf.mxu0
  %v623 = vadd.f32 0.0, %v622
  %624 = vmatmul.bf16.gmra.mxu0 %v507
  %v625 = vpop.f32.mrf.mxu0
  %v626 = vadd.f32 0.0, %v625
  %v627 = vpop.f32.mrf.mxu0
  %v628 = vadd.f32 0.0, %v627
  %629 = vmatmul.bf16.gmra.mxu0 %v510
  %v630 = vpop.f32.mrf.mxu0
  %v631 = vadd.f32 0.0, %v630
  %v632 = vpop.f32.mrf.mxu0
  %v633 = vadd.f32 0.0, %v632
  %634 = vmatmul.bf16.gmra.mxu0 %v513
  %v635 = vpop.f32.mrf.mxu0
  %v636 = vadd.f32 0.0, %v635
  %v637 = vpop.f32.mrf.mxu0
  %v638 = vadd.f32 0.0, %v637
  %639 = vmatmul.bf16.gmra.mxu0 %v516
  %v640 = vpop.f32.mrf.mxu0
  %v641 = vadd.f32 0.0, %v640
  %v642 = vpop.f32.mrf.mxu0
  %v643 = vadd.f32 0.0, %v642
  %644 = vmatmul.bf16.gmra.mxu0 %v519
  %v645 = vpop.f32.mrf.mxu0
  %v646 = vadd.f32 0.0, %v645
  %v647 = vpop.f32.mrf.mxu0
  %v648 = vadd.f32 0.0, %v647
  %649 = vmatmul.bf16.gmra.mxu0 %v522
  %v650 = vpop.f32.mrf.mxu0
  %v651 = vadd.f32 0.0, %v650
  %v652 = vpop.f32.mrf.mxu0
  %v653 = vadd.f32 0.0, %v652
  %654 = vmatmul.bf16.gmra.mxu0 %v525
  %v655 = vpop.f32.mrf.mxu0
  %v656 = vadd.f32 0.0, %v655
  %v657 = vpop.f32.mrf.mxu0
  %v658 = vadd.f32 0.0, %v657
  %659 = vmatmul.bf16.gmra.mxu0 %v528
  %v660 = vpop.f32.mrf.mxu0
  %v661 = vadd.f32 0.0, %v660
  %v662 = vpop.f32.mrf.mxu0
  %v663 = vadd.f32 0.0, %v662
  %664 = vmatmul.bf16.gmra.mxu0 %v531
  %v665 = vpop.f32.mrf.mxu0
  %v666 = vadd.f32 0.0, %v665
  %v667 = vpop.f32.mrf.mxu0
  %v668 = vadd.f32 0.0, %v667
  %669 = vmatmul.bf16.gmra.mxu0 %v534
  %v670 = vpop.f32.mrf.mxu0
  %v671 = vadd.f32 0.0, %v670
  %v672 = vpop.f32.mrf.mxu0
  %v673 = vadd.f32 0.0, %v672
  %674 = vmatmul.bf16.gmra.mxu0 %v537
  %v675 = vpop.f32.mrf.mxu0
  %v676 = vadd.f32 0.0, %v675
  %v677 = vpop.f32.mrf.mxu0
  %v678 = vadd.f32 0.0, %v677
  %679 = vmatmul.bf16.gmra.mxu0 %v540
  %v680 = vpop.f32.mrf.mxu0
  %v681 = vadd.f32 0.0, %v680
  %v682 = vpop.f32.mrf.mxu0
  %v683 = vadd.f32 0.0, %v682
  %684 = vmatmul.bf16.gmra.mxu0 %v543
  %v685 = vpop.f32.mrf.mxu0
  %v686 = vadd.f32 0.0, %v685
  %v687 = vpop.f32.mrf.mxu0
  %v688 = vadd.f32 0.0, %v687
  %689 = vmatmul.bf16.gmra.mxu0 %v546
  %v690 = vpop.f32.mrf.mxu0
  %v691 = vadd.f32 0.0, %v690
  %v692 = vpop.f32.mrf.mxu0
  %v693 = vadd.f32 0.0, %v692
  %694 = vmatmul.bf16.gmra.mxu0 %v549
  %v695 = vpop.f32.mrf.mxu0
  %v696 = vadd.f32 0.0, %v695
  %v697 = vpop.f32.mrf.mxu0
  %v698 = vadd.f32 0.0, %v697
  %699 = vmatmul.bf16.gmra.mxu0 %v552
  %v700 = vpop.f32.mrf.mxu0
  %v701 = vadd.f32 0.0, %v700
  %v702 = vpop.f32.mrf.mxu0
  %v703 = vadd.f32 0.0, %v702
  %704 = vmatmul.bf16.gmra.mxu0 %v555
  %v705 = vpop.f32.mrf.mxu0
  %v706 = vadd.f32 0.0, %v705
  %v707 = vpop.f32.mrf.mxu0
  %v708 = vadd.f32 0.0, %v707
  %709 = vmatmul.bf16.gmra.mxu0 %v558
  %v710 = vpop.f32.mrf.mxu0
  %v711 = vadd.f32 0.0, %v710
  %v712 = vpop.f32.mrf.mxu0
  %v713 = vadd.f32 0.0, %v712
  %714 = vmatmul.bf16.gmra.mxu0 %v561
  %v715 = vpop.f32.mrf.mxu0
  %v716 = vadd.f32 0.0, %v715
  %v717 = vpop.f32.mrf.mxu0
  %v718 = vadd.f32 0.0, %v717
  %719 = vmatmul.bf16.gmra.mxu0 %v564
  %v720 = vpop.f32.mrf.mxu0
  %v721 = vadd.f32 0.0, %v720
  %v722 = vpop.f32.mrf.mxu0
  %v723 = vadd.f32 0.0, %v722
  %724 = vmatmul.bf16.gmra.mxu0 %v567
  %v725 = vpop.f32.mrf.mxu0
  %v726 = vadd.f32 0.0, %v725
  %v727 = vpop.f32.mrf.mxu0
  %v728 = vadd.f32 0.0, %v727
  %729 = vmatmul.bf16.gmra.mxu0 %v570
  %v730 = vpop.f32.mrf.mxu0
  %v731 = vadd.f32 0.0, %v730
  %v732 = vpop.f32.mrf.mxu0
  %v733 = vadd.f32 0.0, %v732
  %734 = vmatmul.bf16.gmra.mxu0 %v573
  %v735 = vpop.f32.mrf.mxu0
  %v736 = vadd.f32 0.0, %v735
  %v737 = vpop.f32.mrf.mxu0
  %v738 = vadd.f32 0.0, %v737
  %739 = vmatmul.bf16.gmra.mxu0 %v576
  %v740 = vpop.f32.mrf.mxu0
  %v741 = vadd.f32 0.0, %v740
  %v742 = vpop.f32.mrf.mxu0
  %v743 = vadd.f32 0.0, %v742
  %744 = vmatmul.bf16.gmra.mxu0 %v579
  %v745 = vpop.f32.mrf.mxu0
  %v746 = vadd.f32 0.0, %v745
  %v747 = vpop.f32.mrf.mxu0
  %v748 = vadd.f32 0.0, %v747
  %749 = vdwg.mxu0
  %v814 = vunpack.c.l.b16 %v76
  %v815 = vunpack.c.l.b16 %v77
  %v816 = vunpack.c.l.b16 %v78
  %v817 = vunpack.c.l.b16 %v79
  %v818 = vunpack.c.l.b16 %v80
  %v819 = vunpack.c.l.b16 %v81
  %v820 = vunpack.c.l.b16 %v82
  %v821 = vunpack.c.l.b16 %v83
  %v822 = vunpack.c.l.b16 %v84
  %v823 = vunpack.c.l.b16 %v85
  %v824 = vunpack.c.l.b16 %v86
  %v825 = vunpack.c.l.b16 %v87
  %v826 = vunpack.c.l.b16 %v88
  %v827 = vunpack.c.l.b16 %v89
  %v828 = vunpack.c.l.b16 %v90
  %v829 = vunpack.c.l.b16 %v91
  %v830 = vunpack.c.l.b16 %v92
  %v831 = vunpack.c.l.b16 %v93
  %v832 = vunpack.c.l.b16 %v94
  %v833 = vunpack.c.l.b16 %v95
  %v834 = vunpack.c.l.b16 %v96
  %v835 = vunpack.c.l.b16 %v97
  %v836 = vunpack.c.l.b16 %v98
  %v837 = vunpack.c.l.b16 %v99
  %v838 = vunpack.c.l.b16 %v100
  %v839 = vunpack.c.l.b16 %v101
  %v840 = vunpack.c.l.b16 %v102
  %v841 = vunpack.c.l.b16 %v103
  %v842 = vunpack.c.l.b16 %v104
  %v843 = vunpack.c.l.b16 %v105
  %v844 = vunpack.c.l.b16 %v106
  %v845 = vunpack.c.l.b16 %v107
  %v846 = vunpack.c.l.b16 %v108
  %v847 = vunpack.c.l.b16 %v109
  %v848 = vunpack.c.l.b16 %v110
  %v849 = vunpack.c.l.b16 %v111
  %v850 = vunpack.c.l.b16 %v112
  %v851 = vunpack.c.l.b16 %v113
  %v852 = vunpack.c.l.b16 %v114
  %v853 = vunpack.c.l.b16 %v115
  %v854 = vunpack.c.l.b16 %v116
  %v855 = vunpack.c.l.b16 %v117
  %v856 = vunpack.c.l.b16 %v118
  %v857 = vunpack.c.l.b16 %v119
  %v858 = vunpack.c.l.b16 %v120
  %v859 = vunpack.c.l.b16 %v121
  %v860 = vunpack.c.l.b16 %v122
  %v861 = vunpack.c.l.b16 %v123
  %v862 = vunpack.c.l.b16 %v124
  %v863 = vunpack.c.l.b16 %v125
  %v864 = vunpack.c.l.b16 %v126
  %v865 = vunpack.c.l.b16 %v127
  %v866 = vunpack.c.l.b16 %v128
  %v867 = vunpack.c.l.b16 %v129
  %v868 = vunpack.c.l.b16 %v130
  %v869 = vunpack.c.l.b16 %v131
  %v870 = vunpack.c.l.b16 %v132
  %v871 = vunpack.c.l.b16 %v133
  %v872 = vunpack.c.l.b16 %v134
  %v873 = vunpack.c.l.b16 %v135
  %v874 = vunpack.c.l.b16 %v136
  %v875 = vunpack.c.l.b16 %v137
  %v876 = vunpack.c.l.b16 %v138
  %v877 = vunpack.c.l.b16 %v139
  %v878 = vpack.c.b16 %v815, %v814
  %v879 = vpack.c.b16 %v817, %v816
  %v880 = vpack.c.b16 %v819, %v818
  %v881 = vpack.c.b16 %v821, %v820
  %v882 = vpack.c.b16 %v823, %v822
  %v883 = vpack.c.b16 %v825, %v824
  %v884 = vpack.c.b16 %v827, %v826
  %v885 = vpack.c.b16 %v829, %v828
  %v886 = vpack.c.b16 %v831, %v830
  %v887 = vpack.c.b16 %v833, %v832
  %v888 = vpack.c.b16 %v835, %v834
  %v889 = vpack.c.b16 %v837, %v836
  %v890 = vpack.c.b16 %v839, %v838
  %v891 = vpack.c.b16 %v841, %v840
  %v892 = vpack.c.b16 %v843, %v842
  %v893 = vpack.c.b16 %v845, %v844
  %v894 = vpack.c.b16 %v847, %v846
  %v895 = vpack.c.b16 %v849, %v848
  %v896 = vpack.c.b16 %v851, %v850
  %v897 = vpack.c.b16 %v853, %v852
  %v898 = vpack.c.b16 %v855, %v854
  %v899 = vpack.c.b16 %v857, %v856
  %v900 = vpack.c.b16 %v859, %v858
  %v901 = vpack.c.b16 %v861, %v860
  %v902 = vpack.c.b16 %v863, %v862
  %v903 = vpack.c.b16 %v865, %v864
  %v904 = vpack.c.b16 %v867, %v866
  %v905 = vpack.c.b16 %v869, %v868
  %v906 = vpack.c.b16 %v871, %v870
  %v907 = vpack.c.b16 %v873, %v872
  %v908 = vpack.c.b16 %v875, %v874
  %v909 = vpack.c.b16 %v877, %v876
  %v918 = vunpack.c.l.b16 %v276
  %v919 = vunpack.c.l.b16 %v277
  %v920 = vunpack.c.l.b16 %v278
  %v921 = vunpack.c.l.b16 %v279
  %v922 = vunpack.c.l.b16 %v280
  %v923 = vunpack.c.l.b16 %v281
  %v924 = vunpack.c.l.b16 %v282
  %v925 = vunpack.c.l.b16 %v283
  %v926 = vpack.c.b16 %v919, %v918
  %v927 = vpack.c.b16 %v921, %v920
  %v928 = vpack.c.b16 %v923, %v922
  %v929 = vpack.c.b16 %v925, %v924
  %v935 = vsel %vm484, %v878, 0
  %v938 = vsel %vm484, %v879, 0
  %v941 = vsel %vm484, %v880, 0
  %v944 = vsel %vm484, %v881, 0
  %v947 = vsel %vm484, %v882, 0
  %v950 = vsel %vm484, %v883, 0
  %v953 = vsel %vm484, %v884, 0
  %v956 = vsel %vm484, %v885, 0
  %v959 = vsel %vm484, %v886, 0
  %v962 = vsel %vm484, %v887, 0
  %v965 = vsel %vm484, %v888, 0
  %v968 = vsel %vm484, %v889, 0
  %v971 = vsel %vm484, %v890, 0
  %v974 = vsel %vm484, %v891, 0
  %v977 = vsel %vm484, %v892, 0
  %v980 = vsel %vm484, %v893, 0
  %v983 = vsel %vm484, %v894, 0
  %v986 = vsel %vm484, %v895, 0
  %v989 = vsel %vm484, %v896, 0
  %v992 = vsel %vm484, %v897, 0
  %v995 = vsel %vm484, %v898, 0
  %v998 = vsel %vm484, %v899, 0
  %v1001 = vsel %vm484, %v900, 0
  %v1004 = vsel %vm484, %v901, 0
  %v1007 = vsel %vm484, %v902, 0
  %v1010 = vsel %vm484, %v903, 0
  %v1013 = vsel %vm484, %v904, 0
  %v1016 = vsel %vm484, %v905, 0
  %v1019 = vsel %vm484, %v906, 0
  %v1022 = vsel %vm484, %v907, 0
  %v1025 = vsel %vm484, %v908, 0
  %v1028 = vsel %vm484, %v909, 0
  %1030 = vmatpush.bf16.msra.mxu0 0
  %1031 = vmatpush.bf16.msra.mxu0 0
  %1032 = vmatpush.bf16.msra.mxu0 0
  %1033 = vmatpush.bf16.msra.mxu0 0
  %1034 = vmatpush.bf16.msra.mxu0 %v929
  %1035 = vmatpush.bf16.msra.mxu0 %v928
  %1036 = vmatpush.bf16.msra.mxu0 %v927
  %1037 = vmatpush.bf16.msra.mxu0 %v926
  %1038 = vmatmul.bf16.gmra.mxu0 %v935
  %v1039 = vpop.f32.mrf.mxu0
  %v1040 = vadd.f32 0.0, %v1039
  %v1041 = vpop.f32.mrf.mxu0
  %v1042 = vadd.f32 0.0, %v1041
  %1043 = vmatmul.bf16.gmra.mxu0 %v938
  %v1044 = vpop.f32.mrf.mxu0
  %v1045 = vadd.f32 0.0, %v1044
  %v1046 = vpop.f32.mrf.mxu0
  %v1047 = vadd.f32 0.0, %v1046
  %1048 = vmatmul.bf16.gmra.mxu0 %v941
  %v1049 = vpop.f32.mrf.mxu0
  %v1050 = vadd.f32 0.0, %v1049
  %v1051 = vpop.f32.mrf.mxu0
  %v1052 = vadd.f32 0.0, %v1051
  %1053 = vmatmul.bf16.gmra.mxu0 %v944
  %v1054 = vpop.f32.mrf.mxu0
  %v1055 = vadd.f32 0.0, %v1054
  %v1056 = vpop.f32.mrf.mxu0
  %v1057 = vadd.f32 0.0, %v1056
  %1058 = vmatmul.bf16.gmra.mxu0 %v947
  %v1059 = vpop.f32.mrf.mxu0
  %v1060 = vadd.f32 0.0, %v1059
  %v1061 = vpop.f32.mrf.mxu0
  %v1062 = vadd.f32 0.0, %v1061
  %1063 = vmatmul.bf16.gmra.mxu0 %v950
  %v1064 = vpop.f32.mrf.mxu0
  %v1065 = vadd.f32 0.0, %v1064
  %v1066 = vpop.f32.mrf.mxu0
  %v1067 = vadd.f32 0.0, %v1066
  %1068 = vmatmul.bf16.gmra.mxu0 %v953
  %v1069 = vpop.f32.mrf.mxu0
  %v1070 = vadd.f32 0.0, %v1069
  %v1071 = vpop.f32.mrf.mxu0
  %v1072 = vadd.f32 0.0, %v1071
  %1073 = vmatmul.bf16.gmra.mxu0 %v956
  %v1074 = vpop.f32.mrf.mxu0
  %v1075 = vadd.f32 0.0, %v1074
  %v1076 = vpop.f32.mrf.mxu0
  %v1077 = vadd.f32 0.0, %v1076
  %1078 = vmatmul.bf16.gmra.mxu0 %v959
  %v1079 = vpop.f32.mrf.mxu0
  %v1080 = vadd.f32 0.0, %v1079
  %v1081 = vpop.f32.mrf.mxu0
  %v1082 = vadd.f32 0.0, %v1081
  %1083 = vmatmul.bf16.gmra.mxu0 %v962
  %v1084 = vpop.f32.mrf.mxu0
  %v1085 = vadd.f32 0.0, %v1084
  %v1086 = vpop.f32.mrf.mxu0
  %v1087 = vadd.f32 0.0, %v1086
  %1088 = vmatmul.bf16.gmra.mxu0 %v965
  %v1089 = vpop.f32.mrf.mxu0
  %v1090 = vadd.f32 0.0, %v1089
  %v1091 = vpop.f32.mrf.mxu0
  %v1092 = vadd.f32 0.0, %v1091
  %1093 = vmatmul.bf16.gmra.mxu0 %v968
  %v1094 = vpop.f32.mrf.mxu0
  %v1095 = vadd.f32 0.0, %v1094
  %v1096 = vpop.f32.mrf.mxu0
  %v1097 = vadd.f32 0.0, %v1096
  %1098 = vmatmul.bf16.gmra.mxu0 %v971
  %v1099 = vpop.f32.mrf.mxu0
  %v1100 = vadd.f32 0.0, %v1099
  %v1101 = vpop.f32.mrf.mxu0
  %v1102 = vadd.f32 0.0, %v1101
  %1103 = vmatmul.bf16.gmra.mxu0 %v974
  %v1104 = vpop.f32.mrf.mxu0
  %v1105 = vadd.f32 0.0, %v1104
  %v1106 = vpop.f32.mrf.mxu0
  %v1107 = vadd.f32 0.0, %v1106
  %1108 = vmatmul.bf16.gmra.mxu0 %v977
  %v1109 = vpop.f32.mrf.mxu0
  %v1110 = vadd.f32 0.0, %v1109
  %v1111 = vpop.f32.mrf.mxu0
  %v1112 = vadd.f32 0.0, %v1111
  %1113 = vmatmul.bf16.gmra.mxu0 %v980
  %v1114 = vpop.f32.mrf.mxu0
  %v1115 = vadd.f32 0.0, %v1114
  %v1116 = vpop.f32.mrf.mxu0
  %v1117 = vadd.f32 0.0, %v1116
  %1118 = vmatmul.bf16.gmra.mxu0 %v983
  %v1119 = vpop.f32.mrf.mxu0
  %v1120 = vadd.f32 0.0, %v1119
  %v1121 = vpop.f32.mrf.mxu0
  %v1122 = vadd.f32 0.0, %v1121
  %1123 = vmatmul.bf16.gmra.mxu0 %v986
  %v1124 = vpop.f32.mrf.mxu0
  %v1125 = vadd.f32 0.0, %v1124
  %v1126 = vpop.f32.mrf.mxu0
  %v1127 = vadd.f32 0.0, %v1126
  %1128 = vmatmul.bf16.gmra.mxu0 %v989
  %v1129 = vpop.f32.mrf.mxu0
  %v1130 = vadd.f32 0.0, %v1129
  %v1131 = vpop.f32.mrf.mxu0
  %v1132 = vadd.f32 0.0, %v1131
  %1133 = vmatmul.bf16.gmra.mxu0 %v992
  %v1134 = vpop.f32.mrf.mxu0
  %v1135 = vadd.f32 0.0, %v1134
  %v1136 = vpop.f32.mrf.mxu0
  %v1137 = vadd.f32 0.0, %v1136
  %1138 = vmatmul.bf16.gmra.mxu0 %v995
  %v1139 = vpop.f32.mrf.mxu0
  %v1140 = vadd.f32 0.0, %v1139
  %v1141 = vpop.f32.mrf.mxu0
  %v1142 = vadd.f32 0.0, %v1141
  %1143 = vmatmul.bf16.gmra.mxu0 %v998
  %v1144 = vpop.f32.mrf.mxu0
  %v1145 = vadd.f32 0.0, %v1144
  %v1146 = vpop.f32.mrf.mxu0
  %v1147 = vadd.f32 0.0, %v1146
  %1148 = vmatmul.bf16.gmra.mxu0 %v1001
  %v1149 = vpop.f32.mrf.mxu0
  %v1150 = vadd.f32 0.0, %v1149
  %v1151 = vpop.f32.mrf.mxu0
  %v1152 = vadd.f32 0.0, %v1151
  %1153 = vmatmul.bf16.gmra.mxu0 %v1004
  %v1154 = vpop.f32.mrf.mxu0
  %v1155 = vadd.f32 0.0, %v1154
  %v1156 = vpop.f32.mrf.mxu0
  %v1157 = vadd.f32 0.0, %v1156
  %1158 = vmatmul.bf16.gmra.mxu0 %v1007
  %v1159 = vpop.f32.mrf.mxu0
  %v1160 = vadd.f32 0.0, %v1159
  %v1161 = vpop.f32.mrf.mxu0
  %v1162 = vadd.f32 0.0, %v1161
  %1163 = vmatmul.bf16.gmra.mxu0 %v1010
  %v1164 = vpop.f32.mrf.mxu0
  %v1165 = vadd.f32 0.0, %v1164
  %v1166 = vpop.f32.mrf.mxu0
  %v1167 = vadd.f32 0.0, %v1166
  %1168 = vmatmul.bf16.gmra.mxu0 %v1013
  %v1169 = vpop.f32.mrf.mxu0
  %v1170 = vadd.f32 0.0, %v1169
  %v1171 = vpop.f32.mrf.mxu0
  %v1172 = vadd.f32 0.0, %v1171
  %1173 = vmatmul.bf16.gmra.mxu0 %v1016
  %v1174 = vpop.f32.mrf.mxu0
  %v1175 = vadd.f32 0.0, %v1174
  %v1176 = vpop.f32.mrf.mxu0
  %v1177 = vadd.f32 0.0, %v1176
  %1178 = vmatmul.bf16.gmra.mxu0 %v1019
  %v1179 = vpop.f32.mrf.mxu0
  %v1180 = vadd.f32 0.0, %v1179
  %v1181 = vpop.f32.mrf.mxu0
  %v1182 = vadd.f32 0.0, %v1181
  %1183 = vmatmul.bf16.gmra.mxu0 %v1022
  %v1184 = vpop.f32.mrf.mxu0
  %v1185 = vadd.f32 0.0, %v1184
  %v1186 = vpop.f32.mrf.mxu0
  %v1187 = vadd.f32 0.0, %v1186
  %1188 = vmatmul.bf16.gmra.mxu0 %v1025
  %v1189 = vpop.f32.mrf.mxu0
  %v1190 = vadd.f32 0.0, %v1189
  %v1191 = vpop.f32.mrf.mxu0
  %v1192 = vadd.f32 0.0, %v1191
  %1193 = vmatmul.bf16.gmra.mxu0 %v1028
  %v1194 = vpop.f32.mrf.mxu0
  %v1195 = vadd.f32 0.0, %v1194
  %v1196 = vpop.f32.mrf.mxu0
  %v1197 = vadd.f32 0.0, %v1196
  %1198 = vdwg.mxu0
  %v1263 = vunpack.c.l.b16 %v140
  %v1264 = vunpack.c.l.b16 %v141
  %v1265 = vunpack.c.l.b16 %v142
  %v1266 = vunpack.c.l.b16 %v143
  %v1267 = vunpack.c.l.b16 %v144
  %v1268 = vunpack.c.l.b16 %v145
  %v1269 = vunpack.c.l.b16 %v146
  %v1270 = vunpack.c.l.b16 %v147
  %v1271 = vunpack.c.l.b16 %v148
  %v1272 = vunpack.c.l.b16 %v149
  %v1273 = vunpack.c.l.b16 %v150
  %v1274 = vunpack.c.l.b16 %v151
  %v1275 = vunpack.c.l.b16 %v152
  %v1276 = vunpack.c.l.b16 %v153
  %v1277 = vunpack.c.l.b16 %v154
  %v1278 = vunpack.c.l.b16 %v155
  %v1279 = vunpack.c.l.b16 %v156
  %v1280 = vunpack.c.l.b16 %v157
  %v1281 = vunpack.c.l.b16 %v158
  %v1282 = vunpack.c.l.b16 %v159
  %v1283 = vunpack.c.l.b16 %v160
  %v1284 = vunpack.c.l.b16 %v161
  %v1285 = vunpack.c.l.b16 %v162
  %v1286 = vunpack.c.l.b16 %v163
  %v1287 = vunpack.c.l.b16 %v164
  %v1288 = vunpack.c.l.b16 %v165
  %v1289 = vunpack.c.l.b16 %v166
  %v1290 = vunpack.c.l.b16 %v167
  %v1291 = vunpack.c.l.b16 %v168
  %v1292 = vunpack.c.l.b16 %v169
  %v1293 = vunpack.c.l.b16 %v170
  %v1294 = vunpack.c.l.b16 %v171
  %v1295 = vunpack.c.l.b16 %v172
  %v1296 = vunpack.c.l.b16 %v173
  %v1297 = vunpack.c.l.b16 %v174
  %v1298 = vunpack.c.l.b16 %v175
  %v1299 = vunpack.c.l.b16 %v176
  %v1300 = vunpack.c.l.b16 %v177
  %v1301 = vunpack.c.l.b16 %v178
  %v1302 = vunpack.c.l.b16 %v179
  %v1303 = vunpack.c.l.b16 %v180
  %v1304 = vunpack.c.l.b16 %v181
  %v1305 = vunpack.c.l.b16 %v182
  %v1306 = vunpack.c.l.b16 %v183
  %v1307 = vunpack.c.l.b16 %v184
  %v1308 = vunpack.c.l.b16 %v185
  %v1309 = vunpack.c.l.b16 %v186
  %v1310 = vunpack.c.l.b16 %v187
  %v1311 = vunpack.c.l.b16 %v188
  %v1312 = vunpack.c.l.b16 %v189
  %v1313 = vunpack.c.l.b16 %v190
  %v1314 = vunpack.c.l.b16 %v191
  %v1315 = vunpack.c.l.b16 %v192
  %v1316 = vunpack.c.l.b16 %v193
  %v1317 = vunpack.c.l.b16 %v194
  %v1318 = vunpack.c.l.b16 %v195
  %v1319 = vunpack.c.l.b16 %v196
  %v1320 = vunpack.c.l.b16 %v197
  %v1321 = vunpack.c.l.b16 %v198
  %v1322 = vunpack.c.l.b16 %v199
  %v1323 = vunpack.c.l.b16 %v200
  %v1324 = vunpack.c.l.b16 %v201
  %v1325 = vunpack.c.l.b16 %v202
  %v1326 = vunpack.c.l.b16 %v203
  %v1327 = vpack.c.b16 %v1264, %v1263
  %v1328 = vpack.c.b16 %v1266, %v1265
  %v1329 = vpack.c.b16 %v1268, %v1267
  %v1330 = vpack.c.b16 %v1270, %v1269
  %v1331 = vpack.c.b16 %v1272, %v1271
  %v1332 = vpack.c.b16 %v1274, %v1273
  %v1333 = vpack.c.b16 %v1276, %v1275
  %v1334 = vpack.c.b16 %v1278, %v1277
  %v1335 = vpack.c.b16 %v1280, %v1279
  %v1336 = vpack.c.b16 %v1282, %v1281
  %v1337 = vpack.c.b16 %v1284, %v1283
  %v1338 = vpack.c.b16 %v1286, %v1285
  %v1339 = vpack.c.b16 %v1288, %v1287
  %v1340 = vpack.c.b16 %v1290, %v1289
  %v1341 = vpack.c.b16 %v1292, %v1291
  %v1342 = vpack.c.b16 %v1294, %v1293
  %v1343 = vpack.c.b16 %v1296, %v1295
  %v1344 = vpack.c.b16 %v1298, %v1297
  %v1345 = vpack.c.b16 %v1300, %v1299
  %v1346 = vpack.c.b16 %v1302, %v1301
  %v1347 = vpack.c.b16 %v1304, %v1303
  %v1348 = vpack.c.b16 %v1306, %v1305
  %v1349 = vpack.c.b16 %v1308, %v1307
  %v1350 = vpack.c.b16 %v1310, %v1309
  %v1351 = vpack.c.b16 %v1312, %v1311
  %v1352 = vpack.c.b16 %v1314, %v1313
  %v1353 = vpack.c.b16 %v1316, %v1315
  %v1354 = vpack.c.b16 %v1318, %v1317
  %v1355 = vpack.c.b16 %v1320, %v1319
  %v1356 = vpack.c.b16 %v1322, %v1321
  %v1357 = vpack.c.b16 %v1324, %v1323
  %v1358 = vpack.c.b16 %v1326, %v1325
  %v1367 = vunpack.c.l.b16 %v284
  %v1368 = vunpack.c.l.b16 %v285
  %v1369 = vunpack.c.l.b16 %v286
  %v1370 = vunpack.c.l.b16 %v287
  %v1371 = vunpack.c.l.b16 %v288
  %v1372 = vunpack.c.l.b16 %v289
  %v1373 = vunpack.c.l.b16 %v290
  %v1374 = vunpack.c.l.b16 %v291
  %v1375 = vpack.c.b16 %v1368, %v1367
  %v1376 = vpack.c.b16 %v1370, %v1369
  %v1377 = vpack.c.b16 %v1372, %v1371
  %v1378 = vpack.c.b16 %v1374, %v1373
  %v1384 = vsel %vm484, %v1327, 0
  %v1387 = vsel %vm484, %v1328, 0
  %v1390 = vsel %vm484, %v1329, 0
  %v1393 = vsel %vm484, %v1330, 0
  %v1396 = vsel %vm484, %v1331, 0
  %v1399 = vsel %vm484, %v1332, 0
  %v1402 = vsel %vm484, %v1333, 0
  %v1405 = vsel %vm484, %v1334, 0
  %v1408 = vsel %vm484, %v1335, 0
  %v1411 = vsel %vm484, %v1336, 0
  %v1414 = vsel %vm484, %v1337, 0
  %v1417 = vsel %vm484, %v1338, 0
  %v1420 = vsel %vm484, %v1339, 0
  %v1423 = vsel %vm484, %v1340, 0
  %v1426 = vsel %vm484, %v1341, 0
  %v1429 = vsel %vm484, %v1342, 0
  %v1432 = vsel %vm484, %v1343, 0
  %v1435 = vsel %vm484, %v1344, 0
  %v1438 = vsel %vm484, %v1345, 0
  %v1441 = vsel %vm484, %v1346, 0
  %v1444 = vsel %vm484, %v1347, 0
  %v1447 = vsel %vm484, %v1348, 0
  %v1450 = vsel %vm484, %v1349, 0
  %v1453 = vsel %vm484, %v1350, 0
  %v1456 = vsel %vm484, %v1351, 0
  %v1459 = vsel %vm484, %v1352, 0
  %v1462 = vsel %vm484, %v1353, 0
  %v1465 = vsel %vm484, %v1354, 0
  %v1468 = vsel %vm484, %v1355, 0
  %v1471 = vsel %vm484, %v1356, 0
  %v1474 = vsel %vm484, %v1357, 0
  %v1477 = vsel %vm484, %v1358, 0
  %1479 = vmatpush.bf16.msra.mxu0 0
  %1480 = vmatpush.bf16.msra.mxu0 0
  %1481 = vmatpush.bf16.msra.mxu0 0
  %1482 = vmatpush.bf16.msra.mxu0 0
  %1483 = vmatpush.bf16.msra.mxu0 %v1378
  %1484 = vmatpush.bf16.msra.mxu0 %v1377
  %1485 = vmatpush.bf16.msra.mxu0 %v1376
  %1486 = vmatpush.bf16.msra.mxu0 %v1375
  %1487 = vmatmul.bf16.gmra.mxu0 %v1384
  %v1488 = vpop.f32.mrf.mxu0
  %v1489 = vadd.f32 0.0, %v1488
  %v1490 = vpop.f32.mrf.mxu0
  %v1491 = vadd.f32 0.0, %v1490
  %1492 = vmatmul.bf16.gmra.mxu0 %v1387
  %v1493 = vpop.f32.mrf.mxu0
  %v1494 = vadd.f32 0.0, %v1493
  %v1495 = vpop.f32.mrf.mxu0
  %v1496 = vadd.f32 0.0, %v1495
  %1497 = vmatmul.bf16.gmra.mxu0 %v1390
  %v1498 = vpop.f32.mrf.mxu0
  %v1499 = vadd.f32 0.0, %v1498
  %v1500 = vpop.f32.mrf.mxu0
  %v1501 = vadd.f32 0.0, %v1500
  %1502 = vmatmul.bf16.gmra.mxu0 %v1393
  %v1503 = vpop.f32.mrf.mxu0
  %v1504 = vadd.f32 0.0, %v1503
  %v1505 = vpop.f32.mrf.mxu0
  %v1506 = vadd.f32 0.0, %v1505
  %1507 = vmatmul.bf16.gmra.mxu0 %v1396
  %v1508 = vpop.f32.mrf.mxu0
  %v1509 = vadd.f32 0.0, %v1508
  %v1510 = vpop.f32.mrf.mxu0
  %v1511 = vadd.f32 0.0, %v1510
  %1512 = vmatmul.bf16.gmra.mxu0 %v1399
  %v1513 = vpop.f32.mrf.mxu0
  %v1514 = vadd.f32 0.0, %v1513
  %v1515 = vpop.f32.mrf.mxu0
  %v1516 = vadd.f32 0.0, %v1515
  %1517 = vmatmul.bf16.gmra.mxu0 %v1402
  %v1518 = vpop.f32.mrf.mxu0
  %v1519 = vadd.f32 0.0, %v1518
  %v1520 = vpop.f32.mrf.mxu0
  %v1521 = vadd.f32 0.0, %v1520
  %1522 = vmatmul.bf16.gmra.mxu0 %v1405
  %v1523 = vpop.f32.mrf.mxu0
  %v1524 = vadd.f32 0.0, %v1523
  %v1525 = vpop.f32.mrf.mxu0
  %v1526 = vadd.f32 0.0, %v1525
  %1527 = vmatmul.bf16.gmra.mxu0 %v1408
  %v1528 = vpop.f32.mrf.mxu0
  %v1529 = vadd.f32 0.0, %v1528
  %v1530 = vpop.f32.mrf.mxu0
  %v1531 = vadd.f32 0.0, %v1530
  %1532 = vmatmul.bf16.gmra.mxu0 %v1411
  %v1533 = vpop.f32.mrf.mxu0
  %v1534 = vadd.f32 0.0, %v1533
  %v1535 = vpop.f32.mrf.mxu0
  %v1536 = vadd.f32 0.0, %v1535
  %1537 = vmatmul.bf16.gmra.mxu0 %v1414
  %v1538 = vpop.f32.mrf.mxu0
  %v1539 = vadd.f32 0.0, %v1538
  %v1540 = vpop.f32.mrf.mxu0
  %v1541 = vadd.f32 0.0, %v1540
  %1542 = vmatmul.bf16.gmra.mxu0 %v1417
  %v1543 = vpop.f32.mrf.mxu0
  %v1544 = vadd.f32 0.0, %v1543
  %v1545 = vpop.f32.mrf.mxu0
  %v1546 = vadd.f32 0.0, %v1545
  %1547 = vmatmul.bf16.gmra.mxu0 %v1420
  %v1548 = vpop.f32.mrf.mxu0
  %v1549 = vadd.f32 0.0, %v1548
  %v1550 = vpop.f32.mrf.mxu0
  %v1551 = vadd.f32 0.0, %v1550
  %1552 = vmatmul.bf16.gmra.mxu0 %v1423
  %v1553 = vpop.f32.mrf.mxu0
  %v1554 = vadd.f32 0.0, %v1553
  %v1555 = vpop.f32.mrf.mxu0
  %v1556 = vadd.f32 0.0, %v1555
  %1557 = vmatmul.bf16.gmra.mxu0 %v1426
  %v1558 = vpop.f32.mrf.mxu0
  %v1559 = vadd.f32 0.0, %v1558
  %v1560 = vpop.f32.mrf.mxu0
  %v1561 = vadd.f32 0.0, %v1560
  %1562 = vmatmul.bf16.gmra.mxu0 %v1429
  %v1563 = vpop.f32.mrf.mxu0
  %v1564 = vadd.f32 0.0, %v1563
  %v1565 = vpop.f32.mrf.mxu0
  %v1566 = vadd.f32 0.0, %v1565
  %1567 = vmatmul.bf16.gmra.mxu0 %v1432
  %v1568 = vpop.f32.mrf.mxu0
  %v1569 = vadd.f32 0.0, %v1568
  %v1570 = vpop.f32.mrf.mxu0
  %v1571 = vadd.f32 0.0, %v1570
  %1572 = vmatmul.bf16.gmra.mxu0 %v1435
  %v1573 = vpop.f32.mrf.mxu0
  %v1574 = vadd.f32 0.0, %v1573
  %v1575 = vpop.f32.mrf.mxu0
  %v1576 = vadd.f32 0.0, %v1575
  %1577 = vmatmul.bf16.gmra.mxu0 %v1438
  %v1578 = vpop.f32.mrf.mxu0
  %v1579 = vadd.f32 0.0, %v1578
  %v1580 = vpop.f32.mrf.mxu0
  %v1581 = vadd.f32 0.0, %v1580
  %1582 = vmatmul.bf16.gmra.mxu0 %v1441
  %v1583 = vpop.f32.mrf.mxu0
  %v1584 = vadd.f32 0.0, %v1583
  %v1585 = vpop.f32.mrf.mxu0
  %v1586 = vadd.f32 0.0, %v1585
  %1587 = vmatmul.bf16.gmra.mxu0 %v1444
  %v1588 = vpop.f32.mrf.mxu0
  %v1589 = vadd.f32 0.0, %v1588
  %v1590 = vpop.f32.mrf.mxu0
  %v1591 = vadd.f32 0.0, %v1590
  %1592 = vmatmul.bf16.gmra.mxu0 %v1447
  %v1593 = vpop.f32.mrf.mxu0
  %v1594 = vadd.f32 0.0, %v1593
  %v1595 = vpop.f32.mrf.mxu0
  %v1596 = vadd.f32 0.0, %v1595
  %1597 = vmatmul.bf16.gmra.mxu0 %v1450
  %v1598 = vpop.f32.mrf.mxu0
  %v1599 = vadd.f32 0.0, %v1598
  %v1600 = vpop.f32.mrf.mxu0
  %v1601 = vadd.f32 0.0, %v1600
  %1602 = vmatmul.bf16.gmra.mxu0 %v1453
  %v1603 = vpop.f32.mrf.mxu0
  %v1604 = vadd.f32 0.0, %v1603
  %v1605 = vpop.f32.mrf.mxu0
  %v1606 = vadd.f32 0.0, %v1605
  %1607 = vmatmul.bf16.gmra.mxu0 %v1456
  %v1608 = vpop.f32.mrf.mxu0
  %v1609 = vadd.f32 0.0, %v1608
  %v1610 = vpop.f32.mrf.mxu0
  %v1611 = vadd.f32 0.0, %v1610
  %1612 = vmatmul.bf16.gmra.mxu0 %v1459
  %v1613 = vpop.f32.mrf.mxu0
  %v1614 = vadd.f32 0.0, %v1613
  %v1615 = vpop.f32.mrf.mxu0
  %v1616 = vadd.f32 0.0, %v1615
  %1617 = vmatmul.bf16.gmra.mxu0 %v1462
  %v1618 = vpop.f32.mrf.mxu0
  %v1619 = vadd.f32 0.0, %v1618
  %v1620 = vpop.f32.mrf.mxu0
  %v1621 = vadd.f32 0.0, %v1620
  %1622 = vmatmul.bf16.gmra.mxu0 %v1465
  %v1623 = vpop.f32.mrf.mxu0
  %v1624 = vadd.f32 0.0, %v1623
  %v1625 = vpop.f32.mrf.mxu0
  %v1626 = vadd.f32 0.0, %v1625
  %1627 = vmatmul.bf16.gmra.mxu0 %v1468
  %v1628 = vpop.f32.mrf.mxu0
  %v1629 = vadd.f32 0.0, %v1628
  %v1630 = vpop.f32.mrf.mxu0
  %v1631 = vadd.f32 0.0, %v1630
  %1632 = vmatmul.bf16.gmra.mxu0 %v1471
  %v1633 = vpop.f32.mrf.mxu0
  %v1634 = vadd.f32 0.0, %v1633
  %v1635 = vpop.f32.mrf.mxu0
  %v1636 = vadd.f32 0.0, %v1635
  %1637 = vmatmul.bf16.gmra.mxu0 %v1474
  %v1638 = vpop.f32.mrf.mxu0
  %v1639 = vadd.f32 0.0, %v1638
  %v1640 = vpop.f32.mrf.mxu0
  %v1641 = vadd.f32 0.0, %v1640
  %1642 = vmatmul.bf16.gmra.mxu0 %v1477
  %v1643 = vpop.f32.mrf.mxu0
  %v1644 = vadd.f32 0.0, %v1643
  %v1645 = vpop.f32.mrf.mxu0
  %v1646 = vadd.f32 0.0, %v1645
  %1647 = vdwg.mxu0
  %v1712 = vunpack.c.l.b16 %v204
  %v1713 = vunpack.c.l.b16 %v205
  %v1714 = vunpack.c.l.b16 %v206
  %v1715 = vunpack.c.l.b16 %v207
  %v1716 = vunpack.c.l.b16 %v208
  %v1717 = vunpack.c.l.b16 %v209
  %v1718 = vunpack.c.l.b16 %v210
  %v1719 = vunpack.c.l.b16 %v211
  %v1720 = vunpack.c.l.b16 %v212
  %v1721 = vunpack.c.l.b16 %v213
  %v1722 = vunpack.c.l.b16 %v214
  %v1723 = vunpack.c.l.b16 %v215
  %v1724 = vunpack.c.l.b16 %v216
  %v1725 = vunpack.c.l.b16 %v217
  %v1726 = vunpack.c.l.b16 %v218
  %v1727 = vunpack.c.l.b16 %v219
  %v1728 = vunpack.c.l.b16 %v220
  %v1729 = vunpack.c.l.b16 %v221
  %v1730 = vunpack.c.l.b16 %v222
  %v1731 = vunpack.c.l.b16 %v223
  %v1732 = vunpack.c.l.b16 %v224
  %v1733 = vunpack.c.l.b16 %v225
  %v1734 = vunpack.c.l.b16 %v226
  %v1735 = vunpack.c.l.b16 %v227
  %v1736 = vunpack.c.l.b16 %v228
  %v1737 = vunpack.c.l.b16 %v229
  %v1738 = vunpack.c.l.b16 %v230
  %v1739 = vunpack.c.l.b16 %v231
  %v1740 = vunpack.c.l.b16 %v232
  %v1741 = vunpack.c.l.b16 %v233
  %v1742 = vunpack.c.l.b16 %v234
  %v1743 = vunpack.c.l.b16 %v235
  %v1744 = vunpack.c.l.b16 %v236
  %v1745 = vunpack.c.l.b16 %v237
  %v1746 = vunpack.c.l.b16 %v238
  %v1747 = vunpack.c.l.b16 %v239
  %v1748 = vunpack.c.l.b16 %v240
  %v1749 = vunpack.c.l.b16 %v241
  %v1750 = vunpack.c.l.b16 %v242
  %v1751 = vunpack.c.l.b16 %v243
  %v1752 = vunpack.c.l.b16 %v244
  %v1753 = vunpack.c.l.b16 %v245
  %v1754 = vunpack.c.l.b16 %v246
  %v1755 = vunpack.c.l.b16 %v247
  %v1756 = vunpack.c.l.b16 %v248
  %v1757 = vunpack.c.l.b16 %v249
  %v1758 = vunpack.c.l.b16 %v250
  %v1759 = vunpack.c.l.b16 %v251
  %v1760 = vunpack.c.l.b16 %v252
  %v1761 = vunpack.c.l.b16 %v253
  %v1762 = vunpack.c.l.b16 %v254
  %v1763 = vunpack.c.l.b16 %v255
  %v1764 = vunpack.c.l.b16 %v256
  %v1765 = vunpack.c.l.b16 %v257
  %v1766 = vunpack.c.l.b16 %v258
  %v1767 = vunpack.c.l.b16 %v259
  %v1768 = vunpack.c.l.b16 %v260
  %v1769 = vunpack.c.l.b16 %v261
  %v1770 = vunpack.c.l.b16 %v262
  %v1771 = vunpack.c.l.b16 %v263
  %v1772 = vunpack.c.l.b16 %v264
  %v1773 = vunpack.c.l.b16 %v265
  %v1774 = vunpack.c.l.b16 %v266
  %v1775 = vunpack.c.l.b16 %v267
  %v1776 = vpack.c.b16 %v1713, %v1712
  %v1777 = vpack.c.b16 %v1715, %v1714
  %v1778 = vpack.c.b16 %v1717, %v1716
  %v1779 = vpack.c.b16 %v1719, %v1718
  %v1780 = vpack.c.b16 %v1721, %v1720
  %v1781 = vpack.c.b16 %v1723, %v1722
  %v1782 = vpack.c.b16 %v1725, %v1724
  %v1783 = vpack.c.b16 %v1727, %v1726
  %v1784 = vpack.c.b16 %v1729, %v1728
  %v1785 = vpack.c.b16 %v1731, %v1730
  %v1786 = vpack.c.b16 %v1733, %v1732
  %v1787 = vpack.c.b16 %v1735, %v1734
  %v1788 = vpack.c.b16 %v1737, %v1736
  %v1789 = vpack.c.b16 %v1739, %v1738
  %v1790 = vpack.c.b16 %v1741, %v1740
  %v1791 = vpack.c.b16 %v1743, %v1742
  %v1792 = vpack.c.b16 %v1745, %v1744
  %v1793 = vpack.c.b16 %v1747, %v1746
  %v1794 = vpack.c.b16 %v1749, %v1748
  %v1795 = vpack.c.b16 %v1751, %v1750
  %v1796 = vpack.c.b16 %v1753, %v1752
  %v1797 = vpack.c.b16 %v1755, %v1754
  %v1798 = vpack.c.b16 %v1757, %v1756
  %v1799 = vpack.c.b16 %v1759, %v1758
  %v1800 = vpack.c.b16 %v1761, %v1760
  %v1801 = vpack.c.b16 %v1763, %v1762
  %v1802 = vpack.c.b16 %v1765, %v1764
  %v1803 = vpack.c.b16 %v1767, %v1766
  %v1804 = vpack.c.b16 %v1769, %v1768
  %v1805 = vpack.c.b16 %v1771, %v1770
  %v1806 = vpack.c.b16 %v1773, %v1772
  %v1807 = vpack.c.b16 %v1775, %v1774
  %v1816 = vunpack.c.l.b16 %v292
  %v1817 = vunpack.c.l.b16 %v293
  %v1818 = vunpack.c.l.b16 %v294
  %v1819 = vunpack.c.l.b16 %v295
  %v1820 = vunpack.c.l.b16 %v296
  %v1821 = vunpack.c.l.b16 %v297
  %v1822 = vunpack.c.l.b16 %v298
  %v1823 = vunpack.c.l.b16 %v299
  %v1824 = vpack.c.b16 %v1817, %v1816
  %v1825 = vpack.c.b16 %v1819, %v1818
  %v1826 = vpack.c.b16 %v1821, %v1820
  %v1827 = vpack.c.b16 %v1823, %v1822
  %v1833 = vsel %vm484, %v1776, 0
  %v1836 = vsel %vm484, %v1777, 0
  %v1839 = vsel %vm484, %v1778, 0
  %v1842 = vsel %vm484, %v1779, 0
  %v1845 = vsel %vm484, %v1780, 0
  %v1848 = vsel %vm484, %v1781, 0
  %v1851 = vsel %vm484, %v1782, 0
  %v1854 = vsel %vm484, %v1783, 0
  %v1857 = vsel %vm484, %v1784, 0
  %v1860 = vsel %vm484, %v1785, 0
  %v1863 = vsel %vm484, %v1786, 0
  %v1866 = vsel %vm484, %v1787, 0
  %v1869 = vsel %vm484, %v1788, 0
  %v1872 = vsel %vm484, %v1789, 0
  %v1875 = vsel %vm484, %v1790, 0
  %v1878 = vsel %vm484, %v1791, 0
  %v1881 = vsel %vm484, %v1792, 0
  %v1884 = vsel %vm484, %v1793, 0
  %v1887 = vsel %vm484, %v1794, 0
  %v1890 = vsel %vm484, %v1795, 0
  %v1893 = vsel %vm484, %v1796, 0
  %v1896 = vsel %vm484, %v1797, 0
  %v1899 = vsel %vm484, %v1798, 0
  %v1902 = vsel %vm484, %v1799, 0
  %v1905 = vsel %vm484, %v1800, 0
  %v1908 = vsel %vm484, %v1801, 0
  %v1911 = vsel %vm484, %v1802, 0
  %v1914 = vsel %vm484, %v1803, 0
  %v1917 = vsel %vm484, %v1804, 0
  %v1920 = vsel %vm484, %v1805, 0
  %v1923 = vsel %vm484, %v1806, 0
  %v1926 = vsel %vm484, %v1807, 0
  %1928 = vmatpush.bf16.msra.mxu0 0
  %1929 = vmatpush.bf16.msra.mxu0 0
  %1930 = vmatpush.bf16.msra.mxu0 0
  %1931 = vmatpush.bf16.msra.mxu0 0
  %1932 = vmatpush.bf16.msra.mxu0 %v1827
  %1933 = vmatpush.bf16.msra.mxu0 %v1826
  %1934 = vmatpush.bf16.msra.mxu0 %v1825
  %1935 = vmatpush.bf16.msra.mxu0 %v1824
  %1936 = vmatmul.bf16.gmra.mxu0 %v1833
  %v1937 = vpop.f32.mrf.mxu0
  %v1938 = vadd.f32 0.0, %v1937
  %v1939 = vpop.f32.mrf.mxu0
  %v1940 = vadd.f32 0.0, %v1939
  %1941 = vmatmul.bf16.gmra.mxu0 %v1836
  %v1942 = vpop.f32.mrf.mxu0
  %v1943 = vadd.f32 0.0, %v1942
  %v1944 = vpop.f32.mrf.mxu0
  %v1945 = vadd.f32 0.0, %v1944
  %1946 = vmatmul.bf16.gmra.mxu0 %v1839
  %v1947 = vpop.f32.mrf.mxu0
  %v1948 = vadd.f32 0.0, %v1947
  %v1949 = vpop.f32.mrf.mxu0
  %v1950 = vadd.f32 0.0, %v1949
  %1951 = vmatmul.bf16.gmra.mxu0 %v1842
  %v1952 = vpop.f32.mrf.mxu0
  %v1953 = vadd.f32 0.0, %v1952
  %v1954 = vpop.f32.mrf.mxu0
  %v1955 = vadd.f32 0.0, %v1954
  %1956 = vmatmul.bf16.gmra.mxu0 %v1845
  %v1957 = vpop.f32.mrf.mxu0
  %v1958 = vadd.f32 0.0, %v1957
  %v1959 = vpop.f32.mrf.mxu0
  %v1960 = vadd.f32 0.0, %v1959
  %1961 = vmatmul.bf16.gmra.mxu0 %v1848
  %v1962 = vpop.f32.mrf.mxu0
  %v1963 = vadd.f32 0.0, %v1962
  %v1964 = vpop.f32.mrf.mxu0
  %v1965 = vadd.f32 0.0, %v1964
  %1966 = vmatmul.bf16.gmra.mxu0 %v1851
  %v1967 = vpop.f32.mrf.mxu0
  %v1968 = vadd.f32 0.0, %v1967
  %v1969 = vpop.f32.mrf.mxu0
  %v1970 = vadd.f32 0.0, %v1969
  %1971 = vmatmul.bf16.gmra.mxu0 %v1854
  %v1972 = vpop.f32.mrf.mxu0
  %v1973 = vadd.f32 0.0, %v1972
  %v1974 = vpop.f32.mrf.mxu0
  %v1975 = vadd.f32 0.0, %v1974
  %1976 = vmatmul.bf16.gmra.mxu0 %v1857
  %v1977 = vpop.f32.mrf.mxu0
  %v1978 = vadd.f32 0.0, %v1977
  %v1979 = vpop.f32.mrf.mxu0
  %v1980 = vadd.f32 0.0, %v1979
  %1981 = vmatmul.bf16.gmra.mxu0 %v1860
  %v1982 = vpop.f32.mrf.mxu0
  %v1983 = vadd.f32 0.0, %v1982
  %v1984 = vpop.f32.mrf.mxu0
  %v1985 = vadd.f32 0.0, %v1984
  %1986 = vmatmul.bf16.gmra.mxu0 %v1863
  %v1987 = vpop.f32.mrf.mxu0
  %v1988 = vadd.f32 0.0, %v1987
  %v1989 = vpop.f32.mrf.mxu0
  %v1990 = vadd.f32 0.0, %v1989
  %1991 = vmatmul.bf16.gmra.mxu0 %v1866
  %v1992 = vpop.f32.mrf.mxu0
  %v1993 = vadd.f32 0.0, %v1992
  %v1994 = vpop.f32.mrf.mxu0
  %v1995 = vadd.f32 0.0, %v1994
  %1996 = vmatmul.bf16.gmra.mxu0 %v1869
  %v1997 = vpop.f32.mrf.mxu0
  %v1998 = vadd.f32 0.0, %v1997
  %v1999 = vpop.f32.mrf.mxu0
  %v2000 = vadd.f32 0.0, %v1999
  %2001 = vmatmul.bf16.gmra.mxu0 %v1872
  %v2002 = vpop.f32.mrf.mxu0
  %v2003 = vadd.f32 0.0, %v2002
  %v2004 = vpop.f32.mrf.mxu0
  %v2005 = vadd.f32 0.0, %v2004
  %2006 = vmatmul.bf16.gmra.mxu0 %v1875
  %v2007 = vpop.f32.mrf.mxu0
  %v2008 = vadd.f32 0.0, %v2007
  %v2009 = vpop.f32.mrf.mxu0
  %v2010 = vadd.f32 0.0, %v2009
  %2011 = vmatmul.bf16.gmra.mxu0 %v1878
  %v2012 = vpop.f32.mrf.mxu0
  %v2013 = vadd.f32 0.0, %v2012
  %v2014 = vpop.f32.mrf.mxu0
  %v2015 = vadd.f32 0.0, %v2014
  %2016 = vmatmul.bf16.gmra.mxu0 %v1881
  %v2017 = vpop.f32.mrf.mxu0
  %v2018 = vadd.f32 0.0, %v2017
  %v2019 = vpop.f32.mrf.mxu0
  %v2020 = vadd.f32 0.0, %v2019
  %2021 = vmatmul.bf16.gmra.mxu0 %v1884
  %v2022 = vpop.f32.mrf.mxu0
  %v2023 = vadd.f32 0.0, %v2022
  %v2024 = vpop.f32.mrf.mxu0
  %v2025 = vadd.f32 0.0, %v2024
  %2026 = vmatmul.bf16.gmra.mxu0 %v1887
  %v2027 = vpop.f32.mrf.mxu0
  %v2028 = vadd.f32 0.0, %v2027
  %v2029 = vpop.f32.mrf.mxu0
  %v2030 = vadd.f32 0.0, %v2029
  %2031 = vmatmul.bf16.gmra.mxu0 %v1890
  %v2032 = vpop.f32.mrf.mxu0
  %v2033 = vadd.f32 0.0, %v2032
  %v2034 = vpop.f32.mrf.mxu0
  %v2035 = vadd.f32 0.0, %v2034
  %2036 = vmatmul.bf16.gmra.mxu0 %v1893
  %v2037 = vpop.f32.mrf.mxu0
  %v2038 = vadd.f32 0.0, %v2037
  %v2039 = vpop.f32.mrf.mxu0
  %v2040 = vadd.f32 0.0, %v2039
  %2041 = vmatmul.bf16.gmra.mxu0 %v1896
  %v2042 = vpop.f32.mrf.mxu0
  %v2043 = vadd.f32 0.0, %v2042
  %v2044 = vpop.f32.mrf.mxu0
  %v2045 = vadd.f32 0.0, %v2044
  %2046 = vmatmul.bf16.gmra.mxu0 %v1899
  %v2047 = vpop.f32.mrf.mxu0
  %v2048 = vadd.f32 0.0, %v2047
  %v2049 = vpop.f32.mrf.mxu0
  %v2050 = vadd.f32 0.0, %v2049
  %2051 = vmatmul.bf16.gmra.mxu0 %v1902
  %v2052 = vpop.f32.mrf.mxu0
  %v2053 = vadd.f32 0.0, %v2052
  %v2054 = vpop.f32.mrf.mxu0
  %v2055 = vadd.f32 0.0, %v2054
  %2056 = vmatmul.bf16.gmra.mxu0 %v1905
  %v2057 = vpop.f32.mrf.mxu0
  %v2058 = vadd.f32 0.0, %v2057
  %v2059 = vpop.f32.mrf.mxu0
  %v2060 = vadd.f32 0.0, %v2059
  %2061 = vmatmul.bf16.gmra.mxu0 %v1908
  %v2062 = vpop.f32.mrf.mxu0
  %v2063 = vadd.f32 0.0, %v2062
  %v2064 = vpop.f32.mrf.mxu0
  %v2065 = vadd.f32 0.0, %v2064
  %2066 = vmatmul.bf16.gmra.mxu0 %v1911
  %v2067 = vpop.f32.mrf.mxu0
  %v2068 = vadd.f32 0.0, %v2067
  %v2069 = vpop.f32.mrf.mxu0
  %v2070 = vadd.f32 0.0, %v2069
  %2071 = vmatmul.bf16.gmra.mxu0 %v1914
  %v2072 = vpop.f32.mrf.mxu0
  %v2073 = vadd.f32 0.0, %v2072
  %v2074 = vpop.f32.mrf.mxu0
  %v2075 = vadd.f32 0.0, %v2074
  %2076 = vmatmul.bf16.gmra.mxu0 %v1917
  %v2077 = vpop.f32.mrf.mxu0
  %v2078 = vadd.f32 0.0, %v2077
  %v2079 = vpop.f32.mrf.mxu0
  %v2080 = vadd.f32 0.0, %v2079
  %2081 = vmatmul.bf16.gmra.mxu0 %v1920
  %v2082 = vpop.f32.mrf.mxu0
  %v2083 = vadd.f32 0.0, %v2082
  %v2084 = vpop.f32.mrf.mxu0
  %v2085 = vadd.f32 0.0, %v2084
  %2086 = vmatmul.bf16.gmra.mxu0 %v1923
  %v2087 = vpop.f32.mrf.mxu0
  %v2088 = vadd.f32 0.0, %v2087
  %v2089 = vpop.f32.mrf.mxu0
  %v2090 = vadd.f32 0.0, %v2089
  %2091 = vmatmul.bf16.gmra.mxu0 %v1926
  %v2092 = vpop.f32.mrf.mxu0
  %v2093 = vadd.f32 0.0, %v2092
  %v2094 = vpop.f32.mrf.mxu0
  %v2095 = vadd.f32 0.0, %v2094
  %2096 = vdwg.mxu0
  %v2097 = vtanh.pop %v591
  %v2098 = vtanh.pop %v593
  %v2099 = vtanh.pop %v596
  %v2100 = vtanh.pop %v598
  %v2101 = vtanh.pop %v601
  %v2102 = vtanh.pop %v603
  %v2103 = vtanh.pop %v606
  %v2104 = vtanh.pop %v608
  %v2105 = vtanh.pop %v611
  %v2106 = vtanh.pop %v613
  %v2107 = vtanh.pop %v616
  %v2108 = vtanh.pop %v618
  %v2109 = vtanh.pop %v621
  %v2110 = vtanh.pop %v623
  %v2111 = vtanh.pop %v626
  %v2112 = vtanh.pop %v628
  %v2113 = vtanh.pop %v631
  %v2114 = vtanh.pop %v633
  %v2115 = vtanh.pop %v636
  %v2116 = vtanh.pop %v638
  %v2117 = vtanh.pop %v641
  %v2118 = vtanh.pop %v643
  %v2119 = vtanh.pop %v646
  %v2120 = vtanh.pop %v648
  %v2121 = vtanh.pop %v651
  %v2122 = vtanh.pop %v653
  %v2123 = vtanh.pop %v656
  %v2124 = vtanh.pop %v658
  %v2125 = vtanh.pop %v661
  %v2126 = vtanh.pop %v663
  %v2127 = vtanh.pop %v666
  %v2128 = vtanh.pop %v668
  %v2129 = vtanh.pop %v671
  %v2130 = vtanh.pop %v673
  %v2131 = vtanh.pop %v676
  %v2132 = vtanh.pop %v678
  %v2133 = vtanh.pop %v681
  %v2134 = vtanh.pop %v683
  %v2135 = vtanh.pop %v686
  %v2136 = vtanh.pop %v688
  %v2137 = vtanh.pop %v691
  %v2138 = vtanh.pop %v693
  %v2139 = vtanh.pop %v696
  %v2140 = vtanh.pop %v698
  %v2141 = vtanh.pop %v701
  %v2142 = vtanh.pop %v703
  %v2143 = vtanh.pop %v706
  %v2144 = vtanh.pop %v708
  %v2145 = vtanh.pop %v711
  %v2146 = vtanh.pop %v713
  %v2147 = vtanh.pop %v716
  %v2148 = vtanh.pop %v718
  %v2149 = vtanh.pop %v721
  %v2150 = vtanh.pop %v723
  %v2151 = vtanh.pop %v726
  %v2152 = vtanh.pop %v728
  %v2153 = vtanh.pop %v731
  %v2154 = vtanh.pop %v733
  %v2155 = vtanh.pop %v736
  %v2156 = vtanh.pop %v738
  %v2157 = vtanh.pop %v741
  %v2158 = vtanh.pop %v743
  %v2159 = vtanh.pop %v746
  %v2160 = vtanh.pop %v748
  %v2161 = vtanh.pop %v1040
  %v2162 = vtanh.pop %v1042
  %v2163 = vtanh.pop %v1045
  %v2164 = vtanh.pop %v1047
  %v2165 = vtanh.pop %v1050
  %v2166 = vtanh.pop %v1052
  %v2167 = vtanh.pop %v1055
  %v2168 = vtanh.pop %v1057
  %v2169 = vtanh.pop %v1060
  %v2170 = vtanh.pop %v1062
  %v2171 = vtanh.pop %v1065
  %v2172 = vtanh.pop %v1067
  %v2173 = vtanh.pop %v1070
  %v2174 = vtanh.pop %v1072
  %v2175 = vtanh.pop %v1075
  %v2176 = vtanh.pop %v1077
  %v2177 = vtanh.pop %v1080
  %v2178 = vtanh.pop %v1082
  %v2179 = vtanh.pop %v1085
  %v2180 = vtanh.pop %v1087
  %v2181 = vtanh.pop %v1090
  %v2182 = vtanh.pop %v1092
  %v2183 = vtanh.pop %v1095
  %v2184 = vtanh.pop %v1097
  %v2185 = vtanh.pop %v1100
  %v2186 = vtanh.pop %v1102
  %v2187 = vtanh.pop %v1105
  %v2188 = vtanh.pop %v1107
  %v2189 = vtanh.pop %v1110
  %v2190 = vtanh.pop %v1112
  %v2191 = vtanh.pop %v1115
  %v2192 = vtanh.pop %v1117
  %v2193 = vtanh.pop %v1120
  %v2194 = vtanh.pop %v1122
  %v2195 = vtanh.pop %v1125
  %v2196 = vtanh.pop %v1127
  %v2197 = vtanh.pop %v1130
  %v2198 = vtanh.pop %v1132
  %v2199 = vtanh.pop %v1135
  %v2200 = vtanh.pop %v1137
  %v2201 = vtanh.pop %v1140
  %v2202 = vtanh.pop %v1142
  %v2203 = vtanh.pop %v1145
  %v2204 = vtanh.pop %v1147
  %v2205 = vtanh.pop %v1150
  %v2206 = vtanh.pop %v1152
  %v2207 = vtanh.pop %v1155
  %v2208 = vtanh.pop %v1157
  %v2209 = vtanh.pop %v1160
  %v2210 = vtanh.pop %v1162
  %v2211 = vtanh.pop %v1165
  %v2212 = vtanh.pop %v1167
  %v2213 = vtanh.pop %v1170
  %v2214 = vtanh.pop %v1172
  %v2215 = vtanh.pop %v1175
  %v2216 = vtanh.pop %v1177
  %v2217 = vtanh.pop %v1180
  %v2218 = vtanh.pop %v1182
  %v2219 = vtanh.pop %v1185
  %v2220 = vtanh.pop %v1187
  %v2221 = vtanh.pop %v1190
  %v2222 = vtanh.pop %v1192
  %v2223 = vtanh.pop %v1195
  %v2224 = vtanh.pop %v1197
  %v2225 = vtanh.pop %v1489
  %v2226 = vtanh.pop %v1491
  %v2227 = vtanh.pop %v1494
  %v2228 = vtanh.pop %v1496
  %v2229 = vtanh.pop %v1499
  %v2230 = vtanh.pop %v1501
  %v2231 = vtanh.pop %v1504
  %v2232 = vtanh.pop %v1506
  %v2233 = vtanh.pop %v1509
  %v2234 = vtanh.pop %v1511
  %v2235 = vtanh.pop %v1514
  %v2236 = vtanh.pop %v1516
  %v2237 = vtanh.pop %v1519
  %v2238 = vtanh.pop %v1521
  %v2239 = vtanh.pop %v1524
  %v2240 = vtanh.pop %v1526
  %v2241 = vtanh.pop %v1529
  %v2242 = vtanh.pop %v1531
  %v2243 = vtanh.pop %v1534
  %v2244 = vtanh.pop %v1536
  %v2245 = vtanh.pop %v1539
  %v2246 = vtanh.pop %v1541
  %v2247 = vtanh.pop %v1544
  %v2248 = vtanh.pop %v1546
  %v2249 = vtanh.pop %v1549
  %v2250 = vtanh.pop %v1551
  %v2251 = vtanh.pop %v1554
  %v2252 = vtanh.pop %v1556
  %v2253 = vtanh.pop %v1559
  %v2254 = vtanh.pop %v1561
  %v2255 = vtanh.pop %v1564
  %v2256 = vtanh.pop %v1566
  %v2257 = vtanh.pop %v1569
  %v2258 = vtanh.pop %v1571
  %v2259 = vtanh.pop %v1574
  %v2260 = vtanh.pop %v1576
  %v2261 = vtanh.pop %v1579
  %v2262 = vtanh.pop %v1581
  %v2263 = vtanh.pop %v1584
  %v2264 = vtanh.pop %v1586
  %v2265 = vtanh.pop %v1589
  %v2266 = vtanh.pop %v1591
  %v2267 = vtanh.pop %v1594
  %v2268 = vtanh.pop %v1596
  %v2269 = vtanh.pop %v1599
  %v2270 = vtanh.pop %v1601
  %v2271 = vtanh.pop %v1604
  %v2272 = vtanh.pop %v1606
  %v2273 = vtanh.pop %v1609
  %v2274 = vtanh.pop %v1611
  %v2275 = vtanh.pop %v1614
  %v2276 = vtanh.pop %v1616
  %v2277 = vtanh.pop %v1619
  %v2278 = vtanh.pop %v1621
  %v2279 = vtanh.pop %v1624
  %v2280 = vtanh.pop %v1626
  %v2281 = vtanh.pop %v1629
  %v2282 = vtanh.pop %v1631
  %v2283 = vtanh.pop %v1634
  %v2284 = vtanh.pop %v1636
  %v2285 = vtanh.pop %v1639
  %v2286 = vtanh.pop %v1641
  %v2287 = vtanh.pop %v1644
  %v2288 = vtanh.pop %v1646
  %v2289 = vtanh.pop %v1938
  %v2290 = vtanh.pop %v1940
  %v2291 = vtanh.pop %v1943
  %v2292 = vtanh.pop %v1945
  %v2293 = vtanh.pop %v1948
  %v2294 = vtanh.pop %v1950
  %v2295 = vtanh.pop %v1953
  %v2296 = vtanh.pop %v1955
  %v2297 = vtanh.pop %v1958
  %v2298 = vtanh.pop %v1960
  %v2299 = vtanh.pop %v1963
  %v2300 = vtanh.pop %v1965
  %v2301 = vtanh.pop %v1968
  %v2302 = vtanh.pop %v1970
  %v2303 = vtanh.pop %v1973
  %v2304 = vtanh.pop %v1975
  %v2305 = vtanh.pop %v1978
  %v2306 = vtanh.pop %v1980
  %v2307 = vtanh.pop %v1983
  %v2308 = vtanh.pop %v1985
  %v2309 = vtanh.pop %v1988
  %v2310 = vtanh.pop %v1990
  %v2311 = vtanh.pop %v1993
  %v2312 = vtanh.pop %v1995
  %v2313 = vtanh.pop %v1998
  %v2314 = vtanh.pop %v2000
  %v2315 = vtanh.pop %v2003
  %v2316 = vtanh.pop %v2005
  %v2317 = vtanh.pop %v2008
  %v2318 = vtanh.pop %v2010
  %v2319 = vtanh.pop %v2013
  %v2320 = vtanh.pop %v2015
  %v2321 = vtanh.pop %v2018
  %v2322 = vtanh.pop %v2020
  %v2323 = vtanh.pop %v2023
  %v2324 = vtanh.pop %v2025
  %v2325 = vtanh.pop %v2028
  %v2326 = vtanh.pop %v2030
  %v2327 = vtanh.pop %v2033
  %v2328 = vtanh.pop %v2035
  %v2329 = vtanh.pop %v2038
  %v2330 = vtanh.pop %v2040
  %v2331 = vtanh.pop %v2043
  %v2332 = vtanh.pop %v2045
  %v2333 = vtanh.pop %v2048
  %v2334 = vtanh.pop %v2050
  %v2335 = vtanh.pop %v2053
  %v2336 = vtanh.pop %v2055
  %v2337 = vtanh.pop %v2058
  %v2338 = vtanh.pop %v2060
  %v2339 = vtanh.pop %v2063
  %v2340 = vtanh.pop %v2065
  %v2341 = vtanh.pop %v2068
  %v2342 = vtanh.pop %v2070
  %v2343 = vtanh.pop %v2073
  %v2344 = vtanh.pop %v2075
  %v2345 = vtanh.pop %v2078
  %v2346 = vtanh.pop %v2080
  %v2347 = vtanh.pop %v2083
  %v2348 = vtanh.pop %v2085
  %v2349 = vtanh.pop %v2088
  %v2350 = vtanh.pop %v2090
  %v2351 = vtanh.pop %v2093
  %v2352 = vtanh.pop %v2095
  %vm2353 = vcmask 64512
  %2354 = vst.msk [vmem:[%s2] sm:$0xff] %vm2353, %v2097
  %2355 = vst.msk [vmem:[%s2 + $0x8] sm:$0xff] %vm2353, %v2098
  %2356 = vst.msk [vmem:[%s2 + $0x10] sm:$0xff] %vm2353, %v2099
  %2357 = vst.msk [vmem:[%s2 + $0x18] sm:$0xff] %vm2353, %v2100
  %2358 = vst.msk [vmem:[%s2 + $0x20] sm:$0xff] %vm2353, %v2101
  %2359 = vst.msk [vmem:[%s2 + $0x28] sm:$0xff] %vm2353, %v2102
  %2360 = vst.msk [vmem:[%s2 + $0x30] sm:$0xff] %vm2353, %v2103
  %2361 = vst.msk [vmem:[%s2 + $0x38] sm:$0xff] %vm2353, %v2104
  %2362 = vst.msk [vmem:[%s2 + $0x40] sm:$0xff] %vm2353, %v2105
  %2363 = vst.msk [vmem:[%s2 + $0x48] sm:$0xff] %vm2353, %v2106
  %2364 = vst.msk [vmem:[%s2 + $0x50] sm:$0xff] %vm2353, %v2107
  %2365 = vst.msk [vmem:[%s2 + $0x58] sm:$0xff] %vm2353, %v2108
  %2366 = vst.msk [vmem:[%s2 + $0x60] sm:$0xff] %vm2353, %v2109
  %2367 = vst.msk [vmem:[%s2 + $0x68] sm:$0xff] %vm2353, %v2110
  %2368 = vst.msk [vmem:[%s2 + $0x70] sm:$0xff] %vm2353, %v2111
  %2369 = vst.msk [vmem:[%s2 + $0x78] sm:$0xff] %vm2353, %v2112
  %2370 = vst.msk [vmem:[%s2 + $0x80] sm:$0xff] %vm2353, %v2113
  %2371 = vst.msk [vmem:[%s2 + $0x88] sm:$0xff] %vm2353, %v2114
  %2372 = vst.msk [vmem:[%s2 + $0x90] sm:$0xff] %vm2353, %v2115
  %2373 = vst.msk [vmem:[%s2 + $0x98] sm:$0xff] %vm2353, %v2116
  %2374 = vst.msk [vmem:[%s2 + $0xa0] sm:$0xff] %vm2353, %v2117
  %2375 = vst.msk [vmem:[%s2 + $0xa8] sm:$0xff] %vm2353, %v2118
  %2376 = vst.msk [vmem:[%s2 + $0xb0] sm:$0xff] %vm2353, %v2119
  %2377 = vst.msk [vmem:[%s2 + $0xb8] sm:$0xff] %vm2353, %v2120
  %2378 = vst.msk [vmem:[%s2 + $0xc0] sm:$0xff] %vm2353, %v2121
  %2379 = vst.msk [vmem:[%s2 + $0xc8] sm:$0xff] %vm2353, %v2122
  %2380 = vst.msk [vmem:[%s2 + $0xd0] sm:$0xff] %vm2353, %v2123
  %2381 = vst.msk [vmem:[%s2 + $0xd8] sm:$0xff] %vm2353, %v2124
  %2382 = vst.msk [vmem:[%s2 + $0xe0] sm:$0xff] %vm2353, %v2125
  %2383 = vst.msk [vmem:[%s2 + $0xe8] sm:$0xff] %vm2353, %v2126
  %2384 = vst.msk [vmem:[%s2 + $0xf0] sm:$0xff] %vm2353, %v2127
  %2385 = vst.msk [vmem:[%s2 + $0xf8] sm:$0xff] %vm2353, %v2128
  %2386 = vst.msk [vmem:[%s2 + $0x100] sm:$0xff] %vm2353, %v2129
  %2387 = vst.msk [vmem:[%s2 + $0x108] sm:$0xff] %vm2353, %v2130
  %2388 = vst.msk [vmem:[%s2 + $0x110] sm:$0xff] %vm2353, %v2131
  %2389 = vst.msk [vmem:[%s2 + $0x118] sm:$0xff] %vm2353, %v2132
  %2390 = vst.msk [vmem:[%s2 + $0x120] sm:$0xff] %vm2353, %v2133
  %2391 = vst.msk [vmem:[%s2 + $0x128] sm:$0xff] %vm2353, %v2134
  %2392 = vst.msk [vmem:[%s2 + $0x130] sm:$0xff] %vm2353, %v2135
  %2393 = vst.msk [vmem:[%s2 + $0x138] sm:$0xff] %vm2353, %v2136
  %2394 = vst.msk [vmem:[%s2 + $0x140] sm:$0xff] %vm2353, %v2137
  %2395 = vst.msk [vmem:[%s2 + $0x148] sm:$0xff] %vm2353, %v2138
  %2396 = vst.msk [vmem:[%s2 + $0x150] sm:$0xff] %vm2353, %v2139
  %2397 = vst.msk [vmem:[%s2 + $0x158] sm:$0xff] %vm2353, %v2140
  %2398 = vst.msk [vmem:[%s2 + $0x160] sm:$0xff] %vm2353, %v2141
  %2399 = vst.msk [vmem:[%s2 + $0x168] sm:$0xff] %vm2353, %v2142
  %2400 = vst.msk [vmem:[%s2 + $0x170] sm:$0xff] %vm2353, %v2143
  %2401 = vst.msk [vmem:[%s2 + $0x178] sm:$0xff] %vm2353, %v2144
  %2402 = vst.msk [vmem:[%s2 + $0x180] sm:$0xff] %vm2353, %v2145
  %2403 = vst.msk [vmem:[%s2 + $0x188] sm:$0xff] %vm2353, %v2146
  %2404 = vst.msk [vmem:[%s2 + $0x190] sm:$0xff] %vm2353, %v2147
  %2405 = vst.msk [vmem:[%s2 + $0x198] sm:$0xff] %vm2353, %v2148
  %2406 = vst.msk [vmem:[%s2 + $0x1a0] sm:$0xff] %vm2353, %v2149
  %2407 = vst.msk [vmem:[%s2 + $0x1a8] sm:$0xff] %vm2353, %v2150
  %2408 = vst.msk [vmem:[%s2 + $0x1b0] sm:$0xff] %vm2353, %v2151
  %2409 = vst.msk [vmem:[%s2 + $0x1b8] sm:$0xff] %vm2353, %v2152
  %2410 = vst.msk [vmem:[%s2 + $0x1c0] sm:$0xff] %vm2353, %v2153
  %2411 = vst.msk [vmem:[%s2 + $0x1c8] sm:$0xff] %vm2353, %v2154
  %2412 = vst.msk [vmem:[%s2 + $0x1d0] sm:$0xff] %vm2353, %v2155
  %2413 = vst.msk [vmem:[%s2 + $0x1d8] sm:$0xff] %vm2353, %v2156
  %2414 = vst.msk [vmem:[%s2 + $0x1e0] sm:$0xff] %vm2353, %v2157
  %2415 = vst.msk [vmem:[%s2 + $0x1e8] sm:$0xff] %vm2353, %v2158
  %2416 = vst.msk [vmem:[%s2 + $0x1f0] sm:$0xff] %vm2353, %v2159
  %2417 = vst.msk [vmem:[%s2 + $0x1f8] sm:$0xff] %vm2353, %v2160
  %2418 = vst.msk [vmem:[%s2 + $0x200] sm:$0xff] %vm2353, %v2161
  %2419 = vst.msk [vmem:[%s2 + $0x208] sm:$0xff] %vm2353, %v2162
  %2420 = vst.msk [vmem:[%s2 + $0x210] sm:$0xff] %vm2353, %v2163
  %2421 = vst.msk [vmem:[%s2 + $0x218] sm:$0xff] %vm2353, %v2164
  %2422 = vst.msk [vmem:[%s2 + $0x220] sm:$0xff] %vm2353, %v2165
  %2423 = vst.msk [vmem:[%s2 + $0x228] sm:$0xff] %vm2353, %v2166
  %2424 = vst.msk [vmem:[%s2 + $0x230] sm:$0xff] %vm2353, %v2167
  %2425 = vst.msk [vmem:[%s2 + $0x238] sm:$0xff] %vm2353, %v2168
  %2426 = vst.msk [vmem:[%s2 + $0x240] sm:$0xff] %vm2353, %v2169
  %2427 = vst.msk [vmem:[%s2 + $0x248] sm:$0xff] %vm2353, %v2170
  %2428 = vst.msk [vmem:[%s2 + $0x250] sm:$0xff] %vm2353, %v2171
  %2429 = vst.msk [vmem:[%s2 + $0x258] sm:$0xff] %vm2353, %v2172
  %2430 = vst.msk [vmem:[%s2 + $0x260] sm:$0xff] %vm2353, %v2173
  %2431 = vst.msk [vmem:[%s2 + $0x268] sm:$0xff] %vm2353, %v2174
  %2432 = vst.msk [vmem:[%s2 + $0x270] sm:$0xff] %vm2353, %v2175
  %2433 = vst.msk [vmem:[%s2 + $0x278] sm:$0xff] %vm2353, %v2176
  %2434 = vst.msk [vmem:[%s2 + $0x280] sm:$0xff] %vm2353, %v2177
  %2435 = vst.msk [vmem:[%s2 + $0x288] sm:$0xff] %vm2353, %v2178
  %2436 = vst.msk [vmem:[%s2 + $0x290] sm:$0xff] %vm2353, %v2179
  %2437 = vst.msk [vmem:[%s2 + $0x298] sm:$0xff] %vm2353, %v2180
  %2438 = vst.msk [vmem:[%s2 + $0x2a0] sm:$0xff] %vm2353, %v2181
  %2439 = vst.msk [vmem:[%s2 + $0x2a8] sm:$0xff] %vm2353, %v2182
  %2440 = vst.msk [vmem:[%s2 + $0x2b0] sm:$0xff] %vm2353, %v2183
  %2441 = vst.msk [vmem:[%s2 + $0x2b8] sm:$0xff] %vm2353, %v2184
  %2442 = vst.msk [vmem:[%s2 + $0x2c0] sm:$0xff] %vm2353, %v2185
  %2443 = vst.msk [vmem:[%s2 + $0x2c8] sm:$0xff] %vm2353, %v2186
  %2444 = vst.msk [vmem:[%s2 + $0x2d0] sm:$0xff] %vm2353, %v2187
  %2445 = vst.msk [vmem:[%s2 + $0x2d8] sm:$0xff] %vm2353, %v2188
  %2446 = vst.msk [vmem:[%s2 + $0x2e0] sm:$0xff] %vm2353, %v2189
  %2447 = vst.msk [vmem:[%s2 + $0x2e8] sm:$0xff] %vm2353, %v2190
  %2448 = vst.msk [vmem:[%s2 + $0x2f0] sm:$0xff] %vm2353, %v2191
  %2449 = vst.msk [vmem:[%s2 + $0x2f8] sm:$0xff] %vm2353, %v2192
  %2450 = vst.msk [vmem:[%s2 + $0x300] sm:$0xff] %vm2353, %v2193
  %2451 = vst.msk [vmem:[%s2 + $0x308] sm:$0xff] %vm2353, %v2194
  %2452 = vst.msk [vmem:[%s2 + $0x310] sm:$0xff] %vm2353, %v2195
  %2453 = vst.msk [vmem:[%s2 + $0x318] sm:$0xff] %vm2353, %v2196
  %2454 = vst.msk [vmem:[%s2 + $0x320] sm:$0xff] %vm2353, %v2197
  %2455 = vst.msk [vmem:[%s2 + $0x328] sm:$0xff] %vm2353, %v2198
  %2456 = vst.msk [vmem:[%s2 + $0x330] sm:$0xff] %vm2353, %v2199
  %2457 = vst.msk [vmem:[%s2 + $0x338] sm:$0xff] %vm2353, %v2200
  %2458 = vst.msk [vmem:[%s2 + $0x340] sm:$0xff] %vm2353, %v2201
  %2459 = vst.msk [vmem:[%s2 + $0x348] sm:$0xff] %vm2353, %v2202
  %2460 = vst.msk [vmem:[%s2 + $0x350] sm:$0xff] %vm2353, %v2203
  %2461 = vst.msk [vmem:[%s2 + $0x358] sm:$0xff] %vm2353, %v2204
  %2462 = vst.msk [vmem:[%s2 + $0x360] sm:$0xff] %vm2353, %v2205
  %2463 = vst.msk [vmem:[%s2 + $0x368] sm:$0xff] %vm2353, %v2206
  %2464 = vst.msk [vmem:[%s2 + $0x370] sm:$0xff] %vm2353, %v2207
  %2465 = vst.msk [vmem:[%s2 + $0x378] sm:$0xff] %vm2353, %v2208
  %2466 = vst.msk [vmem:[%s2 + $0x380] sm:$0xff] %vm2353, %v2209
  %2467 = vst.msk [vmem:[%s2 + $0x388] sm:$0xff] %vm2353, %v2210
  %2468 = vst.msk [vmem:[%s2 + $0x390] sm:$0xff] %vm2353, %v2211
  %2469 = vst.msk [vmem:[%s2 + $0x398] sm:$0xff] %vm2353, %v2212
  %2470 = vst.msk [vmem:[%s2 + $0x3a0] sm:$0xff] %vm2353, %v2213
  %2471 = vst.msk [vmem:[%s2 + $0x3a8] sm:$0xff] %vm2353, %v2214
  %2472 = vst.msk [vmem:[%s2 + $0x3b0] sm:$0xff] %vm2353, %v2215
  %2473 = vst.msk [vmem:[%s2 + $0x3b8] sm:$0xff] %vm2353, %v2216
  %2474 = vst.msk [vmem:[%s2 + $0x3c0] sm:$0xff] %vm2353, %v2217
  %2475 = vst.msk [vmem:[%s2 + $0x3c8] sm:$0xff] %vm2353, %v2218
  %2476 = vst.msk [vmem:[%s2 + $0x3d0] sm:$0xff] %vm2353, %v2219
  %2477 = vst.msk [vmem:[%s2 + $0x3d8] sm:$0xff] %vm2353, %v2220
  %2478 = vst.msk [vmem:[%s2 + $0x3e0] sm:$0xff] %vm2353, %v2221
  %2479 = vst.msk [vmem:[%s2 + $0x3e8] sm:$0xff] %vm2353, %v2222
  %2480 = vst.msk [vmem:[%s2 + $0x3f0] sm:$0xff] %vm2353, %v2223
  %2481 = vst.msk [vmem:[%s2 + $0x3f8] sm:$0xff] %vm2353, %v2224
  %2482 = vst.msk [vmem:[%s2 + $0x400] sm:$0xff] %vm2353, %v2225
  %2483 = vst.msk [vmem:[%s2 + $0x408] sm:$0xff] %vm2353, %v2226
  %2484 = vst.msk [vmem:[%s2 + $0x410] sm:$0xff] %vm2353, %v2227
  %2485 = vst.msk [vmem:[%s2 + $0x418] sm:$0xff] %vm2353, %v2228
  %2486 = vst.msk [vmem:[%s2 + $0x420] sm:$0xff] %vm2353, %v2229
  %2487 = vst.msk [vmem:[%s2 + $0x428] sm:$0xff] %vm2353, %v2230
  %2488 = vst.msk [vmem:[%s2 + $0x430] sm:$0xff] %vm2353, %v2231
  %2489 = vst.msk [vmem:[%s2 + $0x438] sm:$0xff] %vm2353, %v2232
  %2490 = vst.msk [vmem:[%s2 + $0x440] sm:$0xff] %vm2353, %v2233
  %2491 = vst.msk [vmem:[%s2 + $0x448] sm:$0xff] %vm2353, %v2234
  %2492 = vst.msk [vmem:[%s2 + $0x450] sm:$0xff] %vm2353, %v2235
  %2493 = vst.msk [vmem:[%s2 + $0x458] sm:$0xff] %vm2353, %v2236
  %2494 = vst.msk [vmem:[%s2 + $0x460] sm:$0xff] %vm2353, %v2237
  %2495 = vst.msk [vmem:[%s2 + $0x468] sm:$0xff] %vm2353, %v2238
  %2496 = vst.msk [vmem:[%s2 + $0x470] sm:$0xff] %vm2353, %v2239
  %2497 = vst.msk [vmem:[%s2 + $0x478] sm:$0xff] %vm2353, %v2240
  %2498 = vst.msk [vmem:[%s2 + $0x480] sm:$0xff] %vm2353, %v2241
  %2499 = vst.msk [vmem:[%s2 + $0x488] sm:$0xff] %vm2353, %v2242
  %2500 = vst.msk [vmem:[%s2 + $0x490] sm:$0xff] %vm2353, %v2243
  %2501 = vst.msk [vmem:[%s2 + $0x498] sm:$0xff] %vm2353, %v2244
  %2502 = vst.msk [vmem:[%s2 + $0x4a0] sm:$0xff] %vm2353, %v2245
  %2503 = vst.msk [vmem:[%s2 + $0x4a8] sm:$0xff] %vm2353, %v2246
  %2504 = vst.msk [vmem:[%s2 + $0x4b0] sm:$0xff] %vm2353, %v2247
  %2505 = vst.msk [vmem:[%s2 + $0x4b8] sm:$0xff] %vm2353, %v2248
  %2506 = vst.msk [vmem:[%s2 + $0x4c0] sm:$0xff] %vm2353, %v2249
  %2507 = vst.msk [vmem:[%s2 + $0x4c8] sm:$0xff] %vm2353, %v2250
  %2508 = vst.msk [vmem:[%s2 + $0x4d0] sm:$0xff] %vm2353, %v2251
  %2509 = vst.msk [vmem:[%s2 + $0x4d8] sm:$0xff] %vm2353, %v2252
  %2510 = vst.msk [vmem:[%s2 + $0x4e0] sm:$0xff] %vm2353, %v2253
  %2511 = vst.msk [vmem:[%s2 + $0x4e8] sm:$0xff] %vm2353, %v2254
  %2512 = vst.msk [vmem:[%s2 + $0x4f0] sm:$0xff] %vm2353, %v2255
  %2513 = vst.msk [vmem:[%s2 + $0x4f8] sm:$0xff] %vm2353, %v2256
  %2514 = vst.msk [vmem:[%s2 + $0x500] sm:$0xff] %vm2353, %v2257
  %2515 = vst.msk [vmem:[%s2 + $0x508] sm:$0xff] %vm2353, %v2258
  %2516 = vst.msk [vmem:[%s2 + $0x510] sm:$0xff] %vm2353, %v2259
  %2517 = vst.msk [vmem:[%s2 + $0x518] sm:$0xff] %vm2353, %v2260
  %2518 = vst.msk [vmem:[%s2 + $0x520] sm:$0xff] %vm2353, %v2261
  %2519 = vst.msk [vmem:[%s2 + $0x528] sm:$0xff] %vm2353, %v2262
  %2520 = vst.msk [vmem:[%s2 + $0x530] sm:$0xff] %vm2353, %v2263
  %2521 = vst.msk [vmem:[%s2 + $0x538] sm:$0xff] %vm2353, %v2264
  %2522 = vst.msk [vmem:[%s2 + $0x540] sm:$0xff] %vm2353, %v2265
  %2523 = vst.msk [vmem:[%s2 + $0x548] sm:$0xff] %vm2353, %v2266
  %2524 = vst.msk [vmem:[%s2 + $0x550] sm:$0xff] %vm2353, %v2267
  %2525 = vst.msk [vmem:[%s2 + $0x558] sm:$0xff] %vm2353, %v2268
  %2526 = vst.msk [vmem:[%s2 + $0x560] sm:$0xff] %vm2353, %v2269
  %2527 = vst.msk [vmem:[%s2 + $0x568] sm:$0xff] %vm2353, %v2270
  %2528 = vst.msk [vmem:[%s2 + $0x570] sm:$0xff] %vm2353, %v2271
  %2529 = vst.msk [vmem:[%s2 + $0x578] sm:$0xff] %vm2353, %v2272
  %2530 = vst.msk [vmem:[%s2 + $0x580] sm:$0xff] %vm2353, %v2273
  %2531 = vst.msk [vmem:[%s2 + $0x588] sm:$0xff] %vm2353, %v2274
  %2532 = vst.msk [vmem:[%s2 + $0x590] sm:$0xff] %vm2353, %v2275
  %2533 = vst.msk [vmem:[%s2 + $0x598] sm:$0xff] %vm2353, %v2276
  %2534 = vst.msk [vmem:[%s2 + $0x5a0] sm:$0xff] %vm2353, %v2277
  %2535 = vst.msk [vmem:[%s2 + $0x5a8] sm:$0xff] %vm2353, %v2278
  %2536 = vst.msk [vmem:[%s2 + $0x5b0] sm:$0xff] %vm2353, %v2279
  %2537 = vst.msk [vmem:[%s2 + $0x5b8] sm:$0xff] %vm2353, %v2280
  %2538 = vst.msk [vmem:[%s2 + $0x5c0] sm:$0xff] %vm2353, %v2281
  %2539 = vst.msk [vmem:[%s2 + $0x5c8] sm:$0xff] %vm2353, %v2282
  %2540 = vst.msk [vmem:[%s2 + $0x5d0] sm:$0xff] %vm2353, %v2283
  %2541 = vst.msk [vmem:[%s2 + $0x5d8] sm:$0xff] %vm2353, %v2284
  %2542 = vst.msk [vmem:[%s2 + $0x5e0] sm:$0xff] %vm2353, %v2285
  %2543 = vst.msk [vmem:[%s2 + $0x5e8] sm:$0xff] %vm2353, %v2286
  %2544 = vst.msk [vmem:[%s2 + $0x5f0] sm:$0xff] %vm2353, %v2287
  %2545 = vst.msk [vmem:[%s2 + $0x5f8] sm:$0xff] %vm2353, %v2288
  %2546 = vst.msk [vmem:[%s2 + $0x600] sm:$0xff] %vm2353, %v2289
  %2547 = vst.msk [vmem:[%s2 + $0x608] sm:$0xff] %vm2353, %v2290
  %2548 = vst.msk [vmem:[%s2 + $0x610] sm:$0xff] %vm2353, %v2291
  %2549 = vst.msk [vmem:[%s2 + $0x618] sm:$0xff] %vm2353, %v2292
  %2550 = vst.msk [vmem:[%s2 + $0x620] sm:$0xff] %vm2353, %v2293
  %2551 = vst.msk [vmem:[%s2 + $0x628] sm:$0xff] %vm2353, %v2294
  %2552 = vst.msk [vmem:[%s2 + $0x630] sm:$0xff] %vm2353, %v2295
  %2553 = vst.msk [vmem:[%s2 + $0x638] sm:$0xff] %vm2353, %v2296
  %2554 = vst.msk [vmem:[%s2 + $0x640] sm:$0xff] %vm2353, %v2297
  %2555 = vst.msk [vmem:[%s2 + $0x648] sm:$0xff] %vm2353, %v2298
  %2556 = vst.msk [vmem:[%s2 + $0x650] sm:$0xff] %vm2353, %v2299
  %2557 = vst.msk [vmem:[%s2 + $0x658] sm:$0xff] %vm2353, %v2300
  %2558 = vst.msk [vmem:[%s2 + $0x660] sm:$0xff] %vm2353, %v2301
  %2559 = vst.msk [vmem:[%s2 + $0x668] sm:$0xff] %vm2353, %v2302
  %2560 = vst.msk [vmem:[%s2 + $0x670] sm:$0xff] %vm2353, %v2303
  %2561 = vst.msk [vmem:[%s2 + $0x678] sm:$0xff] %vm2353, %v2304
  %2562 = vst.msk [vmem:[%s2 + $0x680] sm:$0xff] %vm2353, %v2305
  %2563 = vst.msk [vmem:[%s2 + $0x688] sm:$0xff] %vm2353, %v2306
  %2564 = vst.msk [vmem:[%s2 + $0x690] sm:$0xff] %vm2353, %v2307
  %2565 = vst.msk [vmem:[%s2 + $0x698] sm:$0xff] %vm2353, %v2308
  %2566 = vst.msk [vmem:[%s2 + $0x6a0] sm:$0xff] %vm2353, %v2309
  %2567 = vst.msk [vmem:[%s2 + $0x6a8] sm:$0xff] %vm2353, %v2310
  %2568 = vst.msk [vmem:[%s2 + $0x6b0] sm:$0xff] %vm2353, %v2311
  %2569 = vst.msk [vmem:[%s2 + $0x6b8] sm:$0xff] %vm2353, %v2312
  %2570 = vst.msk [vmem:[%s2 + $0x6c0] sm:$0xff] %vm2353, %v2313
  %2571 = vst.msk [vmem:[%s2 + $0x6c8] sm:$0xff] %vm2353, %v2314
  %2572 = vst.msk [vmem:[%s2 + $0x6d0] sm:$0xff] %vm2353, %v2315
  %2573 = vst.msk [vmem:[%s2 + $0x6d8] sm:$0xff] %vm2353, %v2316
  %2574 = vst.msk [vmem:[%s2 + $0x6e0] sm:$0xff] %vm2353, %v2317
  %2575 = vst.msk [vmem:[%s2 + $0x6e8] sm:$0xff] %vm2353, %v2318
  %2576 = vst.msk [vmem:[%s2 + $0x6f0] sm:$0xff] %vm2353, %v2319
  %2577 = vst.msk [vmem:[%s2 + $0x6f8] sm:$0xff] %vm2353, %v2320
  %2578 = vst.msk [vmem:[%s2 + $0x700] sm:$0xff] %vm2353, %v2321
  %2579 = vst.msk [vmem:[%s2 + $0x708] sm:$0xff] %vm2353, %v2322
  %2580 = vst.msk [vmem:[%s2 + $0x710] sm:$0xff] %vm2353, %v2323
  %2581 = vst.msk [vmem:[%s2 + $0x718] sm:$0xff] %vm2353, %v2324
  %2582 = vst.msk [vmem:[%s2 + $0x720] sm:$0xff] %vm2353, %v2325
  %2583 = vst.msk [vmem:[%s2 + $0x728] sm:$0xff] %vm2353, %v2326
  %2584 = vst.msk [vmem:[%s2 + $0x730] sm:$0xff] %vm2353, %v2327
  %2585 = vst.msk [vmem:[%s2 + $0x738] sm:$0xff] %vm2353, %v2328
  %2586 = vst.msk [vmem:[%s2 + $0x740] sm:$0xff] %vm2353, %v2329
  %2587 = vst.msk [vmem:[%s2 + $0x748] sm:$0xff] %vm2353, %v2330
  %2588 = vst.msk [vmem:[%s2 + $0x750] sm:$0xff] %vm2353, %v2331
  %2589 = vst.msk [vmem:[%s2 + $0x758] sm:$0xff] %vm2353, %v2332
  %2590 = vst.msk [vmem:[%s2 + $0x760] sm:$0xff] %vm2353, %v2333
  %2591 = vst.msk [vmem:[%s2 + $0x768] sm:$0xff] %vm2353, %v2334
  %2592 = vst.msk [vmem:[%s2 + $0x770] sm:$0xff] %vm2353, %v2335
  %2593 = vst.msk [vmem:[%s2 + $0x778] sm:$0xff] %vm2353, %v2336
  %2594 = vst.msk [vmem:[%s2 + $0x780] sm:$0xff] %vm2353, %v2337
  %2595 = vst.msk [vmem:[%s2 + $0x788] sm:$0xff] %vm2353, %v2338
  %2596 = vst.msk [vmem:[%s2 + $0x790] sm:$0xff] %vm2353, %v2339
  %2597 = vst.msk [vmem:[%s2 + $0x798] sm:$0xff] %vm2353, %v2340
  %2598 = vst.msk [vmem:[%s2 + $0x7a0] sm:$0xff] %vm2353, %v2341
  %2599 = vst.msk [vmem:[%s2 + $0x7a8] sm:$0xff] %vm2353, %v2342
  %2600 = vst.msk [vmem:[%s2 + $0x7b0] sm:$0xff] %vm2353, %v2343
  %2601 = vst.msk [vmem:[%s2 + $0x7b8] sm:$0xff] %vm2353, %v2344
  %2602 = vst.msk [vmem:[%s2 + $0x7c0] sm:$0xff] %vm2353, %v2345
  %2603 = vst.msk [vmem:[%s2 + $0x7c8] sm:$0xff] %vm2353, %v2346
  %2604 = vst.msk [vmem:[%s2 + $0x7d0] sm:$0xff] %vm2353, %v2347
  %2605 = vst.msk [vmem:[%s2 + $0x7d8] sm:$0xff] %vm2353, %v2348
  %2606 = vst.msk [vmem:[%s2 + $0x7e0] sm:$0xff] %vm2353, %v2349
  %2607 = vst.msk [vmem:[%s2 + $0x7e8] sm:$0xff] %vm2353, %v2350
  %2608 = vst.msk [vmem:[%s2 + $0x7f0] sm:$0xff] %vm2353, %v2351
  %2609 = vst.msk [vmem:[%s2 + $0x7f8] sm:$0xff] %vm2353, %v2352
  // Predicated region
  $region10: #{generator_forward.7} parent=0 // pred_check
    _
  $region11: #{generator_forward.7} parent=0 // pred_check_branch
    %2611 = sbr.rel (0) target = $region13
  $region12: #{generator_forward.7} parent=0 // pred_region
    _
  $region13: #{generator_forward.7} parent=0 // pred_fallthru
    _
  // Predicated region
  $region14: #{generator_forward.7} parent=0 // pred_check
    _
  $region15: #{generator_forward.7} parent=0 // pred_check_branch
    %2613 = sbr.rel (0) target = $region17
  $region16: #{generator_forward.7} parent=0 // pred_region
    _
  $region17: #{generator_forward.7} parent=0 // pred_fallthru
    _

</llo_original>
